<compile_context>
chip_gen: v7x
topology: tpu7x:2x2x1
jax: 0.10.0
libtpu: 0.0.40
codegen_flags: <defaults>
</compile_context>

<pallas_src>
import functools

import jax
import jax.numpy as jnp
from jax.experimental import pallas as pl
from jax.experimental.pallas import tpu as pltpu


LANE = 128


def _round_up(x, m):
    return ((x + m - 1) // m) * m


# ----------------------------- Pallas kernel --------------------------------

def _basic_block_kernel(xph_ref, w1_ref, s1_ref, b1_ref,
                        w2_ref, s2_ref, b2_ref, *rest,
                        stride, ho, wo, p_res, res_off, downsample):
    """Fully fused BasicBlock forward for one image.

    xph_ref : (s*s, Hq, Wq, Cin_k)   phase-split, zero-padded input (bf16)
    w1_ref  : (9, Cin_k, Cmid)       conv1 weights, (dy, dx) major (bf16)
    s1/b1   : (1, Cmid) f32          folded BN1 scale / bias
    w2_ref  : (9, Cmid, Cout)        conv2 weights (bf16)
    s2/b2   : (1, Cout) f32          folded BN2 scale / bias
    if downsample: ws (Cin, Cout) bf16, ss/bs (1, Cout) f32  (1x1 conv + BN)
    o_ref   : (1, ho, wo, Cout) f32  block output
    o1p_ref : (1, ho+2, wo+2, Cmid)  bf16 VMEM scratch (zero-haloed out1 tile)
    """
    if downsample:
        ws_ref, ss_ref, bs_ref, o_ref, o1p_ref = rest
    else:
        o_ref, o1p_ref = rest

    cin = xph_ref.shape[-1]
    cmid = w1_ref.shape[-1]
    cout = w2_ref.shape[-1]
    m = ho * wo

    # ---- conv1 (stride) + bn1 + relu; leading relu(x) fused into the loads.
    acc = jnp.zeros((m, cmid), jnp.float32)
    for dy in range(3):
        for dx in range(3):
            p = (dy % stride) * stride + (dx % stride)
            y0 = dy // stride
            x0 = dx // stride
            slab = jnp.maximum(xph_ref[p, y0:y0 + ho, x0:x0 + wo, :], 0)
            acc = acc + jnp.dot(slab.reshape(m, cin), w1_ref[dy * 3 + dx],
                                preferred_element_type=jnp.float32)
    out1 = jnp.maximum(acc * s1_ref[...] + b1_ref[...], 0.0)

    # Stage out1 in VMEM with a zero halo so conv2 slices are static slices.
    o1p_ref[...] = jnp.zeros_like(o1p_ref)
    o1p_ref[:, 1:ho + 1, 1:wo + 1, :] = (
        out1.reshape(1, ho, wo, cmid).astype(o1p_ref.dtype))

    # ---- conv2 (stride 1) + bn2.
    acc2 = jnp.zeros((m, cout), jnp.float32)
    for dy in range(3):
        for dx in range(3):
            slab = o1p_ref[0, dy:dy + ho, dx:dx + wo, :]
            acc2 = acc2 + jnp.dot(slab.reshape(m, cmid), w2_ref[dy * 3 + dx],
                                  preferred_element_type=jnp.float32)
    out2 = acc2 * s2_ref[...] + b2_ref[...]

    # ---- residual from relu(x): identity add, or fused 1x1 conv + BN GEMM.
    r = jnp.maximum(
        xph_ref[p_res, res_off:res_off + ho, res_off:res_off + wo, :], 0)
    r = r.reshape(m, cin)
    if downsample:
        res = (jnp.dot(r, ws_ref[...], preferred_element_type=jnp.float32)
               * ss_ref[...] + bs_ref[...])
    else:
        res = r.astype(jnp.float32)

    o_ref[...] = (out2 + res).reshape(1, ho, wo, cout).astype(o_ref.dtype)


# ------------------------------ glue / module --------------------------------

def _bn_fold(gamma, beta, mean, var, cpad, eps=1e-5):
    scale = gamma / jnp.sqrt(var + eps)
    bias = beta - mean * scale
    pad = cpad - scale.shape[0]
    scale = jnp.pad(scale, (0, pad)).reshape(1, cpad).astype(jnp.float32)
    bias = jnp.pad(bias, (0, pad)).reshape(1, cpad).astype(jnp.float32)
    return scale, bias


def _w3x3_to_k9(w_oihw, cin_pad, cout_pad, dtype):
    # (O, I, 3, 3) -> (9, I_pad, O_pad), k = dy*3 + dx.
    o, i, _, _ = w_oihw.shape
    w = jnp.transpose(w_oihw, (2, 3, 1, 0)).reshape(9, i, o)
    w = jnp.pad(w, ((0, 0), (0, cin_pad - i), (0, cout_pad - o)))
    return w.astype(dtype)


def _phase_decompose(x_nhwc, stride):
    """Zero-pad by 1 and split into stride*stride contiguous phases.

    (N, H, W, C) -> (N*s*s, Hq, Wq, C) with
      out[n*s*s + a*s + b, yq, xq, :] == x_pad[n, yq*s + a, xq*s + b, :]
    so any strided 3x3 window shift becomes a static contiguous slice.
    """
    n, h, w, c = x_nhwc.shape
    s = stride
    hp, wp = h + 2, w + 2
    hq, wq = -(-hp // s), -(-wp // s)
    xp = jnp.pad(x_nhwc,
                 ((0, 0), (1, 1 + hq * s - hp), (1, 1 + wq * s - wp), (0, 0)))
    xp = xp.reshape(n, hq, s, wq, s, c)
    xp = jnp.transpose(xp, (0, 2, 4, 1, 3, 5))
    return xp.reshape(n * s * s, hq, wq, c)


def basic_block_forward(x_nchw, params, *, stride, drop_rate, downsample,
                        compute_dtype=jnp.bfloat16):
    del drop_rate  # TODO(synk): F.dropout with dropRate>0 in training mode not
    # implemented (inference mode -> identity).
    n, cin, h, w = x_nchw.shape
    c1 = params["w1"].shape[0]                 # cfg[0]
    c2 = params["w2"].shape[0]                 # cfg[1]
    cpad1 = _round_up(c1, LANE)
    cpad2 = _round_up(c2, LANE)
    ho = (h - 1) // stride + 1
    wo = (w - 1) // stride + 1

    x = jnp.transpose(x_nchw, (0, 2, 3, 1)).astype(compute_dtype)   # NHWC bf16

    # x channels are only padded when the identity shortcut adds relu(x)
    # directly onto the cpad2-wide accumulator (no-downsample path).
    cin_k = cin if downsample else cpad2
    if cin_k != cin:
        x = jnp.pad(x, ((0, 0), (0, 0), (0, 0), (0, cin_k - cin)))

    xph = _phase_decompose(x, stride)          # (N*s*s, Hq, Wq, cin_k)
    ss = stride * stride
    hq, wq = xph.shape[1], xph.shape[2]

    w1k = _w3x3_to_k9(params["w1"], cin_k, cpad1, compute_dtype)
    s1, b1 = _bn_fold(params["g1"], params["b1"], params["m1"], params["v1"], cpad1)
    w2k = _w3x3_to_k9(params["w2"], cpad1, cpad2, compute_dtype)
    s2, b2 = _bn_fold(params["g2"], params["b2"], params["m2"], params["v2"], cpad2)

    # Residual needs only one phase of padded x: x[n, y*s, x*s, :].
    p_res = (1 % stride) * stride + (1 % stride)
    res_off = 1 // stride

    kernel = functools.partial(_basic_block_kernel, stride=stride, ho=ho, wo=wo,
                               p_res=p_res, res_off=res_off,
                               downsample=downsample)

    in_specs = [
        pl.BlockSpec((ss, hq, wq, cin_k), lambda i: (i, 0, 0, 0)),
        pl.BlockSpec((9, cin_k, cpad1), lambda i: (0, 0, 0)),
        pl.BlockSpec((1, cpad1), lambda i: (0, 0)),
        pl.BlockSpec((1, cpad1), lambda i: (0, 0)),
        pl.BlockSpec((9, cpad1, cpad2), lambda i: (0, 0, 0)),
        pl.BlockSpec((1, cpad2), lambda i: (0, 0)),
        pl.BlockSpec((1, cpad2), lambda i: (0, 0)),
    ]
    args = [xph, w1k, s1, b1, w2k, s2, b2]
    if downsample:
        ws = jnp.pad(jnp.transpose(params["ws"][:, :, 0, 0], (1, 0)),
                     ((0, 0), (0, cpad2 - c2))).astype(compute_dtype)  # (cin, cpad2)
        ssc, bsc = _bn_fold(params["gs"], params["bs"], params["ms"], params["vs"],
                            cpad2)
        in_specs += [
            pl.BlockSpec((cin_k, cpad2), lambda i: (0, 0)),
            pl.BlockSpec((1, cpad2), lambda i: (0, 0)),
            pl.BlockSpec((1, cpad2), lambda i: (0, 0)),
        ]
        args += [ws, ssc, bsc]

    out = pl.pallas_call(
        kernel,
        out_shape=jax.ShapeDtypeStruct((n, ho, wo, cpad2), jnp.float32),
        grid=(n,),
        in_specs=in_specs,
        out_specs=pl.BlockSpec((1, ho, wo, cpad2), lambda i: (i, 0, 0, 0)),
        scratch_shapes=[pltpu.VMEM((1, ho + 2, wo + 2, cpad1), compute_dtype)],
        compiler_params=pltpu.CompilerParams(dimension_semantics=("parallel",)),
    )(*args)

    out = out[..., :c2]                        # drop channel padding (once)
    return jnp.transpose(out, (0, 3, 1, 2))    # back to NCHW


# ------------------------------ reference ------------------------------------

def _ref_forward(x, params, *, stride, downsample, eps=1e-5):
    x = jnp.maximum(x, 0.0)

    def conv(inp, w, s, pad):
        return jax.lax.conv_general_dilated(
            inp, w, (s, s), [(pad, pad), (pad, pad)],
            dimension_numbers=("NCHW", "OIHW", "NCHW"))

    def bn(inp, g, b, m, v):
        g, b, m, v = (t[None, :, None, None] for t in (g, b, m, v))
        return (inp - m) / jnp.sqrt(v + eps) * g + b

    out = conv(x, params["w1"], stride, 1)
    out = bn(out, params["g1"], params["b1"], params["m1"], params["v1"])
    out = jnp.maximum(out, 0.0)
    out = conv(out, params["w2"], 1, 1)
    out = bn(out, params["g2"], params["b2"], params["m2"], params["v2"])
    if downsample:
        res = conv(x, params["ws"], stride, 0)
        res = bn(res, params["gs"], params["bs"], params["ms"], params["vs"])
    else:
        res = x
    return out + res


def _make_params(key, inplanes, cfg, downsample):
    ks = jax.random.split(key, 15)

    def nrm(k, shape, s=0.1):
        return s * jax.random.normal(k, shape, jnp.float32)

    p = {
        "w1": nrm(ks[0], (cfg[0], inplanes, 3, 3)),
        "g1": 1.0 + nrm(ks[1], (cfg[0],)),
        "b1": nrm(ks[2], (cfg[0],)),
        "m1": nrm(ks[3], (cfg[0],)),
        "v1": jnp.abs(jax.random.normal(ks[4], (cfg[0],), jnp.float32)) + 0.5,
        "w2": nrm(ks[5], (cfg[1], cfg[0], 3, 3)),
        "g2": 1.0 + nrm(ks[6], (cfg[1],)),
        "b2": nrm(ks[7], (cfg[1],)),
        "m2": nrm(ks[8], (cfg[1],)),
        "v2": jnp.abs(jax.random.normal(ks[9], (cfg[1],), jnp.float32)) + 0.5,
    }
    if downsample:
        p.update({
            "ws": nrm(ks[10], (cfg[1], inplanes, 1, 1)),
            "gs": 1.0 + nrm(ks[11], (cfg[1],)),
            "bs": nrm(ks[12], (cfg[1],)),
            "ms": nrm(ks[13], (cfg[1],)),
            "vs": jnp.abs(jax.random.normal(ks[14], (cfg[1],), jnp.float32)) + 0.5,
        })
    return p


# --------------------------------- main ---------------------------------------

if __name__ == "__main__":
    key = jax.random.PRNGKey(0)
    cases = [
        # (inplanes, cfg, stride): downsample path (stride 2 + channel change)
        (4, (8, 8), 2),
        # identity-shortcut path (stride 1, inplanes == cfg[1]): no residual GEMM
        (8, (8, 8), 1),
    ]
    for idx, (inplanes, cfg, stride) in enumerate(cases):
        downsample = (stride != 1) or (inplanes != cfg[1])
        kp, kx = jax.random.split(jax.random.fold_in(key, idx))
        params = _make_params(kp, inplanes, cfg, downsample)
        x = jax.random.normal(kx, (2, inplanes, 16, 16), jnp.float32)  # NCHW

        out = basic_block_forward(x, params, stride=stride, drop_rate=0.0,
                                  downsample=downsample)
        out = jax.block_until_ready(out)

        ref = _ref_forward(x, params, stride=stride, downsample=downsample)
        ho = (16 - 1) // stride + 1
        assert out.shape == ref.shape == (2, cfg[1], ho, ho), (out.shape, ref.shape)
        # bf16 activations/weights (f32 accumulation) -> bf16-level tolerance
        # against the pure-f32 reference.
        err = float(jnp.max(jnp.abs(out - ref)))
        assert jnp.allclose(out, ref, rtol=3e-2, atol=3e-2), (idx, err)

    print("KERNEL_OK")
</pallas_src>

<mosaic_0001>
module attributes {stable_mosaic.version = 11 : i64} {
  func.func @_basic_block_kernel(%arg0: i32, %arg1: memref<4x9x9x4xbf16, #tpu.memory_space<vmem>>, %arg2: memref<9x4x128xbf16, #tpu.memory_space<vmem>>, %arg3: memref<1x128xf32, #tpu.memory_space<vmem>>, %arg4: memref<1x128xf32, #tpu.memory_space<vmem>>, %arg5: memref<9x128x128xbf16, #tpu.memory_space<vmem>>, %arg6: memref<1x128xf32, #tpu.memory_space<vmem>>, %arg7: memref<1x128xf32, #tpu.memory_space<vmem>>, %arg8: memref<4x128xbf16, #tpu.memory_space<vmem>>, %arg9: memref<1x128xf32, #tpu.memory_space<vmem>>, %arg10: memref<1x128xf32, #tpu.memory_space<vmem>>, %arg11: memref<1x8x8x128xf32, #tpu.memory_space<vmem>>, %arg12: memref<1x10x10x128xbf16, #tpu.memory_space<vmem>>) attributes {dimension_semantics = [#tpu.dimension_semantics<parallel>], iteration_bounds = array<i64: 2>, scalar_prefetch = 0 : i64, scratch_operands = 1 : i64, tpu.core_type = #tpu.core_type<tc>, window_params = [{transform_indices = @transform_0, window_bounds = array<i64: 4, 9, 9, 4>}, {pipeline_mode = #tpu.pipeline_mode<synchronous>, transform_indices = @transform_1, window_bounds = array<i64: 9, 4, 128>}, {pipeline_mode = #tpu.pipeline_mode<synchronous>, transform_indices = @transform_2, window_bounds = array<i64: 1, 128>}, {pipeline_mode = #tpu.pipeline_mode<synchronous>, transform_indices = @transform_3, window_bounds = array<i64: 1, 128>}, {pipeline_mode = #tpu.pipeline_mode<synchronous>, transform_indices = @transform_4, window_bounds = array<i64: 9, 128, 128>}, {pipeline_mode = #tpu.pipeline_mode<synchronous>, transform_indices = @transform_5, window_bounds = array<i64: 1, 128>}, {pipeline_mode = #tpu.pipeline_mode<synchronous>, transform_indices = @transform_6, window_bounds = array<i64: 1, 128>}, {pipeline_mode = #tpu.pipeline_mode<synchronous>, transform_indices = @transform_7, window_bounds = array<i64: 4, 128>}, {pipeline_mode = #tpu.pipeline_mode<synchronous>, transform_indices = @transform_8, window_bounds = array<i64: 1, 128>}, {pipeline_mode = #tpu.pipeline_mode<synchronous>, transform_indices = @transform_9, window_bounds = array<i64: 1, 128>}, {transform_indices = @transform_10, window_bounds = array<i64: 1, 8, 8, 128>}]} {
    %cst = arith.constant 0.000000e+00 : f32
    %0 = vector.broadcast %cst : f32 to vector<64x128xf32>
    %c0 = arith.constant 0 : index
    %c0_0 = arith.constant 0 : index
    %c0_1 = arith.constant 0 : index
    %c0_2 = arith.constant 0 : index
    %1 = vector.load %arg1[%c0, %c0_0, %c0_1, %c0_2] : memref<4x9x9x4xbf16, #tpu.memory_space<vmem>>, vector<1x8x8x4xbf16>
    %2 = vector.shape_cast %1 : vector<1x8x8x4xbf16> to vector<8x8x4xbf16>
    %cst_3 = arith.constant 0.000000e+00 : bf16
    %3 = vector.broadcast %cst_3 : bf16 to vector<8x8x4xbf16>
    %4 = arith.maximumf %2, %3 : vector<8x8x4xbf16>
    %5 = vector.shape_cast %4 : vector<8x8x4xbf16> to vector<64x4xbf16>
    %c0_4 = arith.constant 0 : index
    %c0_5 = arith.constant 0 : index
    %c0_6 = arith.constant 0 : index
    %6 = vector.load %arg2[%c0_4, %c0_5, %c0_6] : memref<9x4x128xbf16, #tpu.memory_space<vmem>>, vector<1x4x128xbf16>
    %7 = vector.shape_cast %6 : vector<1x4x128xbf16> to vector<4x128xbf16>
    %cst_7 = arith.constant dense<0.000000e+00> : vector<64x128xf32>
    %8 = tpu.matmul %5, %7, %cst_7 {dimension_numbers = #tpu.dot_dimension_numbers<[1], [0], [0], [1], [0, 0, 1, 1], [], []>} : vector<64x4xbf16>, vector<4x128xbf16>, vector<64x128xf32> -> vector<64x128xf32>
    %9 = arith.addf %0, %8 : vector<64x128xf32>
    %c1 = arith.constant 1 : index
    %c0_8 = arith.constant 0 : index
    %c0_9 = arith.constant 0 : index
    %c0_10 = arith.constant 0 : index
    %10 = vector.load %arg1[%c1, %c0_8, %c0_9, %c0_10] : memref<4x9x9x4xbf16, #tpu.memory_space<vmem>>, vector<1x8x8x4xbf16>
    %11 = vector.shape_cast %10 : vector<1x8x8x4xbf16> to vector<8x8x4xbf16>
    %cst_11 = arith.constant 0.000000e+00 : bf16
    %12 = vector.broadcast %cst_11 : bf16 to vector<8x8x4xbf16>
    %13 = arith.maximumf %11, %12 : vector<8x8x4xbf16>
    %14 = vector.shape_cast %13 : vector<8x8x4xbf16> to vector<64x4xbf16>
    %c1_12 = arith.constant 1 : index
    %c0_13 = arith.constant 0 : index
    %c0_14 = arith.constant 0 : index
    %15 = vector.load %arg2[%c1_12, %c0_13, %c0_14] : memref<9x4x128xbf16, #tpu.memory_space<vmem>>, vector<1x4x128xbf16>
    %16 = vector.shape_cast %15 : vector<1x4x128xbf16> to vector<4x128xbf16>
    %cst_15 = arith.constant dense<0.000000e+00> : vector<64x128xf32>
    %17 = tpu.matmul %14, %16, %cst_15 {dimension_numbers = #tpu.dot_dimension_numbers<[1], [0], [0], [1], [0, 0, 1, 1], [], []>} : vector<64x4xbf16>, vector<4x128xbf16>, vector<64x128xf32> -> vector<64x128xf32>
    %18 = arith.addf %9, %17 : vector<64x128xf32>
    %c0_16 = arith.constant 0 : index
    %c0_17 = arith.constant 0 : index
    %c1_18 = arith.constant 1 : index
    %c0_19 = arith.constant 0 : index
    %19 = vector.load %arg1[%c0_16, %c0_17, %c1_18, %c0_19] : memref<4x9x9x4xbf16, #tpu.memory_space<vmem>>, vector<1x8x8x4xbf16>
    %20 = vector.shape_cast %19 : vector<1x8x8x4xbf16> to vector<8x8x4xbf16>
    %cst_20 = arith.constant 0.000000e+00 : bf16
    %21 = vector.broadcast %cst_20 : bf16 to vector<8x8x4xbf16>
    %22 = arith.maximumf %20, %21 : vector<8x8x4xbf16>
    %23 = vector.shape_cast %22 : vector<8x8x4xbf16> to vector<64x4xbf16>
    %c2 = arith.constant 2 : index
    %c0_21 = arith.constant 0 : index
    %c0_22 = arith.constant 0 : index
    %24 = vector.load %arg2[%c2, %c0_21, %c0_22] : memref<9x4x128xbf16, #tpu.memory_space<vmem>>, vector<1x4x128xbf16>
    %25 = vector.shape_cast %24 : vector<1x4x128xbf16> to vector<4x128xbf16>
    %cst_23 = arith.constant dense<0.000000e+00> : vector<64x128xf32>
    %26 = tpu.matmul %23, %25, %cst_23 {dimension_numbers = #tpu.dot_dimension_numbers<[1], [0], [0], [1], [0, 0, 1, 1], [], []>} : vector<64x4xbf16>, vector<4x128xbf16>, vector<64x128xf32> -> vector<64x128xf32>
    %27 = arith.addf %18, %26 : vector<64x128xf32>
    %c2_24 = arith.constant 2 : index
    %c0_25 = arith.constant 0 : index
    %c0_26 = arith.constant 0 : index
    %c0_27 = arith.constant 0 : index
    %28 = vector.load %arg1[%c2_24, %c0_25, %c0_26, %c0_27] : memref<4x9x9x4xbf16, #tpu.memory_space<vmem>>, vector<1x8x8x4xbf16>
    %29 = vector.shape_cast %28 : vector<1x8x8x4xbf16> to vector<8x8x4xbf16>
    %cst_28 = arith.constant 0.000000e+00 : bf16
    %30 = vector.broadcast %cst_28 : bf16 to vector<8x8x4xbf16>
    %31 = arith.maximumf %29, %30 : vector<8x8x4xbf16>
    %32 = vector.shape_cast %31 : vector<8x8x4xbf16> to vector<64x4xbf16>
    %c3 = arith.constant 3 : index
    %c0_29 = arith.constant 0 : index
    %c0_30 = arith.constant 0 : index
    %33 = vector.load %arg2[%c3, %c0_29, %c0_30] : memref<9x4x128xbf16, #tpu.memory_space<vmem>>, vector<1x4x128xbf16>
    %34 = vector.shape_cast %33 : vector<1x4x128xbf16> to vector<4x128xbf16>
    %cst_31 = arith.constant dense<0.000000e+00> : vector<64x128xf32>
    %35 = tpu.matmul %32, %34, %cst_31 {dimension_numbers = #tpu.dot_dimension_numbers<[1], [0], [0], [1], [0, 0, 1, 1], [], []>} : vector<64x4xbf16>, vector<4x128xbf16>, vector<64x128xf32> -> vector<64x128xf32>
    %36 = arith.addf %27, %35 : vector<64x128xf32>
    %c3_32 = arith.constant 3 : index
    %c0_33 = arith.constant 0 : index
    %c0_34 = arith.constant 0 : index
    %c0_35 = arith.constant 0 : index
    %37 = vector.load %arg1[%c3_32, %c0_33, %c0_34, %c0_35] : memref<4x9x9x4xbf16, #tpu.memory_space<vmem>>, vector<1x8x8x4xbf16>
    %38 = vector.shape_cast %37 : vector<1x8x8x4xbf16> to vector<8x8x4xbf16>
    %cst_36 = arith.constant 0.000000e+00 : bf16
    %39 = vector.broadcast %cst_36 : bf16 to vector<8x8x4xbf16>
    %40 = arith.maximumf %38, %39 : vector<8x8x4xbf16>
    %41 = vector.shape_cast %40 : vector<8x8x4xbf16> to vector<64x4xbf16>
    %c4 = arith.constant 4 : index
    %c0_37 = arith.constant 0 : index
    %c0_38 = arith.constant 0 : index
    %42 = vector.load %arg2[%c4, %c0_37, %c0_38] : memref<9x4x128xbf16, #tpu.memory_space<vmem>>, vector<1x4x128xbf16>
    %43 = vector.shape_cast %42 : vector<1x4x128xbf16> to vector<4x128xbf16>
    %cst_39 = arith.constant dense<0.000000e+00> : vector<64x128xf32>
    %44 = tpu.matmul %41, %43, %cst_39 {dimension_numbers = #tpu.dot_dimension_numbers<[1], [0], [0], [1], [0, 0, 1, 1], [], []>} : vector<64x4xbf16>, vector<4x128xbf16>, vector<64x128xf32> -> vector<64x128xf32>
    %45 = arith.addf %36, %44 : vector<64x128xf32>
    %c2_40 = arith.constant 2 : index
    %c0_41 = arith.constant 0 : index
    %c1_42 = arith.constant 1 : index
    %c0_43 = arith.constant 0 : index
    %46 = vector.load %arg1[%c2_40, %c0_41, %c1_42, %c0_43] : memref<4x9x9x4xbf16, #tpu.memory_space<vmem>>, vector<1x8x8x4xbf16>
    %47 = vector.shape_cast %46 : vector<1x8x8x4xbf16> to vector<8x8x4xbf16>
    %cst_44 = arith.constant 0.000000e+00 : bf16
    %48 = vector.broadcast %cst_44 : bf16 to vector<8x8x4xbf16>
    %49 = arith.maximumf %47, %48 : vector<8x8x4xbf16>
    %50 = vector.shape_cast %49 : vector<8x8x4xbf16> to vector<64x4xbf16>
    %c5 = arith.constant 5 : index
    %c0_45 = arith.constant 0 : index
    %c0_46 = arith.constant 0 : index
    %51 = vector.load %arg2[%c5, %c0_45, %c0_46] : memref<9x4x128xbf16, #tpu.memory_space<vmem>>, vector<1x4x128xbf16>
    %52 = vector.shape_cast %51 : vector<1x4x128xbf16> to vector<4x128xbf16>
    %cst_47 = arith.constant dense<0.000000e+00> : vector<64x128xf32>
    %53 = tpu.matmul %50, %52, %cst_47 {dimension_numbers = #tpu.dot_dimension_numbers<[1], [0], [0], [1], [0, 0, 1, 1], [], []>} : vector<64x4xbf16>, vector<4x128xbf16>, vector<64x128xf32> -> vector<64x128xf32>
    %54 = arith.addf %45, %53 : vector<64x128xf32>
    %c0_48 = arith.constant 0 : index
    %c1_49 = arith.constant 1 : index
    %c0_50 = arith.constant 0 : index
    %c0_51 = arith.constant 0 : index
    %55 = vector.load %arg1[%c0_48, %c1_49, %c0_50, %c0_51] : memref<4x9x9x4xbf16, #tpu.memory_space<vmem>>, vector<1x8x8x4xbf16>
    %56 = vector.shape_cast %55 : vector<1x8x8x4xbf16> to vector<8x8x4xbf16>
    %cst_52 = arith.constant 0.000000e+00 : bf16
    %57 = vector.broadcast %cst_52 : bf16 to vector<8x8x4xbf16>
    %58 = arith.maximumf %56, %57 : vector<8x8x4xbf16>
    %59 = vector.shape_cast %58 : vector<8x8x4xbf16> to vector<64x4xbf16>
    %c6 = arith.constant 6 : index
    %c0_53 = arith.constant 0 : index
    %c0_54 = arith.constant 0 : index
    %60 = vector.load %arg2[%c6, %c0_53, %c0_54] : memref<9x4x128xbf16, #tpu.memory_space<vmem>>, vector<1x4x128xbf16>
    %61 = vector.shape_cast %60 : vector<1x4x128xbf16> to vector<4x128xbf16>
    %cst_55 = arith.constant dense<0.000000e+00> : vector<64x128xf32>
    %62 = tpu.matmul %59, %61, %cst_55 {dimension_numbers = #tpu.dot_dimension_numbers<[1], [0], [0], [1], [0, 0, 1, 1], [], []>} : vector<64x4xbf16>, vector<4x128xbf16>, vector<64x128xf32> -> vector<64x128xf32>
    %63 = arith.addf %54, %62 : vector<64x128xf32>
    %c1_56 = arith.constant 1 : index
    %c1_57 = arith.constant 1 : index
    %c0_58 = arith.constant 0 : index
    %c0_59 = arith.constant 0 : index
    %64 = vector.load %arg1[%c1_56, %c1_57, %c0_58, %c0_59] : memref<4x9x9x4xbf16, #tpu.memory_space<vmem>>, vector<1x8x8x4xbf16>
    %65 = vector.shape_cast %64 : vector<1x8x8x4xbf16> to vector<8x8x4xbf16>
    %cst_60 = arith.constant 0.000000e+00 : bf16
    %66 = vector.broadcast %cst_60 : bf16 to vector<8x8x4xbf16>
    %67 = arith.maximumf %65, %66 : vector<8x8x4xbf16>
    %68 = vector.shape_cast %67 : vector<8x8x4xbf16> to vector<64x4xbf16>
    %c7 = arith.constant 7 : index
    %c0_61 = arith.constant 0 : index
    %c0_62 = arith.constant 0 : index
    %69 = vector.load %arg2[%c7, %c0_61, %c0_62] : memref<9x4x128xbf16, #tpu.memory_space<vmem>>, vector<1x4x128xbf16>
    %70 = vector.shape_cast %69 : vector<1x4x128xbf16> to vector<4x128xbf16>
    %cst_63 = arith.constant dense<0.000000e+00> : vector<64x128xf32>
    %71 = tpu.matmul %68, %70, %cst_63 {dimension_numbers = #tpu.dot_dimension_numbers<[1], [0], [0], [1], [0, 0, 1, 1], [], []>} : vector<64x4xbf16>, vector<4x128xbf16>, vector<64x128xf32> -> vector<64x128xf32>
    %72 = arith.addf %63, %71 : vector<64x128xf32>
    %c0_64 = arith.constant 0 : index
    %c1_65 = arith.constant 1 : index
    %c1_66 = arith.constant 1 : index
    %c0_67 = arith.constant 0 : index
    %73 = vector.load %arg1[%c0_64, %c1_65, %c1_66, %c0_67] : memref<4x9x9x4xbf16, #tpu.memory_space<vmem>>, vector<1x8x8x4xbf16>
    %74 = vector.shape_cast %73 : vector<1x8x8x4xbf16> to vector<8x8x4xbf16>
    %cst_68 = arith.constant 0.000000e+00 : bf16
    %75 = vector.broadcast %cst_68 : bf16 to vector<8x8x4xbf16>
    %76 = arith.maximumf %74, %75 : vector<8x8x4xbf16>
    %77 = vector.shape_cast %76 : vector<8x8x4xbf16> to vector<64x4xbf16>
    %c8 = arith.constant 8 : index
    %c0_69 = arith.constant 0 : index
    %c0_70 = arith.constant 0 : index
    %78 = vector.load %arg2[%c8, %c0_69, %c0_70] : memref<9x4x128xbf16, #tpu.memory_space<vmem>>, vector<1x4x128xbf16>
    %79 = vector.shape_cast %78 : vector<1x4x128xbf16> to vector<4x128xbf16>
    %cst_71 = arith.constant dense<0.000000e+00> : vector<64x128xf32>
    %80 = tpu.matmul %77, %79, %cst_71 {dimension_numbers = #tpu.dot_dimension_numbers<[1], [0], [0], [1], [0, 0, 1, 1], [], []>} : vector<64x4xbf16>, vector<4x128xbf16>, vector<64x128xf32> -> vector<64x128xf32>
    %81 = arith.addf %72, %80 : vector<64x128xf32>
    %c0_72 = arith.constant 0 : index
    %c0_73 = arith.constant 0 : index
    %82 = vector.load %arg3[%c0_72, %c0_73] : memref<1x128xf32, #tpu.memory_space<vmem>>, vector<1x128xf32>
    %83 = vector.broadcast %82 : vector<1x128xf32> to vector<64x128xf32>
    %84 = arith.mulf %81, %83 : vector<64x128xf32>
    %c0_74 = arith.constant 0 : index
    %c0_75 = arith.constant 0 : index
    %85 = vector.load %arg4[%c0_74, %c0_75] : memref<1x128xf32, #tpu.memory_space<vmem>>, vector<1x128xf32>
    %86 = vector.broadcast %85 : vector<1x128xf32> to vector<64x128xf32>
    %87 = arith.addf %84, %86 : vector<64x128xf32>
    %cst_76 = arith.constant 0.000000e+00 : f32
    %88 = vector.broadcast %cst_76 : f32 to vector<64x128xf32>
    %89 = arith.maximumf %87, %88 : vector<64x128xf32>
    %cst_77 = arith.constant 0.000000e+00 : bf16
    %90 = vector.broadcast %cst_77 : bf16 to vector<1x10x10x128xbf16>
    %c0_78 = arith.constant 0 : index
    %c0_79 = arith.constant 0 : index
    %c0_80 = arith.constant 0 : index
    %c0_81 = arith.constant 0 : index
    %91 = vector.load %arg12[%c0_78, %c0_79, %c0_80, %c0_81] : memref<1x10x10x128xbf16, #tpu.memory_space<vmem>>, vector<1x10x10x128xbf16>
    tpu.vector_store %arg12[%c0_78, %c0_79, %c0_80, %c0_81], %90 {strides = array<i32>} : memref<1x10x10x128xbf16, #tpu.memory_space<vmem>>, vector<1x10x10x128xbf16>,
    %92 = vector.shape_cast %89 : vector<64x128xf32> to vector<1x8x8x128xf32>
    %93 = arith.truncf %92 : vector<1x8x8x128xf32> to vector<1x8x8x128xbf16>
    %c0_82 = arith.constant 0 : index
    %c1_83 = arith.constant 1 : index
    %c1_84 = arith.constant 1 : index
    %c0_85 = arith.constant 0 : index
    %94 = vector.load %arg12[%c0_82, %c1_83, %c1_84, %c0_85] : memref<1x10x10x128xbf16, #tpu.memory_space<vmem>>, vector<1x8x8x128xbf16>
    tpu.vector_store %arg12[%c0_82, %c1_83, %c1_84, %c0_85], %93 {strides = array<i32>} : memref<1x10x10x128xbf16, #tpu.memory_space<vmem>>, vector<1x8x8x128xbf16>,
    %cst_86 = arith.constant 0.000000e+00 : f32
    %95 = vector.broadcast %cst_86 : f32 to vector<64x128xf32>
    %c0_87 = arith.constant 0 : index
    %c0_88 = arith.constant 0 : index
    %c0_89 = arith.constant 0 : index
    %c0_90 = arith.constant 0 : index
    %96 = vector.load %arg12[%c0_87, %c0_88, %c0_89, %c0_90] : memref<1x10x10x128xbf16, #tpu.memory_space<vmem>>, vector<1x8x8x128xbf16>
    %97 = vector.shape_cast %96 : vector<1x8x8x128xbf16> to vector<8x8x128xbf16>
    %98 = vector.shape_cast %97 : vector<8x8x128xbf16> to vector<64x128xbf16>
    %c0_91 = arith.constant 0 : index
    %c0_92 = arith.constant 0 : index
    %c0_93 = arith.constant 0 : index
    %99 = vector.load %arg5[%c0_91, %c0_92, %c0_93] : memref<9x128x128xbf16, #tpu.memory_space<vmem>>, vector<1x128x128xbf16>
    %100 = vector.shape_cast %99 : vector<1x128x128xbf16> to vector<128x128xbf16>
    %cst_94 = arith.constant dense<0.000000e+00> : vector<64x128xf32>
    %101 = tpu.matmul %98, %100, %cst_94 {dimension_numbers = #tpu.dot_dimension_numbers<[1], [0], [0], [1], [0, 0, 1, 1], [], []>} : vector<64x128xbf16>, vector<128x128xbf16>, vector<64x128xf32> -> vector<64x128xf32>
    %102 = arith.addf %95, %101 : vector<64x128xf32>
    %c0_95 = arith.constant 0 : index
    %c0_96 = arith.constant 0 : index
    %c1_97 = arith.constant 1 : index
    %c0_98 = arith.constant 0 : index
    %103 = vector.load %arg12[%c0_95, %c0_96, %c1_97, %c0_98] : memref<1x10x10x128xbf16, #tpu.memory_space<vmem>>, vector<1x8x8x128xbf16>
    %104 = vector.shape_cast %103 : vector<1x8x8x128xbf16> to vector<8x8x128xbf16>
    %105 = vector.shape_cast %104 : vector<8x8x128xbf16> to vector<64x128xbf16>
    %c1_99 = arith.constant 1 : index
    %c0_100 = arith.constant 0 : index
    %c0_101 = arith.constant 0 : index
    %106 = vector.load %arg5[%c1_99, %c0_100, %c0_101] : memref<9x128x128xbf16, #tpu.memory_space<vmem>>, vector<1x128x128xbf16>
    %107 = vector.shape_cast %106 : vector<1x128x128xbf16> to vector<128x128xbf16>
    %cst_102 = arith.constant dense<0.000000e+00> : vector<64x128xf32>
    %108 = tpu.matmul %105, %107, %cst_102 {dimension_numbers = #tpu.dot_dimension_numbers<[1], [0], [0], [1], [0, 0, 1, 1], [], []>} : vector<64x128xbf16>, vector<128x128xbf16>, vector<64x128xf32> -> vector<64x128xf32>
    %109 = arith.addf %102, %108 : vector<64x128xf32>
    %c0_103 = arith.constant 0 : index
    %c0_104 = arith.constant 0 : index
    %c2_105 = arith.constant 2 : index
    %c0_106 = arith.constant 0 : index
    %110 = vector.load %arg12[%c0_103, %c0_104, %c2_105, %c0_106] : memref<1x10x10x128xbf16, #tpu.memory_space<vmem>>, vector<1x8x8x128xbf16>
    %111 = vector.shape_cast %110 : vector<1x8x8x128xbf16> to vector<8x8x128xbf16>
    %112 = vector.shape_cast %111 : vector<8x8x128xbf16> to vector<64x128xbf16>
    %c2_107 = arith.constant 2 : index
    %c0_108 = arith.constant 0 : index
    %c0_109 = arith.constant 0 : index
    %113 = vector.load %arg5[%c2_107, %c0_108, %c0_109] : memref<9x128x128xbf16, #tpu.memory_space<vmem>>, vector<1x128x128xbf16>
    %114 = vector.shape_cast %113 : vector<1x128x128xbf16> to vector<128x128xbf16>
    %cst_110 = arith.constant dense<0.000000e+00> : vector<64x128xf32>
    %115 = tpu.matmul %112, %114, %cst_110 {dimension_numbers = #tpu.dot_dimension_numbers<[1], [0], [0], [1], [0, 0, 1, 1], [], []>} : vector<64x128xbf16>, vector<128x128xbf16>, vector<64x128xf32> -> vector<64x128xf32>
    %116 = arith.addf %109, %115 : vector<64x128xf32>
    %c0_111 = arith.constant 0 : index
    %c1_112 = arith.constant 1 : index
    %c0_113 = arith.constant 0 : index
    %c0_114 = arith.constant 0 : index
    %117 = vector.load %arg12[%c0_111, %c1_112, %c0_113, %c0_114] : memref<1x10x10x128xbf16, #tpu.memory_space<vmem>>, vector<1x8x8x128xbf16>
    %118 = vector.shape_cast %117 : vector<1x8x8x128xbf16> to vector<8x8x128xbf16>
    %119 = vector.shape_cast %118 : vector<8x8x128xbf16> to vector<64x128xbf16>
    %c3_115 = arith.constant 3 : index
    %c0_116 = arith.constant 0 : index
    %c0_117 = arith.constant 0 : index
    %120 = vector.load %arg5[%c3_115, %c0_116, %c0_117] : memref<9x128x128xbf16, #tpu.memory_space<vmem>>, vector<1x128x128xbf16>
    %121 = vector.shape_cast %120 : vector<1x128x128xbf16> to vector<128x128xbf16>
    %cst_118 = arith.constant dense<0.000000e+00> : vector<64x128xf32>
    %122 = tpu.matmul %119, %121, %cst_118 {dimension_numbers = #tpu.dot_dimension_numbers<[1], [0], [0], [1], [0, 0, 1, 1], [], []>} : vector<64x128xbf16>, vector<128x128xbf16>, vector<64x128xf32> -> vector<64x128xf32>
    %123 = arith.addf %116, %122 : vector<64x128xf32>
    %c0_119 = arith.constant 0 : index
    %c1_120 = arith.constant 1 : index
    %c1_121 = arith.constant 1 : index
    %c0_122 = arith.constant 0 : index
    %124 = vector.load %arg12[%c0_119, %c1_120, %c1_121, %c0_122] : memref<1x10x10x128xbf16, #tpu.memory_space<vmem>>, vector<1x8x8x128xbf16>
    %125 = vector.shape_cast %124 : vector<1x8x8x128xbf16> to vector<8x8x128xbf16>
    %126 = vector.shape_cast %125 : vector<8x8x128xbf16> to vector<64x128xbf16>
    %c4_123 = arith.constant 4 : index
    %c0_124 = arith.constant 0 : index
    %c0_125 = arith.constant 0 : index
    %127 = vector.load %arg5[%c4_123, %c0_124, %c0_125] : memref<9x128x128xbf16, #tpu.memory_space<vmem>>, vector<1x128x128xbf16>
    %128 = vector.shape_cast %127 : vector<1x128x128xbf16> to vector<128x128xbf16>
    %cst_126 = arith.constant dense<0.000000e+00> : vector<64x128xf32>
    %129 = tpu.matmul %126, %128, %cst_126 {dimension_numbers = #tpu.dot_dimension_numbers<[1], [0], [0], [1], [0, 0, 1, 1], [], []>} : vector<64x128xbf16>, vector<128x128xbf16>, vector<64x128xf32> -> vector<64x128xf32>
    %130 = arith.addf %123, %129 : vector<64x128xf32>
    %c0_127 = arith.constant 0 : index
    %c1_128 = arith.constant 1 : index
    %c2_129 = arith.constant 2 : index
    %c0_130 = arith.constant 0 : index
    %131 = vector.load %arg12[%c0_127, %c1_128, %c2_129, %c0_130] : memref<1x10x10x128xbf16, #tpu.memory_space<vmem>>, vector<1x8x8x128xbf16>
    %132 = vector.shape_cast %131 : vector<1x8x8x128xbf16> to vector<8x8x128xbf16>
    %133 = vector.shape_cast %132 : vector<8x8x128xbf16> to vector<64x128xbf16>
    %c5_131 = arith.constant 5 : index
    %c0_132 = arith.constant 0 : index
    %c0_133 = arith.constant 0 : index
    %134 = vector.load %arg5[%c5_131, %c0_132, %c0_133] : memref<9x128x128xbf16, #tpu.memory_space<vmem>>, vector<1x128x128xbf16>
    %135 = vector.shape_cast %134 : vector<1x128x128xbf16> to vector<128x128xbf16>
    %cst_134 = arith.constant dense<0.000000e+00> : vector<64x128xf32>
    %136 = tpu.matmul %133, %135, %cst_134 {dimension_numbers = #tpu.dot_dimension_numbers<[1], [0], [0], [1], [0, 0, 1, 1], [], []>} : vector<64x128xbf16>, vector<128x128xbf16>, vector<64x128xf32> -> vector<64x128xf32>
    %137 = arith.addf %130, %136 : vector<64x128xf32>
    %c0_135 = arith.constant 0 : index
    %c2_136 = arith.constant 2 : index
    %c0_137 = arith.constant 0 : index
    %c0_138 = arith.constant 0 : index
    %138 = vector.load %arg12[%c0_135, %c2_136, %c0_137, %c0_138] : memref<1x10x10x128xbf16, #tpu.memory_space<vmem>>, vector<1x8x8x128xbf16>
    %139 = vector.shape_cast %138 : vector<1x8x8x128xbf16> to vector<8x8x128xbf16>
    %140 = vector.shape_cast %139 : vector<8x8x128xbf16> to vector<64x128xbf16>
    %c6_139 = arith.constant 6 : index
    %c0_140 = arith.constant 0 : index
    %c0_141 = arith.constant 0 : index
    %141 = vector.load %arg5[%c6_139, %c0_140, %c0_141] : memref<9x128x128xbf16, #tpu.memory_space<vmem>>, vector<1x128x128xbf16>
    %142 = vector.shape_cast %141 : vector<1x128x128xbf16> to vector<128x128xbf16>
    %cst_142 = arith.constant dense<0.000000e+00> : vector<64x128xf32>
    %143 = tpu.matmul %140, %142, %cst_142 {dimension_numbers = #tpu.dot_dimension_numbers<[1], [0], [0], [1], [0, 0, 1, 1], [], []>} : vector<64x128xbf16>, vector<128x128xbf16>, vector<64x128xf32> -> vector<64x128xf32>
    %144 = arith.addf %137, %143 : vector<64x128xf32>
    %c0_143 = arith.constant 0 : index
    %c2_144 = arith.constant 2 : index
    %c1_145 = arith.constant 1 : index
    %c0_146 = arith.constant 0 : index
    %145 = vector.load %arg12[%c0_143, %c2_144, %c1_145, %c0_146] : memref<1x10x10x128xbf16, #tpu.memory_space<vmem>>, vector<1x8x8x128xbf16>
    %146 = vector.shape_cast %145 : vector<1x8x8x128xbf16> to vector<8x8x128xbf16>
    %147 = vector.shape_cast %146 : vector<8x8x128xbf16> to vector<64x128xbf16>
    %c7_147 = arith.constant 7 : index
    %c0_148 = arith.constant 0 : index
    %c0_149 = arith.constant 0 : index
    %148 = vector.load %arg5[%c7_147, %c0_148, %c0_149] : memref<9x128x128xbf16, #tpu.memory_space<vmem>>, vector<1x128x128xbf16>
    %149 = vector.shape_cast %148 : vector<1x128x128xbf16> to vector<128x128xbf16>
    %cst_150 = arith.constant dense<0.000000e+00> : vector<64x128xf32>
    %150 = tpu.matmul %147, %149, %cst_150 {dimension_numbers = #tpu.dot_dimension_numbers<[1], [0], [0], [1], [0, 0, 1, 1], [], []>} : vector<64x128xbf16>, vector<128x128xbf16>, vector<64x128xf32> -> vector<64x128xf32>
    %151 = arith.addf %144, %150 : vector<64x128xf32>
    %c0_151 = arith.constant 0 : index
    %c2_152 = arith.constant 2 : index
    %c2_153 = arith.constant 2 : index
    %c0_154 = arith.constant 0 : index
    %152 = vector.load %arg12[%c0_151, %c2_152, %c2_153, %c0_154] : memref<1x10x10x128xbf16, #tpu.memory_space<vmem>>, vector<1x8x8x128xbf16>
    %153 = vector.shape_cast %152 : vector<1x8x8x128xbf16> to vector<8x8x128xbf16>
    %154 = vector.shape_cast %153 : vector<8x8x128xbf16> to vector<64x128xbf16>
    %c8_155 = arith.constant 8 : index
    %c0_156 = arith.constant 0 : index
    %c0_157 = arith.constant 0 : index
    %155 = vector.load %arg5[%c8_155, %c0_156, %c0_157] : memref<9x128x128xbf16, #tpu.memory_space<vmem>>, vector<1x128x128xbf16>
    %156 = vector.shape_cast %155 : vector<1x128x128xbf16> to vector<128x128xbf16>
    %cst_158 = arith.constant dense<0.000000e+00> : vector<64x128xf32>
    %157 = tpu.matmul %154, %156, %cst_158 {dimension_numbers = #tpu.dot_dimension_numbers<[1], [0], [0], [1], [0, 0, 1, 1], [], []>} : vector<64x128xbf16>, vector<128x128xbf16>, vector<64x128xf32> -> vector<64x128xf32>
    %158 = arith.addf %151, %157 : vector<64x128xf32>
    %c0_159 = arith.constant 0 : index
    %c0_160 = arith.constant 0 : index
    %159 = vector.load %arg6[%c0_159, %c0_160] : memref<1x128xf32, #tpu.memory_space<vmem>>, vector<1x128xf32>
    %160 = vector.broadcast %159 : vector<1x128xf32> to vector<64x128xf32>
    %161 = arith.mulf %158, %160 : vector<64x128xf32>
    %c0_161 = arith.constant 0 : index
    %c0_162 = arith.constant 0 : index
    %162 = vector.load %arg7[%c0_161, %c0_162] : memref<1x128xf32, #tpu.memory_space<vmem>>, vector<1x128xf32>
    %163 = vector.broadcast %162 : vector<1x128xf32> to vector<64x128xf32>
    %164 = arith.addf %161, %163 : vector<64x128xf32>
    %c3_163 = arith.constant 3 : index
    %c0_164 = arith.constant 0 : index
    %c0_165 = arith.constant 0 : index
    %c0_166 = arith.constant 0 : index
    %165 = vector.load %arg1[%c3_163, %c0_164, %c0_165, %c0_166] : memref<4x9x9x4xbf16, #tpu.memory_space<vmem>>, vector<1x8x8x4xbf16>
    %166 = vector.shape_cast %165 : vector<1x8x8x4xbf16> to vector<8x8x4xbf16>
    %cst_167 = arith.constant 0.000000e+00 : bf16
    %167 = vector.broadcast %cst_167 : bf16 to vector<8x8x4xbf16>
    %168 = arith.maximumf %166, %167 : vector<8x8x4xbf16>
    %169 = vector.shape_cast %168 : vector<8x8x4xbf16> to vector<64x4xbf16>
    %c0_168 = arith.constant 0 : index
    %c0_169 = arith.constant 0 : index
    %170 = vector.load %arg8[%c0_168, %c0_169] : memref<4x128xbf16, #tpu.memory_space<vmem>>, vector<4x128xbf16>
    %cst_170 = arith.constant dense<0.000000e+00> : vector<64x128xf32>
    %171 = tpu.matmul %169, %170, %cst_170 {dimension_numbers = #tpu.dot_dimension_numbers<[1], [0], [0], [1], [0, 0, 1, 1], [], []>} : vector<64x4xbf16>, vector<4x128xbf16>, vector<64x128xf32> -> vector<64x128xf32>
    %c0_171 = arith.constant 0 : index
    %c0_172 = arith.constant 0 : index
    %172 = vector.load %arg9[%c0_171, %c0_172] : memref<1x128xf32, #tpu.memory_space<vmem>>, vector<1x128xf32>
    %173 = vector.broadcast %172 : vector<1x128xf32> to vector<64x128xf32>
    %174 = arith.mulf %171, %173 : vector<64x128xf32>
    %c0_173 = arith.constant 0 : index
    %c0_174 = arith.constant 0 : index
    %175 = vector.load %arg10[%c0_173, %c0_174] : memref<1x128xf32, #tpu.memory_space<vmem>>, vector<1x128xf32>
    %176 = vector.broadcast %175 : vector<1x128xf32> to vector<64x128xf32>
    %177 = arith.addf %174, %176 : vector<64x128xf32>
    %178 = arith.addf %164, %177 : vector<64x128xf32>
    %179 = vector.shape_cast %178 : vector<64x128xf32> to vector<1x8x8x128xf32>
    %c0_175 = arith.constant 0 : index
    %c0_176 = arith.constant 0 : index
    %c0_177 = arith.constant 0 : index
    %c0_178 = arith.constant 0 : index
    %180 = vector.load %arg11[%c0_175, %c0_176, %c0_177, %c0_178] : memref<1x8x8x128xf32, #tpu.memory_space<vmem>>, vector<1x8x8x128xf32>
    tpu.vector_store %arg11[%c0_175, %c0_176, %c0_177, %c0_178], %179 {strides = array<i32>} : memref<1x8x8x128xf32, #tpu.memory_space<vmem>>, vector<1x8x8x128xf32>,
    return
  }
  func.func @transform_0(%arg0: i32) -> (i32, i32, i32, i32) {
    %c0_i32 = arith.constant 0 : i32
    %c0_i32_0 = arith.constant 0 : i32
    %c0_i32_1 = arith.constant 0 : i32
    %c0_i32_2 = arith.constant 0 : i32
    return %arg0, %c0_i32, %c0_i32_0, %c0_i32_1 : i32, i32, i32, i32
  }
  func.func @transform_1(%arg0: i32) -> (i32, i32, i32) {
    %c0_i32 = arith.constant 0 : i32
    %c0_i32_0 = arith.constant 0 : i32
    %c0_i32_1 = arith.constant 0 : i32
    %c0_i32_2 = arith.constant 0 : i32
    return %c0_i32, %c0_i32_0, %c0_i32_1 : i32, i32, i32
  }
  func.func @transform_2(%arg0: i32) -> (i32, i32) {
    %c0_i32 = arith.constant 0 : i32
    %c0_i32_0 = arith.constant 0 : i32
    %c0_i32_1 = arith.constant 0 : i32
    return %c0_i32, %c0_i32_0 : i32, i32
  }
  func.func @transform_3(%arg0: i32) -> (i32, i32) {
    %c0_i32 = arith.constant 0 : i32
    %c0_i32_0 = arith.constant 0 : i32
    %c0_i32_1 = arith.constant 0 : i32
    return %c0_i32, %c0_i32_0 : i32, i32
  }
  func.func @transform_4(%arg0: i32) -> (i32, i32, i32) {
    %c0_i32 = arith.constant 0 : i32
    %c0_i32_0 = arith.constant 0 : i32
    %c0_i32_1 = arith.constant 0 : i32
    %c0_i32_2 = arith.constant 0 : i32
    return %c0_i32, %c0_i32_0, %c0_i32_1 : i32, i32, i32
  }
  func.func @transform_5(%arg0: i32) -> (i32, i32) {
    %c0_i32 = arith.constant 0 : i32
    %c0_i32_0 = arith.constant 0 : i32
    %c0_i32_1 = arith.constant 0 : i32
    return %c0_i32, %c0_i32_0 : i32, i32
  }
  func.func @transform_6(%arg0: i32) -> (i32, i32) {
    %c0_i32 = arith.constant 0 : i32
    %c0_i32_0 = arith.constant 0 : i32
    %c0_i32_1 = arith.constant 0 : i32
    return %c0_i32, %c0_i32_0 : i32, i32
  }
  func.func @transform_7(%arg0: i32) -> (i32, i32) {
    %c0_i32 = arith.constant 0 : i32
    %c0_i32_0 = arith.constant 0 : i32
    %c0_i32_1 = arith.constant 0 : i32
    return %c0_i32, %c0_i32_0 : i32, i32
  }
  func.func @transform_8(%arg0: i32) -> (i32, i32) {
    %c0_i32 = arith.constant 0 : i32
    %c0_i32_0 = arith.constant 0 : i32
    %c0_i32_1 = arith.constant 0 : i32
    return %c0_i32, %c0_i32_0 : i32, i32
  }
  func.func @transform_9(%arg0: i32) -> (i32, i32) {
    %c0_i32 = arith.constant 0 : i32
    %c0_i32_0 = arith.constant 0 : i32
    %c0_i32_1 = arith.constant 0 : i32
    return %c0_i32, %c0_i32_0 : i32, i32
  }
  func.func @transform_10(%arg0: i32) -> (i32, i32, i32, i32) {
    %c0_i32 = arith.constant 0 : i32
    %c0_i32_0 = arith.constant 0 : i32
    %c0_i32_1 = arith.constant 0 : i32
    %c0_i32_2 = arith.constant 0 : i32
    return %arg0, %c0_i32, %c0_i32_0, %c0_i32_1 : i32, i32, i32, i32
  }
}

</mosaic_0001>

<llo_original>
// kernel: tpu_custom_call.1
$region0: #{tpu_custom_call.1}
  #allocation0 [shape = 'u32[]', space=smem, size = 0x4, offset = 0x4, fixed_abs, tag = 'smem constant byte address 0x4 - core index']
  #allocation1 [shape = 'u32[144,128]{1,0:T(1,128)}', space=vmem, size = 0x12000, scoped, tag = 'internal scratch']
  #allocation2 [shape = 'bf16[1,10,10,128]{3,2,1,0:T(8,128)(2,1)}', space=vmem, size = 0xa000, scoped, tag = 'scratch operand']
  %s0 = inlined_call_operand.vmem [shape: bf16[8,9,9,4], index: 0, kind: input, shape index: {}]
  %s1 = inlined_call_operand.vmem [shape: bf16[9,4,128], index: 1, kind: input, shape index: {}]
  %s2 = inlined_call_operand.vmem [shape: f32[1,128], index: 2, kind: input, shape index: {}]
  %s3 = inlined_call_operand.vmem [shape: f32[1,128], index: 3, kind: input, shape index: {}]
  %s4 = inlined_call_operand.vmem [shape: bf16[9,128,128], index: 4, kind: input, shape index: {}]
  %s5 = inlined_call_operand.vmem [shape: f32[1,128], index: 5, kind: input, shape index: {}]
  %s6 = inlined_call_operand.vmem [shape: f32[1,128], index: 6, kind: input, shape index: {}]
  %s7 = inlined_call_operand.vmem [shape: bf16[4,128], index: 7, kind: input, shape index: {}]
  %s8 = inlined_call_operand.vmem [shape: f32[1,128], index: 8, kind: input, shape index: {}]
  %s9 = inlined_call_operand.vmem [shape: f32[1,128], index: 9, kind: input, shape index: {}]
  %s10 = inlined_call_operand.hbm [shape: f32[2,8,8,128], index: 10, kind: output, shape index: {}]
  %s11 = sld [smem:[#allocation0]]
  $region73: #{tpu_custom_call.1} parent=0
    _
  %s13 = ssub.s32 1, %s11
  %s14 = scalar_select 0, %s13, %s11
  $region1: #{tpu_custom_call.1} parent=0
    #allocation3 [shape = 'u8[65536]{0}', space=vmem, size = 0x10000, scoped, tag = 'output window, operand 0']
    #allocation4 [shape = 's32[2]{0}', space=sflag, size = 0x8, scoped, tag = 'scoped memory for tpu_custom_call.1']
    %15 = vsyncpa [#allocation4], 0
    %s16 = scalar_lea.sflag [#allocation4], 1
    %17 = vsyncpa %s16, 0
    loop: start=0, step=1, limit=4
    $region2: #{tpu_custom_call.1} parent=1 // loop_pre_header
      _
    $region3: #{tpu_custom_call.1} parent=1 // loop_header
      %s19 = sphi 0, %s23
      %p20 = scmp.ge.s32.totalorder %s19, 4
      %s29 = sphi 0, %s31
      %s32 = sphi 0, %s29
      %s33 = sphi 0, %s32
      %s49 = sphi 0, %s33
      %s53 = sphi 0, %s53
      %s55 = sphi 0, %s53
      %s56 = sphi 0, %s55
      %s70 = sphi 0, %s56
      %s74 = sphi 0, %s74
      %s76 = sphi 0, %s74
      %s77 = sphi 0, %s76
      %s91 = sphi 0, %s77
      %s95 = sphi 0, %s95
      %s97 = sphi 0, %s95
      %s98 = sphi 0, %s97
      %s112 = sphi 0, %s98
      %s116 = sphi 0, %s116
      %s118 = sphi 0, %s116
      %s119 = sphi 0, %s118
      %s133 = sphi 0, %s119
      %s137 = sphi 0, %s137
      %s139 = sphi 0, %s137
      %s140 = sphi 0, %s139
      %s154 = sphi 0, %s140
      %s158 = sphi 0, %s158
      %s160 = sphi 0, %s158
      %s161 = sphi 0, %s160
      %s175 = sphi 0, %s161
      %s179 = sphi 0, %s179
      %s181 = sphi 0, %s179
      %s182 = sphi 0, %s181
      %s196 = sphi 0, %s182
      %s200 = sphi 0, %s200
      %s202 = sphi 0, %s200
      %s203 = sphi 0, %s202
      %s217 = sphi 0, %s203
      %s221 = sphi 0, %s221
      %s223 = sphi 0, %s221
      %s224 = sphi 0, %s223
      %s238 = sphi 0, %s224
      %s244 = sphi 0, %s246
      %s247 = sphi 0, %s244
      %s248 = sphi 0, %s247
      %s264 = sphi 0, %s248
    $region4: #{tpu_custom_call.1} parent=1 // loop_header_branch
      %22 = sbr.rel (%p20) target = $region8
    $region5: #{tpu_custom_call.1} parent=1 // loop_body
      %s24 = ssub.s32 %s19, 1
      %s25 = ssub.s32 %s19, 2
      %s26 = sadd.s32 %s19, 1
      %s27 = ssub.s32 %s19, %s26
      %p28 = scmp.eq.s32.totalorder %s27, 0
      %s30 = sadd.s32 %s29, 1
      %s31 = scalar_select %p28, %s29, %s30
      %p34 = pneg %p28
      %p35 = scmp.eq.s32.totalorder %s19, 1
      %p36 = por %p34, %p35
      %p37 = scmp.ne.s32.totalorder %s29, %s32
      %p38 = scmp.eq.s32.totalorder %s19, 0
      %p39 = por %p37, %p38
      %p40 = scmp.ne.s32.totalorder %s29, %s32
      %p41 = scmp.eq.s32.totalorder %s24, 1
      %p42 = por %p40, %p41
      %p43 = scmp.ne.s32.totalorder %s32, %s33
      %p44 = scmp.eq.s32.totalorder %s24, 0
      %p45 = por %p43, %p44
      %p46 = scmp.ne.s32.totalorder %s32, %s33
      %p47 = scmp.eq.s32.totalorder %s25, 1
      %p48 = por %p46, %p47
      %p50 = scmp.ne.s32.totalorder %s33, %s49
      %p51 = scmp.eq.s32.totalorder %s25, 0
      %p52 = por %p50, %p51
      %s54 = sadd.s32 %s53, 1
      %p57 = scmp.eq.s32.totalorder %s19, 1
      %p58 = scmp.ne.s32.totalorder %s53, %s55
      %p59 = scmp.eq.s32.totalorder %s19, 0
      %p60 = por %p58, %p59
      %p61 = scmp.ne.s32.totalorder %s53, %s55
      %p62 = scmp.eq.s32.totalorder %s24, 1
      %p63 = por %p61, %p62
      %p64 = scmp.ne.s32.totalorder %s55, %s56
      %p65 = scmp.eq.s32.totalorder %s24, 0
      %p66 = por %p64, %p65
      %p67 = scmp.ne.s32.totalorder %s55, %s56
      %p68 = scmp.eq.s32.totalorder %s25, 1
      %p69 = por %p67, %p68
      %p71 = scmp.ne.s32.totalorder %s56, %s70
      %p72 = scmp.eq.s32.totalorder %s25, 0
      %p73 = por %p71, %p72
      %s75 = sadd.s32 %s74, 1
      %p78 = scmp.eq.s32.totalorder %s19, 1
      %p79 = scmp.ne.s32.totalorder %s74, %s76
      %p80 = scmp.eq.s32.totalorder %s19, 0
      %p81 = por %p79, %p80
      %p82 = scmp.ne.s32.totalorder %s74, %s76
      %p83 = scmp.eq.s32.totalorder %s24, 1
      %p84 = por %p82, %p83
      %p85 = scmp.ne.s32.totalorder %s76, %s77
      %p86 = scmp.eq.s32.totalorder %s24, 0
      %p87 = por %p85, %p86
      %p88 = scmp.ne.s32.totalorder %s76, %s77
      %p89 = scmp.eq.s32.totalorder %s25, 1
      %p90 = por %p88, %p89
      %p92 = scmp.ne.s32.totalorder %s77, %s91
      %p93 = scmp.eq.s32.totalorder %s25, 0
      %p94 = por %p92, %p93
      %s96 = sadd.s32 %s95, 1
      %p99 = scmp.eq.s32.totalorder %s19, 1
      %p100 = scmp.ne.s32.totalorder %s95, %s97
      %p101 = scmp.eq.s32.totalorder %s19, 0
      %p102 = por %p100, %p101
      %p103 = scmp.ne.s32.totalorder %s95, %s97
      %p104 = scmp.eq.s32.totalorder %s24, 1
      %p105 = por %p103, %p104
      %p106 = scmp.ne.s32.totalorder %s97, %s98
      %p107 = scmp.eq.s32.totalorder %s24, 0
      %p108 = por %p106, %p107
      %p109 = scmp.ne.s32.totalorder %s97, %s98
      %p110 = scmp.eq.s32.totalorder %s25, 1
      %p111 = por %p109, %p110
      %p113 = scmp.ne.s32.totalorder %s98, %s112
      %p114 = scmp.eq.s32.totalorder %s25, 0
      %p115 = por %p113, %p114
      %s117 = sadd.s32 %s116, 1
      %p120 = scmp.eq.s32.totalorder %s19, 1
      %p121 = scmp.ne.s32.totalorder %s116, %s118
      %p122 = scmp.eq.s32.totalorder %s19, 0
      %p123 = por %p121, %p122
      %p124 = scmp.ne.s32.totalorder %s116, %s118
      %p125 = scmp.eq.s32.totalorder %s24, 1
      %p126 = por %p124, %p125
      %p127 = scmp.ne.s32.totalorder %s118, %s119
      %p128 = scmp.eq.s32.totalorder %s24, 0
      %p129 = por %p127, %p128
      %p130 = scmp.ne.s32.totalorder %s118, %s119
      %p131 = scmp.eq.s32.totalorder %s25, 1
      %p132 = por %p130, %p131
      %p134 = scmp.ne.s32.totalorder %s119, %s133
      %p135 = scmp.eq.s32.totalorder %s25, 0
      %p136 = por %p134, %p135
      %s138 = sadd.s32 %s137, 1
      %p141 = scmp.eq.s32.totalorder %s19, 1
      %p142 = scmp.ne.s32.totalorder %s137, %s139
      %p143 = scmp.eq.s32.totalorder %s19, 0
      %p144 = por %p142, %p143
      %p145 = scmp.ne.s32.totalorder %s137, %s139
      %p146 = scmp.eq.s32.totalorder %s24, 1
      %p147 = por %p145, %p146
      %p148 = scmp.ne.s32.totalorder %s139, %s140
      %p149 = scmp.eq.s32.totalorder %s24, 0
      %p150 = por %p148, %p149
      %p151 = scmp.ne.s32.totalorder %s139, %s140
      %p152 = scmp.eq.s32.totalorder %s25, 1
      %p153 = por %p151, %p152
      %p155 = scmp.ne.s32.totalorder %s140, %s154
      %p156 = scmp.eq.s32.totalorder %s25, 0
      %p157 = por %p155, %p156
      %s159 = sadd.s32 %s158, 1
      %p162 = scmp.eq.s32.totalorder %s19, 1
      %p163 = scmp.ne.s32.totalorder %s158, %s160
      %p164 = scmp.eq.s32.totalorder %s19, 0
      %p165 = por %p163, %p164
      %p166 = scmp.ne.s32.totalorder %s158, %s160
      %p167 = scmp.eq.s32.totalorder %s24, 1
      %p168 = por %p166, %p167
      %p169 = scmp.ne.s32.totalorder %s160, %s161
      %p170 = scmp.eq.s32.totalorder %s24, 0
      %p171 = por %p169, %p170
      %p172 = scmp.ne.s32.totalorder %s160, %s161
      %p173 = scmp.eq.s32.totalorder %s25, 1
      %p174 = por %p172, %p173
      %p176 = scmp.ne.s32.totalorder %s161, %s175
      %p177 = scmp.eq.s32.totalorder %s25, 0
      %p178 = por %p176, %p177
      %s180 = sadd.s32 %s179, 1
      %p183 = scmp.eq.s32.totalorder %s19, 1
      %p184 = scmp.ne.s32.totalorder %s179, %s181
      %p185 = scmp.eq.s32.totalorder %s19, 0
      %p186 = por %p184, %p185
      %p187 = scmp.ne.s32.totalorder %s179, %s181
      %p188 = scmp.eq.s32.totalorder %s24, 1
      %p189 = por %p187, %p188
      %p190 = scmp.ne.s32.totalorder %s181, %s182
      %p191 = scmp.eq.s32.totalorder %s24, 0
      %p192 = por %p190, %p191
      %p193 = scmp.ne.s32.totalorder %s181, %s182
      %p194 = scmp.eq.s32.totalorder %s25, 1
      %p195 = por %p193, %p194
      %p197 = scmp.ne.s32.totalorder %s182, %s196
      %p198 = scmp.eq.s32.totalorder %s25, 0
      %p199 = por %p197, %p198
      %s201 = sadd.s32 %s200, 1
      %p204 = scmp.eq.s32.totalorder %s19, 1
      %p205 = scmp.ne.s32.totalorder %s200, %s202
      %p206 = scmp.eq.s32.totalorder %s19, 0
      %p207 = por %p205, %p206
      %p208 = scmp.ne.s32.totalorder %s200, %s202
      %p209 = scmp.eq.s32.totalorder %s24, 1
      %p210 = por %p208, %p209
      %p211 = scmp.ne.s32.totalorder %s202, %s203
      %p212 = scmp.eq.s32.totalorder %s24, 0
      %p213 = por %p211, %p212
      %p214 = scmp.ne.s32.totalorder %s202, %s203
      %p215 = scmp.eq.s32.totalorder %s25, 1
      %p216 = por %p214, %p215
      %p218 = scmp.ne.s32.totalorder %s203, %s217
      %p219 = scmp.eq.s32.totalorder %s25, 0
      %p220 = por %p218, %p219
      %s222 = sadd.s32 %s221, 1
      %p225 = scmp.eq.s32.totalorder %s19, 1
      %p226 = scmp.ne.s32.totalorder %s221, %s223
      %p227 = scmp.eq.s32.totalorder %s19, 0
      %p228 = por %p226, %p227
      %p229 = scmp.ne.s32.totalorder %s221, %s223
      %p230 = scmp.eq.s32.totalorder %s24, 1
      %p231 = por %p229, %p230
      %p232 = scmp.ne.s32.totalorder %s223, %s224
      %p233 = scmp.eq.s32.totalorder %s24, 0
      %p234 = por %p232, %p233
      %p235 = scmp.ne.s32.totalorder %s223, %s224
      %p236 = scmp.eq.s32.totalorder %s25, 1
      %p237 = por %p235, %p236
      %p239 = scmp.ne.s32.totalorder %s224, %s238
      %p240 = scmp.eq.s32.totalorder %s25, 0
      %p241 = por %p239, %p240
      %s242 = ssub.s32 %s19, %s26
      %p243 = scmp.eq.s32.totalorder %s242, 0
      %s245 = sadd.s32 %s244, 1
      %s246 = scalar_select %p243, %s244, %s245
      %p249 = pneg %p243
      %p250 = scmp.eq.s32.totalorder %s19, 1
      %p251 = por %p249, %p250
      %p252 = scmp.ne.s32.totalorder %s244, %s247
      %p253 = scmp.eq.s32.totalorder %s19, 0
      %p254 = por %p252, %p253
      %p255 = scmp.ne.s32.totalorder %s244, %s247
      %p256 = scmp.eq.s32.totalorder %s24, 1
      %p257 = por %p255, %p256
      %p258 = scmp.ne.s32.totalorder %s247, %s248
      %p259 = scmp.eq.s32.totalorder %s24, 0
      %p260 = por %p258, %p259
      %p261 = scmp.ne.s32.totalorder %s247, %s248
      %p262 = scmp.eq.s32.totalorder %s25, 1
      %p263 = por %p261, %p262
      %p265 = scmp.ne.s32.totalorder %s248, %s264
      %p266 = scmp.eq.s32.totalorder %s25, 0
      %p267 = por %p265, %p266
      %p268 = scmp.le.s32.totalorder 1, %s19
      %p269 = scmp.lt.s32.totalorder %s19, 3
      %p270 = pnand %p268, %p269
      %p271 = pneg %p270
      // Predicated region
      $region9: #{tpu_custom_call.1} parent=5 // pred_check
        _
      $region10: #{tpu_custom_call.1} parent=5 // pred_check_branch
        %273 = sbr.rel (%p270) target = $region12
      $region11: #{tpu_custom_call.1} parent=5 // pred_region
        %s274 = ssub.s32 %s19, 1
        // Predicated region
        $region13: #{tpu_custom_call.1} parent=11 // pred_check
          %p275 = pneg %p66
        $region14: #{tpu_custom_call.1} parent=11 // pred_check_branch
          %277 = sbr.rel (%p275) target = $region16
        $region15: #{tpu_custom_call.1} parent=11 // pred_region
          _
        $region16: #{tpu_custom_call.1} parent=11 // pred_fallthru
          _
        // Predicated region
        $region17: #{tpu_custom_call.1} parent=11 // pred_check
          %p278 = pneg %p87
        $region18: #{tpu_custom_call.1} parent=11 // pred_check_branch
          %280 = sbr.rel (%p278) target = $region20
        $region19: #{tpu_custom_call.1} parent=11 // pred_region
          _
        $region20: #{tpu_custom_call.1} parent=11 // pred_fallthru
          _
        // Predicated region
        $region21: #{tpu_custom_call.1} parent=11 // pred_check
          %p281 = pneg %p108
        $region22: #{tpu_custom_call.1} parent=11 // pred_check_branch
          %283 = sbr.rel (%p281) target = $region24
        $region23: #{tpu_custom_call.1} parent=11 // pred_region
          _
        $region24: #{tpu_custom_call.1} parent=11 // pred_fallthru
          _
        // Predicated region
        $region25: #{tpu_custom_call.1} parent=11 // pred_check
          %p284 = pneg %p129
        $region26: #{tpu_custom_call.1} parent=11 // pred_check_branch
          %286 = sbr.rel (%p284) target = $region28
        $region27: #{tpu_custom_call.1} parent=11 // pred_region
          _
        $region28: #{tpu_custom_call.1} parent=11 // pred_fallthru
          _
        // Predicated region
        $region29: #{tpu_custom_call.1} parent=11 // pred_check
          %p287 = pneg %p150
        $region30: #{tpu_custom_call.1} parent=11 // pred_check_branch
          %289 = sbr.rel (%p287) target = $region32
        $region31: #{tpu_custom_call.1} parent=11 // pred_region
          _
        $region32: #{tpu_custom_call.1} parent=11 // pred_fallthru
          _
        // Predicated region
        $region33: #{tpu_custom_call.1} parent=11 // pred_check
          %p290 = pneg %p171
        $region34: #{tpu_custom_call.1} parent=11 // pred_check_branch
          %292 = sbr.rel (%p290) target = $region36
        $region35: #{tpu_custom_call.1} parent=11 // pred_region
          _
        $region36: #{tpu_custom_call.1} parent=11 // pred_fallthru
          _
        // Predicated region
        $region37: #{tpu_custom_call.1} parent=11 // pred_check
          %p293 = pneg %p192
        $region38: #{tpu_custom_call.1} parent=11 // pred_check_branch
          %295 = sbr.rel (%p293) target = $region40
        $region39: #{tpu_custom_call.1} parent=11 // pred_region
          _
        $region40: #{tpu_custom_call.1} parent=11 // pred_fallthru
          _
        // Predicated region
        $region41: #{tpu_custom_call.1} parent=11 // pred_check
          %p296 = pneg %p213
        $region42: #{tpu_custom_call.1} parent=11 // pred_check_branch
          %298 = sbr.rel (%p296) target = $region44
        $region43: #{tpu_custom_call.1} parent=11 // pred_region
          _
        $region44: #{tpu_custom_call.1} parent=11 // pred_fallthru
          _
        // Predicated region
        $region45: #{tpu_custom_call.1} parent=11 // pred_check
          %p299 = pneg %p234
        $region46: #{tpu_custom_call.1} parent=11 // pred_check_branch
          %301 = sbr.rel (%p299) target = $region48
        $region47: #{tpu_custom_call.1} parent=11 // pred_region
          _
        $region48: #{tpu_custom_call.1} parent=11 // pred_fallthru
          _
      $region12: #{tpu_custom_call.1} parent=5 // pred_fallthru
        _
      %p302 = scmp.lt.s32.totalorder %s19, 2
      // Predicated region
      $region49: #{tpu_custom_call.1} parent=5 // pred_check
        %p303 = pneg %p302
      $region50: #{tpu_custom_call.1} parent=5 // pred_check_branch
        %305 = sbr.rel (%p303) target = $region52
      $region51: #{tpu_custom_call.1} parent=5 // pred_region
        // Predicated region
        $region53: #{tpu_custom_call.1} parent=51 // pred_check
          %p306 = pneg %p39
        $region54: #{tpu_custom_call.1} parent=51 // pred_check_branch
          %308 = sbr.rel (%p306) target = $region56
        $region55: #{tpu_custom_call.1} parent=51 // pred_region
          %s309 = smul.u32 4, %s19
          %p310 = scmp.lt.s32.totalorder %s309, 7
          %s311 = scalar_select %p310, %s309, 7
          %s312 = smul.addr %s311, 18
          %s313 = smul.addr %s312, 4
          %s314 = scalar_lea.vmem %s0, %s313
          %s315 = smul.u32 4, %s19
        $region56: #{tpu_custom_call.1} parent=51 // pred_fallthru
          _
      $region52: #{tpu_custom_call.1} parent=5 // pred_fallthru
        _
      %p316 = scmp.le.s32.totalorder 1, %s19
      %p317 = scmp.lt.s32.totalorder %s19, 3
      %p318 = pnand %p316, %p317
      %p319 = pneg %p318
      // Predicated region
      $region57: #{tpu_custom_call.1} parent=5 // pred_check
        _
      $region58: #{tpu_custom_call.1} parent=5 // pred_check_branch
        %321 = sbr.rel (%p318) target = $region60
      $region59: #{tpu_custom_call.1} parent=5 // pred_region
        %s322 = ssub.s32 %s19, 1
        %s323 = smul.u32 4, %s24
        %p324 = scmp.lt.s32.totalorder %s323, 7
        %s325 = scalar_select %p324, %s323, 7
        %s326 = smul.addr %s325, 18
        %s327 = smul.addr %s326, 4
        %s328 = scalar_lea.vmem %s0, %s327
        %p329 = pneg %p45
        %p330 = pneg %p42
        %p331 = pneg %p66
        %p332 = pneg %p63
        %p333 = pneg %p87
        %p334 = pneg %p84
        %p335 = pneg %p108
        %p336 = pneg %p105
        %p337 = pneg %p129
        %p338 = pneg %p126
        %p339 = pneg %p150
        %p340 = pneg %p147
        %p341 = pneg %p171
        %p342 = pneg %p168
        %p343 = pneg %p192
        %p344 = pneg %p189
        %p345 = pneg %p213
        %p346 = pneg %p210
        %p347 = pneg %p234
        %p348 = pneg %p231
        %p349 = pneg %p260
        %p350 = pneg %p257
        %s351 = sand.u32 %s247, 1
        %s352 = scalar_lea.sflag [#allocation4], %s351
        %s353 = sand.u32 %s247, 1
        %s354 = smul.addr %s353, 64
        %s355 = scalar_lea.vmem [#allocation3], %s354
        %s356 = smul.u32 4, %s24
        %p357 = scmp.lt.s32.totalorder %s356, 7
        %s358 = scalar_select %p357, %s356, 7
        %s359 = smul.addr %s358, 18
        %s360 = smul.addr %s359, 4
        %s361 = scalar_lea.vmem %s0, %s360
        %s362 = smul.u32 4, %s24
        %v364 = vld [vmem:[%s361] sm:$0xf]
        %v365 = vld [vmem:[%s361 + $0x8] sm:$0xf]
        %v366 = vld [vmem:[%s361 + $0x10] sm:$0xf]
        %v367 = vld [vmem:[%s361 + $0x18] sm:$0xf]
        %v368 = vld [vmem:[%s361 + $0x20] sm:$0xf]
        %v369 = vld [vmem:[%s361 + $0x28] sm:$0xf]
        %v370 = vld [vmem:[%s361 + $0x30] sm:$0xf]
        %v371 = vld [vmem:[%s361 + $0x38] sm:$0xf]
        %v372 = vmax.bf16 %v364, 0
        %v373 = vmax.bf16 %v365, 0
        %v374 = vmax.bf16 %v366, 0
        %v375 = vmax.bf16 %v367, 0
        %v376 = vmax.bf16 %v368, 0
        %v377 = vmax.bf16 %v369, 0
        %v378 = vmax.bf16 %v370, 0
        %v379 = vmax.bf16 %v371, 0
        %v380 = vld [vmem:[%s1] sm:$0x3]
        %s381 = scalar_lea.vmem %s361, 72
        %v382 = vld [vmem:[%s381] sm:$0xf]
        %v383 = vld [vmem:[%s381 + $0x8] sm:$0xf]
        %v384 = vld [vmem:[%s381 + $0x10] sm:$0xf]
        %v385 = vld [vmem:[%s381 + $0x18] sm:$0xf]
        %v386 = vld [vmem:[%s381 + $0x20] sm:$0xf]
        %v387 = vld [vmem:[%s381 + $0x28] sm:$0xf]
        %v388 = vld [vmem:[%s381 + $0x30] sm:$0xf]
        %v389 = vld [vmem:[%s381 + $0x38] sm:$0xf]
        %v390 = vmax.bf16 %v382, 0
        %v391 = vmax.bf16 %v383, 0
        %v392 = vmax.bf16 %v384, 0
        %v393 = vmax.bf16 %v385, 0
        %v394 = vmax.bf16 %v386, 0
        %v395 = vmax.bf16 %v387, 0
        %v396 = vmax.bf16 %v388, 0
        %v397 = vmax.bf16 %v389, 0
        %s398 = scalar_lea.vmem %s1, 2
        %v399 = vld [vmem:[%s398] sm:$0x3]
        %v408 = vunpack.c.l.b16 %v390
        %v409 = vunpack.c.l.b16 %v391
        %v410 = vunpack.c.l.b16 %v392
        %v411 = vunpack.c.l.b16 %v393
        %v412 = vunpack.c.l.b16 %v394
        %v413 = vunpack.c.l.b16 %v395
        %v414 = vunpack.c.l.b16 %v396
        %v415 = vunpack.c.l.b16 %v397
        %v416 = vpack.c.b16 %v409, %v408
        %v417 = vpack.c.b16 %v411, %v410
        %v418 = vpack.c.b16 %v413, %v412
        %v419 = vpack.c.b16 %v415, %v414
        %vm420 = vcmask 31744
        %v422 = vsel %vm420, %v416, 0
        %v425 = vsel %vm420, %v417, 0
        %v428 = vsel %vm420, %v418, 0
        %v431 = vsel %vm420, %v419, 0
        %vm433 = vcmask 1041408
        %v435 = vsel %vm433, %v399, 0
        %437 = vmatprep.subr.bf16.mxu0 0
        %438 = vmatpush1.bf16.msra.mxu0 %v435
        %439 = vmatprep.subr.bf16.mxu0 0
        %440 = vmatpush1.bf16.msra.mxu0 0
        %441 = vmatprep.subr.bf16.mxu0 0
        %442 = vmatpush1.bf16.msra.mxu0 0
        %443 = vmatprep.subr.bf16.mxu0 0
        %444 = vmatpush1.bf16.msra.mxu0 0
        %445 = vmatprep.subr.bf16.mxu0 0
        %446 = vmatpush1.bf16.msra.mxu0 0
        %447 = vmatprep.subr.bf16.mxu0 0
        %448 = vmatpush1.bf16.msra.mxu0 0
        %449 = vmatprep.subr.bf16.mxu0 0
        %450 = vmatpush1.bf16.msra.mxu0 0
        %451 = vmatprep.subr.bf16.mxu0 0
        %452 = vmatpush1.bf16.msra.mxu0 0
        %453 = vmatprep.subr.bf16.mxu0 0
        %454 = vmatpush1.bf16.msra.mxu0 0
        %455 = vmatprep.subr.bf16.mxu0 0
        %456 = vmatpush1.bf16.msra.mxu0 0
        %457 = vmatprep.subr.bf16.mxu0 0
        %458 = vmatpush1.bf16.msra.mxu0 0
        %459 = vmatprep.subr.bf16.mxu0 0
        %460 = vmatpush1.bf16.msra.mxu0 0
        %461 = vmatprep.subr.bf16.mxu0 0
        %462 = vmatpush1.bf16.msra.mxu0 0
        %463 = vmatprep.subr.bf16.mxu0 0
        %464 = vmatpush1.bf16.msra.mxu0 0
        %465 = vmatprep.subr.bf16.mxu0 0
        %466 = vmatpush1.bf16.msra.mxu0 0
        %467 = vmatprep.subr.bf16.mxu0 0
        %468 = vmatpush1.bf16.msra.mxu0 0
        %469 = vmatprep.mubr.bf16.mxu0 0
        %470 = vmatmul.mubr.bf16.gmra.mrb[0].mxu0 %v422
        %v471 = vpop.f32.mrb[0].mxu0
        %v472 = vadd.f32 0.0, %v471
        %v473 = vpop.f32.mrb[0].mxu0
        %v474 = vpop.f32.mrb[0].mxu0
        %v475 = vadd.f32 0.0, %v474
        %v476 = vpop.f32.mrb[0].mxu0
        %477 = vmatprep.mubr.bf16.mxu0 0
        %478 = vmatmul.mubr.bf16.gmra.mrb[0].mxu0 %v425
        %v479 = vpop.f32.mrb[0].mxu0
        %v480 = vadd.f32 0.0, %v479
        %v481 = vpop.f32.mrb[0].mxu0
        %v482 = vpop.f32.mrb[0].mxu0
        %v483 = vadd.f32 0.0, %v482
        %v484 = vpop.f32.mrb[0].mxu0
        %485 = vmatprep.mubr.bf16.mxu0 0
        %486 = vmatmul.mubr.bf16.gmra.mrb[0].mxu0 %v428
        %v487 = vpop.f32.mrb[0].mxu0
        %v488 = vadd.f32 0.0, %v487
        %v489 = vpop.f32.mrb[0].mxu0
        %v490 = vpop.f32.mrb[0].mxu0
        %v491 = vadd.f32 0.0, %v490
        %v492 = vpop.f32.mrb[0].mxu0
        %493 = vmatprep.mubr.bf16.mxu0 0
        %494 = vmatmul.mubr.bf16.gmra.mrb[0].mxu0 %v431
        %v495 = vpop.f32.mrb[0].mxu0
        %v496 = vadd.f32 0.0, %v495
        %v497 = vpop.f32.mrb[0].mxu0
        %v498 = vpop.f32.mrb[0].mxu0
        %v499 = vadd.f32 0.0, %v498
        %v500 = vpop.f32.mrb[0].mxu0
        %501 = vdwg.mxu0
        %v510 = vunpack.c.l.b16 %v372
        %v511 = vunpack.c.l.b16 %v373
        %v512 = vunpack.c.l.b16 %v374
        %v513 = vunpack.c.l.b16 %v375
        %v514 = vunpack.c.l.b16 %v376
        %v515 = vunpack.c.l.b16 %v377
        %v516 = vunpack.c.l.b16 %v378
        %v517 = vunpack.c.l.b16 %v379
        %v518 = vpack.c.b16 %v511, %v510
        %v519 = vpack.c.b16 %v513, %v512
        %v520 = vpack.c.b16 %v515, %v514
        %v521 = vpack.c.b16 %v517, %v516
        %v523 = vsel %vm420, %v518, 0
        %v526 = vsel %vm420, %v519, 0
        %v529 = vsel %vm420, %v520, 0
        %v532 = vsel %vm420, %v521, 0
        %v535 = vsel %vm433, %v380, 0
        %537 = vmatprep.subr.bf16.mxu0 0
        %538 = vmatpush1.bf16.msra.mxu0 %v535
        %539 = vmatprep.subr.bf16.mxu0 0
        %540 = vmatpush1.bf16.msra.mxu0 0
        %541 = vmatprep.subr.bf16.mxu0 0
        %542 = vmatpush1.bf16.msra.mxu0 0
        %543 = vmatprep.subr.bf16.mxu0 0
        %544 = vmatpush1.bf16.msra.mxu0 0
        %545 = vmatprep.subr.bf16.mxu0 0
        %546 = vmatpush1.bf16.msra.mxu0 0
        %547 = vmatprep.subr.bf16.mxu0 0
        %548 = vmatpush1.bf16.msra.mxu0 0
        %549 = vmatprep.subr.bf16.mxu0 0
        %550 = vmatpush1.bf16.msra.mxu0 0
        %551 = vmatprep.subr.bf16.mxu0 0
        %552 = vmatpush1.bf16.msra.mxu0 0
        %553 = vmatprep.subr.bf16.mxu0 0
        %554 = vmatpush1.bf16.msra.mxu0 0
        %555 = vmatprep.subr.bf16.mxu0 0
        %556 = vmatpush1.bf16.msra.mxu0 0
        %557 = vmatprep.subr.bf16.mxu0 0
        %558 = vmatpush1.bf16.msra.mxu0 0
        %559 = vmatprep.subr.bf16.mxu0 0
        %560 = vmatpush1.bf16.msra.mxu0 0
        %561 = vmatprep.subr.bf16.mxu0 0
        %562 = vmatpush1.bf16.msra.mxu0 0
        %563 = vmatprep.subr.bf16.mxu0 0
        %564 = vmatpush1.bf16.msra.mxu0 0
        %565 = vmatprep.subr.bf16.mxu0 0
        %566 = vmatpush1.bf16.msra.mxu0 0
        %567 = vmatprep.subr.bf16.mxu0 0
        %568 = vmatpush1.bf16.msra.mxu0 0
        %569 = vmatprep.mubr.bf16.mxu0 0
        %570 = vmatmul.mubr.bf16.gmra.mrb[0].mxu0 %v523
        %v571 = vpop.f32.mrb[0].mxu0
        %v572 = vadd.f32 %v472, %v571
        %v573 = vpop.f32.mrb[0].mxu0
        %v574 = vpop.f32.mrb[0].mxu0
        %v575 = vadd.f32 %v475, %v574
        %v576 = vpop.f32.mrb[0].mxu0
        %577 = vmatprep.mubr.bf16.mxu0 0
        %578 = vmatmul.mubr.bf16.gmra.mrb[0].mxu0 %v526
        %v579 = vpop.f32.mrb[0].mxu0
        %v580 = vadd.f32 %v480, %v579
        %v581 = vpop.f32.mrb[0].mxu0
        %v582 = vpop.f32.mrb[0].mxu0
        %v583 = vadd.f32 %v483, %v582
        %v584 = vpop.f32.mrb[0].mxu0
        %585 = vmatprep.mubr.bf16.mxu0 0
        %586 = vmatmul.mubr.bf16.gmra.mrb[0].mxu0 %v529
        %v587 = vpop.f32.mrb[0].mxu0
        %v588 = vadd.f32 %v488, %v587
        %v589 = vpop.f32.mrb[0].mxu0
        %v590 = vpop.f32.mrb[0].mxu0
        %v591 = vadd.f32 %v491, %v590
        %v592 = vpop.f32.mrb[0].mxu0
        %593 = vmatprep.mubr.bf16.mxu0 0
        %594 = vmatmul.mubr.bf16.gmra.mrb[0].mxu0 %v532
        %v595 = vpop.f32.mrb[0].mxu0
        %v596 = vadd.f32 %v496, %v595
        %v597 = vpop.f32.mrb[0].mxu0
        %v598 = vpop.f32.mrb[0].mxu0
        %v599 = vadd.f32 %v499, %v598
        %v600 = vpop.f32.mrb[0].mxu0
        %601 = vdwg.mxu0
        %v602 = vld [vmem:[%s361] sm:$0xf]
        %v603 = vld [vmem:[%s361 + $0x4] sm:$0x1]
        %v604 = vld [vmem:[%s361 + $0x8] sm:$0xf]
        %v605 = vld [vmem:[%s361 + $0xc] sm:$0x1]
        %v606 = vld [vmem:[%s361 + $0x10] sm:$0xf]
        %v607 = vld [vmem:[%s361 + $0x14] sm:$0x1]
        %v608 = vld [vmem:[%s361 + $0x18] sm:$0xf]
        %v609 = vld [vmem:[%s361 + $0x1c] sm:$0x1]
        %v610 = vld [vmem:[%s361 + $0x20] sm:$0xf]
        %v611 = vld [vmem:[%s361 + $0x24] sm:$0x1]
        %v612 = vld [vmem:[%s361 + $0x28] sm:$0xf]
        %v613 = vld [vmem:[%s361 + $0x2c] sm:$0x1]
        %v614 = vld [vmem:[%s361 + $0x30] sm:$0xf]
        %v615 = vld [vmem:[%s361 + $0x34] sm:$0x1]
        %v616 = vld [vmem:[%s361 + $0x38] sm:$0xf]
        %v617 = vld [vmem:[%s361 + $0x3c] sm:$0x1]
        %v618 = vmax.bf16 %v602, 0
        %v619 = vmax.bf16 %v603, 0
        %v620 = vmax.bf16 %v604, 0
        %v621 = vmax.bf16 %v605, 0
        %v622 = vmax.bf16 %v606, 0
        %v623 = vmax.bf16 %v607, 0
        %v624 = vmax.bf16 %v608, 0
        %v625 = vmax.bf16 %v609, 0
        %v626 = vmax.bf16 %v610, 0
        %v627 = vmax.bf16 %v611, 0
        %v628 = vmax.bf16 %v612, 0
        %v629 = vmax.bf16 %v613, 0
        %v630 = vmax.bf16 %v614, 0
        %v631 = vmax.bf16 %v615, 0
        %v632 = vmax.bf16 %v616, 0
        %v633 = vmax.bf16 %v617, 0
        %vm634 = vsmask.f32 3328
        %vm635 = vsmask.f32 7440
        %vm636 = vmor %vm634, %vm635
        %v638 = vshrl.u32 %v618, 16
        %v640 = vrot.slane %v638, 4
        %v641 = vshll.u32 %v618, 16
        %v643 = vrot.slane %v641, 5
        %v644 = vor.u32 %v640, %v643
        %v645 = vrot.slane %v644, 4
        %v647 = vshll.u32 %v619, 16
        %v649 = vrot.slane %v647, 5
        %v650 = vsel %vm636, %v645, %v649
        %v652 = vshrl.u32 %v620, 16
        %v654 = vrot.slane %v652, 4
        %v655 = vshll.u32 %v620, 16
        %v657 = vrot.slane %v655, 5
        %v658 = vor.u32 %v654, %v657
        %v659 = vrot.slane %v658, 4
        %v661 = vshll.u32 %v621, 16
        %v663 = vrot.slane %v661, 5
        %v664 = vsel %vm636, %v659, %v663
        %v666 = vshrl.u32 %v622, 16
        %v668 = vrot.slane %v666, 4
        %v669 = vshll.u32 %v622, 16
        %v671 = vrot.slane %v669, 5
        %v672 = vor.u32 %v668, %v671
        %v673 = vrot.slane %v672, 4
        %v675 = vshll.u32 %v623, 16
        %v677 = vrot.slane %v675, 5
        %v678 = vsel %vm636, %v673, %v677
        %v680 = vshrl.u32 %v624, 16
        %v682 = vrot.slane %v680, 4
        %v683 = vshll.u32 %v624, 16
        %v685 = vrot.slane %v683, 5
        %v686 = vor.u32 %v682, %v685
        %v687 = vrot.slane %v686, 4
        %v689 = vshll.u32 %v625, 16
        %v691 = vrot.slane %v689, 5
        %v692 = vsel %vm636, %v687, %v691
        %v694 = vshrl.u32 %v626, 16
        %v696 = vrot.slane %v694, 4
        %v697 = vshll.u32 %v626, 16
        %v699 = vrot.slane %v697, 5
        %v700 = vor.u32 %v696, %v699
        %v701 = vrot.slane %v700, 4
        %v703 = vshll.u32 %v627, 16
        %v705 = vrot.slane %v703, 5
        %v706 = vsel %vm636, %v701, %v705
        %v708 = vshrl.u32 %v628, 16
        %v710 = vrot.slane %v708, 4
        %v711 = vshll.u32 %v628, 16
        %v713 = vrot.slane %v711, 5
        %v714 = vor.u32 %v710, %v713
        %v715 = vrot.slane %v714, 4
        %v717 = vshll.u32 %v629, 16
        %v719 = vrot.slane %v717, 5
        %v720 = vsel %vm636, %v715, %v719
        %v722 = vshrl.u32 %v630, 16
        %v724 = vrot.slane %v722, 4
        %v725 = vshll.u32 %v630, 16
        %v727 = vrot.slane %v725, 5
        %v728 = vor.u32 %v724, %v727
        %v729 = vrot.slane %v728, 4
        %v731 = vshll.u32 %v631, 16
        %v733 = vrot.slane %v731, 5
        %v734 = vsel %vm636, %v729, %v733
        %v736 = vshrl.u32 %v632, 16
        %v738 = vrot.slane %v736, 4
        %v739 = vshll.u32 %v632, 16
        %v741 = vrot.slane %v739, 5
        %v742 = vor.u32 %v738, %v741
        %v743 = vrot.slane %v742, 4
        %v745 = vshll.u32 %v633, 16
        %v747 = vrot.slane %v745, 5
        %v748 = vsel %vm636, %v743, %v747
        %s749 = scalar_lea.vmem %s1, 4
        %v750 = vld [vmem:[%s749] sm:$0x3]
        %v751 = vunpack.c.l.b16 %v650
        %v752 = vunpack.c.l.b16 %v664
        %v753 = vunpack.c.l.b16 %v678
        %v754 = vunpack.c.l.b16 %v692
        %v755 = vunpack.c.l.b16 %v706
        %v756 = vunpack.c.l.b16 %v720
        %v757 = vunpack.c.l.b16 %v734
        %v758 = vunpack.c.l.b16 %v748
        %v759 = vpack.c.b16 %v752, %v751
        %v760 = vpack.c.b16 %v754, %v753
        %v761 = vpack.c.b16 %v756, %v755
        %v762 = vpack.c.b16 %v758, %v757
        %v764 = vsel %vm420, %v759, 0
        %v767 = vsel %vm420, %v760, 0
        %v770 = vsel %vm420, %v761, 0
        %v773 = vsel %vm420, %v762, 0
        %v776 = vsel %vm433, %v750, 0
        %778 = vmatprep.subr.bf16.mxu0 0
        %779 = vmatpush1.bf16.msra.mxu0 %v776
        %780 = vmatprep.subr.bf16.mxu0 0
        %781 = vmatpush1.bf16.msra.mxu0 0
        %782 = vmatprep.subr.bf16.mxu0 0
        %783 = vmatpush1.bf16.msra.mxu0 0
        %784 = vmatprep.subr.bf16.mxu0 0
        %785 = vmatpush1.bf16.msra.mxu0 0
        %786 = vmatprep.subr.bf16.mxu0 0
        %787 = vmatpush1.bf16.msra.mxu0 0
        %788 = vmatprep.subr.bf16.mxu0 0
        %789 = vmatpush1.bf16.msra.mxu0 0
        %790 = vmatprep.subr.bf16.mxu0 0
        %791 = vmatpush1.bf16.msra.mxu0 0
        %792 = vmatprep.subr.bf16.mxu0 0
        %793 = vmatpush1.bf16.msra.mxu0 0
        %794 = vmatprep.subr.bf16.mxu0 0
        %795 = vmatpush1.bf16.msra.mxu0 0
        %796 = vmatprep.subr.bf16.mxu0 0
        %797 = vmatpush1.bf16.msra.mxu0 0
        %798 = vmatprep.subr.bf16.mxu0 0
        %799 = vmatpush1.bf16.msra.mxu0 0
        %800 = vmatprep.subr.bf16.mxu0 0
        %801 = vmatpush1.bf16.msra.mxu0 0
        %802 = vmatprep.subr.bf16.mxu0 0
        %803 = vmatpush1.bf16.msra.mxu0 0
        %804 = vmatprep.subr.bf16.mxu0 0
        %805 = vmatpush1.bf16.msra.mxu0 0
        %806 = vmatprep.subr.bf16.mxu0 0
        %807 = vmatpush1.bf16.msra.mxu0 0
        %808 = vmatprep.subr.bf16.mxu0 0
        %809 = vmatpush1.bf16.msra.mxu0 0
        %810 = vmatprep.mubr.bf16.mxu0 0
        %811 = vmatmul.mubr.bf16.gmra.mrb[0].mxu0 %v764
        %v812 = vpop.f32.mrb[0].mxu0
        %v813 = vadd.f32 0.0, %v812
        %v814 = vpop.f32.mrb[0].mxu0
        %v815 = vpop.f32.mrb[0].mxu0
        %v816 = vadd.f32 0.0, %v815
        %v817 = vpop.f32.mrb[0].mxu0
        %818 = vmatprep.mubr.bf16.mxu0 0
        %819 = vmatmul.mubr.bf16.gmra.mrb[0].mxu0 %v767
        %v820 = vpop.f32.mrb[0].mxu0
        %v821 = vadd.f32 0.0, %v820
        %v822 = vpop.f32.mrb[0].mxu0
        %v823 = vpop.f32.mrb[0].mxu0
        %v824 = vadd.f32 0.0, %v823
        %v825 = vpop.f32.mrb[0].mxu0
        %826 = vmatprep.mubr.bf16.mxu0 0
        %827 = vmatmul.mubr.bf16.gmra.mrb[0].mxu0 %v770
        %v828 = vpop.f32.mrb[0].mxu0
        %v829 = vadd.f32 0.0, %v828
        %v830 = vpop.f32.mrb[0].mxu0
        %v831 = vpop.f32.mrb[0].mxu0
        %v832 = vadd.f32 0.0, %v831
        %v833 = vpop.f32.mrb[0].mxu0
        %834 = vmatprep.mubr.bf16.mxu0 0
        %835 = vmatmul.mubr.bf16.gmra.mrb[0].mxu0 %v773
        %v836 = vpop.f32.mrb[0].mxu0
        %v837 = vadd.f32 0.0, %v836
        %v838 = vpop.f32.mrb[0].mxu0
        %v839 = vpop.f32.mrb[0].mxu0
        %v840 = vadd.f32 0.0, %v839
        %v841 = vpop.f32.mrb[0].mxu0
        %842 = vdwg.mxu0
        %v843 = vadd.f32 %v572, %v813
        %v844 = vadd.f32 %v575, %v816
        %v845 = vadd.f32 %v580, %v821
        %v846 = vadd.f32 %v583, %v824
        %v847 = vadd.f32 %v588, %v829
        %v848 = vadd.f32 %v591, %v832
        %v849 = vadd.f32 %v596, %v837
        %v850 = vadd.f32 %v599, %v840
        %s851 = scalar_lea.vmem %s361, 144
        %v852 = vld [vmem:[%s851] sm:$0xf]
        %v853 = vld [vmem:[%s851 + $0x8] sm:$0xf]
        %v854 = vld [vmem:[%s851 + $0x10] sm:$0xf]
        %v855 = vld [vmem:[%s851 + $0x18] sm:$0xf]
        %v856 = vld [vmem:[%s851 + $0x20] sm:$0xf]
        %v857 = vld [vmem:[%s851 + $0x28] sm:$0xf]
        %v858 = vld [vmem:[%s851 + $0x30] sm:$0xf]
        %v859 = vld [vmem:[%s851 + $0x38] sm:$0xf]
        %v860 = vmax.bf16 %v852, 0
        %v861 = vmax.bf16 %v853, 0
        %v862 = vmax.bf16 %v854, 0
        %v863 = vmax.bf16 %v855, 0
        %v864 = vmax.bf16 %v856, 0
        %v865 = vmax.bf16 %v857, 0
        %v866 = vmax.bf16 %v858, 0
        %v867 = vmax.bf16 %v859, 0
        %s868 = scalar_lea.vmem %s1, 6
        %v869 = vld [vmem:[%s868] sm:$0x3]
        %v878 = vunpack.c.l.b16 %v860
        %v879 = vunpack.c.l.b16 %v861
        %v880 = vunpack.c.l.b16 %v862
        %v881 = vunpack.c.l.b16 %v863
        %v882 = vunpack.c.l.b16 %v864
        %v883 = vunpack.c.l.b16 %v865
        %v884 = vunpack.c.l.b16 %v866
        %v885 = vunpack.c.l.b16 %v867
        %v886 = vpack.c.b16 %v879, %v878
        %v887 = vpack.c.b16 %v881, %v880
        %v888 = vpack.c.b16 %v883, %v882
        %v889 = vpack.c.b16 %v885, %v884
        %v891 = vsel %vm420, %v886, 0
        %v894 = vsel %vm420, %v887, 0
        %v897 = vsel %vm420, %v888, 0
        %v900 = vsel %vm420, %v889, 0
        %v903 = vsel %vm433, %v869, 0
        %905 = vmatprep.subr.bf16.mxu0 0
        %906 = vmatpush1.bf16.msra.mxu0 %v903
        %907 = vmatprep.subr.bf16.mxu0 0
        %908 = vmatpush1.bf16.msra.mxu0 0
        %909 = vmatprep.subr.bf16.mxu0 0
        %910 = vmatpush1.bf16.msra.mxu0 0
        %911 = vmatprep.subr.bf16.mxu0 0
        %912 = vmatpush1.bf16.msra.mxu0 0
        %913 = vmatprep.subr.bf16.mxu0 0
        %914 = vmatpush1.bf16.msra.mxu0 0
        %915 = vmatprep.subr.bf16.mxu0 0
        %916 = vmatpush1.bf16.msra.mxu0 0
        %917 = vmatprep.subr.bf16.mxu0 0
        %918 = vmatpush1.bf16.msra.mxu0 0
        %919 = vmatprep.subr.bf16.mxu0 0
        %920 = vmatpush1.bf16.msra.mxu0 0
        %921 = vmatprep.subr.bf16.mxu0 0
        %922 = vmatpush1.bf16.msra.mxu0 0
        %923 = vmatprep.subr.bf16.mxu0 0
        %924 = vmatpush1.bf16.msra.mxu0 0
        %925 = vmatprep.subr.bf16.mxu0 0
        %926 = vmatpush1.bf16.msra.mxu0 0
        %927 = vmatprep.subr.bf16.mxu0 0
        %928 = vmatpush1.bf16.msra.mxu0 0
        %929 = vmatprep.subr.bf16.mxu0 0
        %930 = vmatpush1.bf16.msra.mxu0 0
        %931 = vmatprep.subr.bf16.mxu0 0
        %932 = vmatpush1.bf16.msra.mxu0 0
        %933 = vmatprep.subr.bf16.mxu0 0
        %934 = vmatpush1.bf16.msra.mxu0 0
        %935 = vmatprep.subr.bf16.mxu0 0
        %936 = vmatpush1.bf16.msra.mxu0 0
        %937 = vmatprep.mubr.bf16.mxu0 0
        %938 = vmatmul.mubr.bf16.gmra.mrb[0].mxu0 %v891
        %v939 = vpop.f32.mrb[0].mxu0
        %v940 = vadd.f32 0.0, %v939
        %v941 = vpop.f32.mrb[0].mxu0
        %v942 = vpop.f32.mrb[0].mxu0
        %v943 = vadd.f32 0.0, %v942
        %v944 = vpop.f32.mrb[0].mxu0
        %945 = vmatprep.mubr.bf16.mxu0 0
        %946 = vmatmul.mubr.bf16.gmra.mrb[0].mxu0 %v894
        %v947 = vpop.f32.mrb[0].mxu0
        %v948 = vadd.f32 0.0, %v947
        %v949 = vpop.f32.mrb[0].mxu0
        %v950 = vpop.f32.mrb[0].mxu0
        %v951 = vadd.f32 0.0, %v950
        %v952 = vpop.f32.mrb[0].mxu0
        %953 = vmatprep.mubr.bf16.mxu0 0
        %954 = vmatmul.mubr.bf16.gmra.mrb[0].mxu0 %v897
        %v955 = vpop.f32.mrb[0].mxu0
        %v956 = vadd.f32 0.0, %v955
        %v957 = vpop.f32.mrb[0].mxu0
        %v958 = vpop.f32.mrb[0].mxu0
        %v959 = vadd.f32 0.0, %v958
        %v960 = vpop.f32.mrb[0].mxu0
        %961 = vmatprep.mubr.bf16.mxu0 0
        %962 = vmatmul.mubr.bf16.gmra.mrb[0].mxu0 %v900
        %v963 = vpop.f32.mrb[0].mxu0
        %v964 = vadd.f32 0.0, %v963
        %v965 = vpop.f32.mrb[0].mxu0
        %v966 = vpop.f32.mrb[0].mxu0
        %v967 = vadd.f32 0.0, %v966
        %v968 = vpop.f32.mrb[0].mxu0
        %969 = vdwg.mxu0
        %v970 = vadd.f32 %v843, %v940
        %v971 = vadd.f32 %v844, %v943
        %v972 = vadd.f32 %v845, %v948
        %v973 = vadd.f32 %v846, %v951
        %v974 = vadd.f32 %v847, %v956
        %v975 = vadd.f32 %v848, %v959
        %v976 = vadd.f32 %v849, %v964
        %v977 = vadd.f32 %v850, %v967
        %s978 = scalar_lea.vmem %s361, 216
        %v979 = vld [vmem:[%s978] sm:$0xf]
        %v980 = vld [vmem:[%s978 + $0x8] sm:$0xf]
        %v981 = vld [vmem:[%s978 + $0x10] sm:$0xf]
        %v982 = vld [vmem:[%s978 + $0x18] sm:$0xf]
        %v983 = vld [vmem:[%s978 + $0x20] sm:$0xf]
        %v984 = vld [vmem:[%s978 + $0x28] sm:$0xf]
        %v985 = vld [vmem:[%s978 + $0x30] sm:$0xf]
        %v986 = vld [vmem:[%s978 + $0x38] sm:$0xf]
        %v987 = vmax.bf16 %v979, 0
        %v988 = vmax.bf16 %v980, 0
        %v989 = vmax.bf16 %v981, 0
        %v990 = vmax.bf16 %v982, 0
        %v991 = vmax.bf16 %v983, 0
        %v992 = vmax.bf16 %v984, 0
        %v993 = vmax.bf16 %v985, 0
        %v994 = vmax.bf16 %v986, 0
        %s995 = scalar_lea.vmem %s1, 8
        %v996 = vld [vmem:[%s995] sm:$0x3]
        %v1005 = vunpack.c.l.b16 %v987
        %v1006 = vunpack.c.l.b16 %v988
        %v1007 = vunpack.c.l.b16 %v989
        %v1008 = vunpack.c.l.b16 %v990
        %v1009 = vunpack.c.l.b16 %v991
        %v1010 = vunpack.c.l.b16 %v992
        %v1011 = vunpack.c.l.b16 %v993
        %v1012 = vunpack.c.l.b16 %v994
        %v1013 = vpack.c.b16 %v1006, %v1005
        %v1014 = vpack.c.b16 %v1008, %v1007
        %v1015 = vpack.c.b16 %v1010, %v1009
        %v1016 = vpack.c.b16 %v1012, %v1011
        %v1018 = vsel %vm420, %v1013, 0
        %v1021 = vsel %vm420, %v1014, 0
        %v1024 = vsel %vm420, %v1015, 0
        %v1027 = vsel %vm420, %v1016, 0
        %v1030 = vsel %vm433, %v996, 0
        %1032 = vmatprep.subr.bf16.mxu0 0
        %1033 = vmatpush1.bf16.msra.mxu0 %v1030
        %1034 = vmatprep.subr.bf16.mxu0 0
        %1035 = vmatpush1.bf16.msra.mxu0 0
        %1036 = vmatprep.subr.bf16.mxu0 0
        %1037 = vmatpush1.bf16.msra.mxu0 0
        %1038 = vmatprep.subr.bf16.mxu0 0
        %1039 = vmatpush1.bf16.msra.mxu0 0
        %1040 = vmatprep.subr.bf16.mxu0 0
        %1041 = vmatpush1.bf16.msra.mxu0 0
        %1042 = vmatprep.subr.bf16.mxu0 0
        %1043 = vmatpush1.bf16.msra.mxu0 0
        %1044 = vmatprep.subr.bf16.mxu0 0
        %1045 = vmatpush1.bf16.msra.mxu0 0
        %1046 = vmatprep.subr.bf16.mxu0 0
        %1047 = vmatpush1.bf16.msra.mxu0 0
        %1048 = vmatprep.subr.bf16.mxu0 0
        %1049 = vmatpush1.bf16.msra.mxu0 0
        %1050 = vmatprep.subr.bf16.mxu0 0
        %1051 = vmatpush1.bf16.msra.mxu0 0
        %1052 = vmatprep.subr.bf16.mxu0 0
        %1053 = vmatpush1.bf16.msra.mxu0 0
        %1054 = vmatprep.subr.bf16.mxu0 0
        %1055 = vmatpush1.bf16.msra.mxu0 0
        %1056 = vmatprep.subr.bf16.mxu0 0
        %1057 = vmatpush1.bf16.msra.mxu0 0
        %1058 = vmatprep.subr.bf16.mxu0 0
        %1059 = vmatpush1.bf16.msra.mxu0 0
        %1060 = vmatprep.subr.bf16.mxu0 0
        %1061 = vmatpush1.bf16.msra.mxu0 0
        %1062 = vmatprep.subr.bf16.mxu0 0
        %1063 = vmatpush1.bf16.msra.mxu0 0
        %1064 = vmatprep.mubr.bf16.mxu0 0
        %1065 = vmatmul.mubr.bf16.gmra.mrb[0].mxu0 %v1018
        %v1066 = vpop.f32.mrb[0].mxu0
        %v1067 = vadd.f32 0.0, %v1066
        %v1068 = vpop.f32.mrb[0].mxu0
        %v1069 = vpop.f32.mrb[0].mxu0
        %v1070 = vadd.f32 0.0, %v1069
        %v1071 = vpop.f32.mrb[0].mxu0
        %1072 = vmatprep.mubr.bf16.mxu0 0
        %1073 = vmatmul.mubr.bf16.gmra.mrb[0].mxu0 %v1021
        %v1074 = vpop.f32.mrb[0].mxu0
        %v1075 = vadd.f32 0.0, %v1074
        %v1076 = vpop.f32.mrb[0].mxu0
        %v1077 = vpop.f32.mrb[0].mxu0
        %v1078 = vadd.f32 0.0, %v1077
        %v1079 = vpop.f32.mrb[0].mxu0
        %1080 = vmatprep.mubr.bf16.mxu0 0
        %1081 = vmatmul.mubr.bf16.gmra.mrb[0].mxu0 %v1024
        %v1082 = vpop.f32.mrb[0].mxu0
        %v1083 = vadd.f32 0.0, %v1082
        %v1084 = vpop.f32.mrb[0].mxu0
        %v1085 = vpop.f32.mrb[0].mxu0
        %v1086 = vadd.f32 0.0, %v1085
        %v1087 = vpop.f32.mrb[0].mxu0
        %1088 = vmatprep.mubr.bf16.mxu0 0
        %1089 = vmatmul.mubr.bf16.gmra.mrb[0].mxu0 %v1027
        %v1090 = vpop.f32.mrb[0].mxu0
        %v1091 = vadd.f32 0.0, %v1090
        %v1092 = vpop.f32.mrb[0].mxu0
        %v1093 = vpop.f32.mrb[0].mxu0
        %v1094 = vadd.f32 0.0, %v1093
        %v1095 = vpop.f32.mrb[0].mxu0
        %1096 = vdwg.mxu0
        %v1097 = vadd.f32 %v970, %v1067
        %v1098 = vadd.f32 %v971, %v1070
        %v1099 = vadd.f32 %v972, %v1075
        %v1100 = vadd.f32 %v973, %v1078
        %v1101 = vadd.f32 %v974, %v1083
        %v1102 = vadd.f32 %v975, %v1086
        %v1103 = vadd.f32 %v976, %v1091
        %v1104 = vadd.f32 %v977, %v1094
        %v1105 = vld [vmem:[%s851] sm:$0xf]
        %v1106 = vld [vmem:[%s851 + $0x4] sm:$0x1]
        %v1107 = vld [vmem:[%s851 + $0x8] sm:$0xf]
        %v1108 = vld [vmem:[%s851 + $0xc] sm:$0x1]
        %v1109 = vld [vmem:[%s851 + $0x10] sm:$0xf]
        %v1110 = vld [vmem:[%s851 + $0x14] sm:$0x1]
        %v1111 = vld [vmem:[%s851 + $0x18] sm:$0xf]
        %v1112 = vld [vmem:[%s851 + $0x1c] sm:$0x1]
        %v1113 = vld [vmem:[%s851 + $0x20] sm:$0xf]
        %v1114 = vld [vmem:[%s851 + $0x24] sm:$0x1]
        %v1115 = vld [vmem:[%s851 + $0x28] sm:$0xf]
        %v1116 = vld [vmem:[%s851 + $0x2c] sm:$0x1]
        %v1117 = vld [vmem:[%s851 + $0x30] sm:$0xf]
        %v1118 = vld [vmem:[%s851 + $0x34] sm:$0x1]
        %v1119 = vld [vmem:[%s851 + $0x38] sm:$0xf]
        %v1120 = vld [vmem:[%s851 + $0x3c] sm:$0x1]
        %v1121 = vmax.bf16 %v1105, 0
        %v1122 = vmax.bf16 %v1106, 0
        %v1123 = vmax.bf16 %v1107, 0
        %v1124 = vmax.bf16 %v1108, 0
        %v1125 = vmax.bf16 %v1109, 0
        %v1126 = vmax.bf16 %v1110, 0
        %v1127 = vmax.bf16 %v1111, 0
        %v1128 = vmax.bf16 %v1112, 0
        %v1129 = vmax.bf16 %v1113, 0
        %v1130 = vmax.bf16 %v1114, 0
        %v1131 = vmax.bf16 %v1115, 0
        %v1132 = vmax.bf16 %v1116, 0
        %v1133 = vmax.bf16 %v1117, 0
        %v1134 = vmax.bf16 %v1118, 0
        %v1135 = vmax.bf16 %v1119, 0
        %v1136 = vmax.bf16 %v1120, 0
        %v1138 = vshrl.u32 %v1121, 16
        %v1140 = vrot.slane %v1138, 4
        %v1141 = vshll.u32 %v1121, 16
        %v1143 = vrot.slane %v1141, 5
        %v1144 = vor.u32 %v1140, %v1143
        %v1145 = vrot.slane %v1144, 4
        %v1147 = vshll.u32 %v1122, 16
        %v1149 = vrot.slane %v1147, 5
        %v1150 = vsel %vm636, %v1145, %v1149
        %v1152 = vshrl.u32 %v1123, 16
        %v1154 = vrot.slane %v1152, 4
        %v1155 = vshll.u32 %v1123, 16
        %v1157 = vrot.slane %v1155, 5
        %v1158 = vor.u32 %v1154, %v1157
        %v1159 = vrot.slane %v1158, 4
        %v1161 = vshll.u32 %v1124, 16
        %v1163 = vrot.slane %v1161, 5
        %v1164 = vsel %vm636, %v1159, %v1163
        %v1166 = vshrl.u32 %v1125, 16
        %v1168 = vrot.slane %v1166, 4
        %v1169 = vshll.u32 %v1125, 16
        %v1171 = vrot.slane %v1169, 5
        %v1172 = vor.u32 %v1168, %v1171
        %v1173 = vrot.slane %v1172, 4
        %v1175 = vshll.u32 %v1126, 16
        %v1177 = vrot.slane %v1175, 5
        %v1178 = vsel %vm636, %v1173, %v1177
        %v1180 = vshrl.u32 %v1127, 16
        %v1182 = vrot.slane %v1180, 4
        %v1183 = vshll.u32 %v1127, 16
        %v1185 = vrot.slane %v1183, 5
        %v1186 = vor.u32 %v1182, %v1185
        %v1187 = vrot.slane %v1186, 4
        %v1189 = vshll.u32 %v1128, 16
        %v1191 = vrot.slane %v1189, 5
        %v1192 = vsel %vm636, %v1187, %v1191
        %v1194 = vshrl.u32 %v1129, 16
        %v1196 = vrot.slane %v1194, 4
        %v1197 = vshll.u32 %v1129, 16
        %v1199 = vrot.slane %v1197, 5
        %v1200 = vor.u32 %v1196, %v1199
        %v1201 = vrot.slane %v1200, 4
        %v1203 = vshll.u32 %v1130, 16
        %v1205 = vrot.slane %v1203, 5
        %v1206 = vsel %vm636, %v1201, %v1205
        %v1208 = vshrl.u32 %v1131, 16
        %v1210 = vrot.slane %v1208, 4
        %v1211 = vshll.u32 %v1131, 16
        %v1213 = vrot.slane %v1211, 5
        %v1214 = vor.u32 %v1210, %v1213
        %v1215 = vrot.slane %v1214, 4
        %v1217 = vshll.u32 %v1132, 16
        %v1219 = vrot.slane %v1217, 5
        %v1220 = vsel %vm636, %v1215, %v1219
        %v1222 = vshrl.u32 %v1133, 16
        %v1224 = vrot.slane %v1222, 4
        %v1225 = vshll.u32 %v1133, 16
        %v1227 = vrot.slane %v1225, 5
        %v1228 = vor.u32 %v1224, %v1227
        %v1229 = vrot.slane %v1228, 4
        %v1231 = vshll.u32 %v1134, 16
        %v1233 = vrot.slane %v1231, 5
        %v1234 = vsel %vm636, %v1229, %v1233
        %v1236 = vshrl.u32 %v1135, 16
        %v1238 = vrot.slane %v1236, 4
        %v1239 = vshll.u32 %v1135, 16
        %v1241 = vrot.slane %v1239, 5
        %v1242 = vor.u32 %v1238, %v1241
        %v1243 = vrot.slane %v1242, 4
        %v1245 = vshll.u32 %v1136, 16
        %v1247 = vrot.slane %v1245, 5
        %v1248 = vsel %vm636, %v1243, %v1247
        %s1249 = scalar_lea.vmem %s1, 10
        %v1250 = vld [vmem:[%s1249] sm:$0x3]
        %v1251 = vunpack.c.l.b16 %v1150
        %v1252 = vunpack.c.l.b16 %v1164
        %v1253 = vunpack.c.l.b16 %v1178
        %v1254 = vunpack.c.l.b16 %v1192
        %v1255 = vunpack.c.l.b16 %v1206
        %v1256 = vunpack.c.l.b16 %v1220
        %v1257 = vunpack.c.l.b16 %v1234
        %v1258 = vunpack.c.l.b16 %v1248
        %v1259 = vpack.c.b16 %v1252, %v1251
        %v1260 = vpack.c.b16 %v1254, %v1253
        %v1261 = vpack.c.b16 %v1256, %v1255
        %v1262 = vpack.c.b16 %v1258, %v1257
        %v1264 = vsel %vm420, %v1259, 0
        %v1267 = vsel %vm420, %v1260, 0
        %v1270 = vsel %vm420, %v1261, 0
        %v1273 = vsel %vm420, %v1262, 0
        %v1276 = vsel %vm433, %v1250, 0
        %1278 = vmatprep.subr.bf16.mxu0 0
        %1279 = vmatpush1.bf16.msra.mxu0 %v1276
        %1280 = vmatprep.subr.bf16.mxu0 0
        %1281 = vmatpush1.bf16.msra.mxu0 0
        %1282 = vmatprep.subr.bf16.mxu0 0
        %1283 = vmatpush1.bf16.msra.mxu0 0
        %1284 = vmatprep.subr.bf16.mxu0 0
        %1285 = vmatpush1.bf16.msra.mxu0 0
        %1286 = vmatprep.subr.bf16.mxu0 0
        %1287 = vmatpush1.bf16.msra.mxu0 0
        %1288 = vmatprep.subr.bf16.mxu0 0
        %1289 = vmatpush1.bf16.msra.mxu0 0
        %1290 = vmatprep.subr.bf16.mxu0 0
        %1291 = vmatpush1.bf16.msra.mxu0 0
        %1292 = vmatprep.subr.bf16.mxu0 0
        %1293 = vmatpush1.bf16.msra.mxu0 0
        %1294 = vmatprep.subr.bf16.mxu0 0
        %1295 = vmatpush1.bf16.msra.mxu0 0
        %1296 = vmatprep.subr.bf16.mxu0 0
        %1297 = vmatpush1.bf16.msra.mxu0 0
        %1298 = vmatprep.subr.bf16.mxu0 0
        %1299 = vmatpush1.bf16.msra.mxu0 0
        %1300 = vmatprep.subr.bf16.mxu0 0
        %1301 = vmatpush1.bf16.msra.mxu0 0
        %1302 = vmatprep.subr.bf16.mxu0 0
        %1303 = vmatpush1.bf16.msra.mxu0 0
        %1304 = vmatprep.subr.bf16.mxu0 0
        %1305 = vmatpush1.bf16.msra.mxu0 0
        %1306 = vmatprep.subr.bf16.mxu0 0
        %1307 = vmatpush1.bf16.msra.mxu0 0
        %1308 = vmatprep.subr.bf16.mxu0 0
        %1309 = vmatpush1.bf16.msra.mxu0 0
        %1310 = vmatprep.mubr.bf16.mxu0 0
        %1311 = vmatmul.mubr.bf16.gmra.mrb[0].mxu0 %v1264
        %v1312 = vpop.f32.mrb[0].mxu0
        %v1313 = vadd.f32 0.0, %v1312
        %v1314 = vpop.f32.mrb[0].mxu0
        %v1315 = vpop.f32.mrb[0].mxu0
        %v1316 = vadd.f32 0.0, %v1315
        %v1317 = vpop.f32.mrb[0].mxu0
        %1318 = vmatprep.mubr.bf16.mxu0 0
        %1319 = vmatmul.mubr.bf16.gmra.mrb[0].mxu0 %v1267
        %v1320 = vpop.f32.mrb[0].mxu0
        %v1321 = vadd.f32 0.0, %v1320
        %v1322 = vpop.f32.mrb[0].mxu0
        %v1323 = vpop.f32.mrb[0].mxu0
        %v1324 = vadd.f32 0.0, %v1323
        %v1325 = vpop.f32.mrb[0].mxu0
        %1326 = vmatprep.mubr.bf16.mxu0 0
        %1327 = vmatmul.mubr.bf16.gmra.mrb[0].mxu0 %v1270
        %v1328 = vpop.f32.mrb[0].mxu0
        %v1329 = vadd.f32 0.0, %v1328
        %v1330 = vpop.f32.mrb[0].mxu0
        %v1331 = vpop.f32.mrb[0].mxu0
        %v1332 = vadd.f32 0.0, %v1331
        %v1333 = vpop.f32.mrb[0].mxu0
        %1334 = vmatprep.mubr.bf16.mxu0 0
        %1335 = vmatmul.mubr.bf16.gmra.mrb[0].mxu0 %v1273
        %v1336 = vpop.f32.mrb[0].mxu0
        %v1337 = vadd.f32 0.0, %v1336
        %v1338 = vpop.f32.mrb[0].mxu0
        %v1339 = vpop.f32.mrb[0].mxu0
        %v1340 = vadd.f32 0.0, %v1339
        %v1341 = vpop.f32.mrb[0].mxu0
        %1342 = vdwg.mxu0
        %v1343 = vadd.f32 %v1097, %v1313
        %v1344 = vadd.f32 %v1098, %v1316
        %v1345 = vadd.f32 %v1099, %v1321
        %v1346 = vadd.f32 %v1100, %v1324
        %v1347 = vadd.f32 %v1101, %v1329
        %v1348 = vadd.f32 %v1102, %v1332
        %v1349 = vadd.f32 %v1103, %v1337
        %v1350 = vadd.f32 %v1104, %v1340
        %s1351 = scalar_lea.vmem %s361, 8
        %v1352 = vld [vmem:[%s1351] sm:$0xf]
        %v1353 = vld [vmem:[%s1351 + $0x8] sm:$0xf]
        %v1354 = vld [vmem:[%s1351 + $0x10] sm:$0xf]
        %v1355 = vld [vmem:[%s1351 + $0x18] sm:$0xf]
        %v1356 = vld [vmem:[%s1351 + $0x20] sm:$0xf]
        %v1357 = vld [vmem:[%s1351 + $0x28] sm:$0xf]
        %v1358 = vld [vmem:[%s1351 + $0x30] sm:$0xf]
        %v1359 = vld [vmem:[%s1351 + $0x38] sm:$0xf]
        %v1360 = vmax.bf16 %v1352, 0
        %v1361 = vmax.bf16 %v1353, 0
        %v1362 = vmax.bf16 %v1354, 0
        %v1363 = vmax.bf16 %v1355, 0
        %v1364 = vmax.bf16 %v1356, 0
        %v1365 = vmax.bf16 %v1357, 0
        %v1366 = vmax.bf16 %v1358, 0
        %v1367 = vmax.bf16 %v1359, 0
        %s1368 = scalar_lea.vmem %s1, 12
        %v1369 = vld [vmem:[%s1368] sm:$0x3]
        %v1378 = vunpack.c.l.b16 %v1360
        %v1379 = vunpack.c.l.b16 %v1361
        %v1380 = vunpack.c.l.b16 %v1362
        %v1381 = vunpack.c.l.b16 %v1363
        %v1382 = vunpack.c.l.b16 %v1364
        %v1383 = vunpack.c.l.b16 %v1365
        %v1384 = vunpack.c.l.b16 %v1366
        %v1385 = vunpack.c.l.b16 %v1367
        %v1386 = vpack.c.b16 %v1379, %v1378
        %v1387 = vpack.c.b16 %v1381, %v1380
        %v1388 = vpack.c.b16 %v1383, %v1382
        %v1389 = vpack.c.b16 %v1385, %v1384
        %v1391 = vsel %vm420, %v1386, 0
        %v1394 = vsel %vm420, %v1387, 0
        %v1397 = vsel %vm420, %v1388, 0
        %v1400 = vsel %vm420, %v1389, 0
        %v1403 = vsel %vm433, %v1369, 0
        %1405 = vmatprep.subr.bf16.mxu0 0
        %1406 = vmatpush1.bf16.msra.mxu0 %v1403
        %1407 = vmatprep.subr.bf16.mxu0 0
        %1408 = vmatpush1.bf16.msra.mxu0 0
        %1409 = vmatprep.subr.bf16.mxu0 0
        %1410 = vmatpush1.bf16.msra.mxu0 0
        %1411 = vmatprep.subr.bf16.mxu0 0
        %1412 = vmatpush1.bf16.msra.mxu0 0
        %1413 = vmatprep.subr.bf16.mxu0 0
        %1414 = vmatpush1.bf16.msra.mxu0 0
        %1415 = vmatprep.subr.bf16.mxu0 0
        %1416 = vmatpush1.bf16.msra.mxu0 0
        %1417 = vmatprep.subr.bf16.mxu0 0
        %1418 = vmatpush1.bf16.msra.mxu0 0
        %1419 = vmatprep.subr.bf16.mxu0 0
        %1420 = vmatpush1.bf16.msra.mxu0 0
        %1421 = vmatprep.subr.bf16.mxu0 0
        %1422 = vmatpush1.bf16.msra.mxu0 0
        %1423 = vmatprep.subr.bf16.mxu0 0
        %1424 = vmatpush1.bf16.msra.mxu0 0
        %1425 = vmatprep.subr.bf16.mxu0 0
        %1426 = vmatpush1.bf16.msra.mxu0 0
        %1427 = vmatprep.subr.bf16.mxu0 0
        %1428 = vmatpush1.bf16.msra.mxu0 0
        %1429 = vmatprep.subr.bf16.mxu0 0
        %1430 = vmatpush1.bf16.msra.mxu0 0
        %1431 = vmatprep.subr.bf16.mxu0 0
        %1432 = vmatpush1.bf16.msra.mxu0 0
        %1433 = vmatprep.subr.bf16.mxu0 0
        %1434 = vmatpush1.bf16.msra.mxu0 0
        %1435 = vmatprep.subr.bf16.mxu0 0
        %1436 = vmatpush1.bf16.msra.mxu0 0
        %1437 = vmatprep.mubr.bf16.mxu0 0
        %1438 = vmatmul.mubr.bf16.gmra.mrb[0].mxu0 %v1391
        %v1439 = vpop.f32.mrb[0].mxu0
        %v1440 = vadd.f32 0.0, %v1439
        %v1441 = vpop.f32.mrb[0].mxu0
        %v1442 = vpop.f32.mrb[0].mxu0
        %v1443 = vadd.f32 0.0, %v1442
        %v1444 = vpop.f32.mrb[0].mxu0
        %1445 = vmatprep.mubr.bf16.mxu0 0
        %1446 = vmatmul.mubr.bf16.gmra.mrb[0].mxu0 %v1394
        %v1447 = vpop.f32.mrb[0].mxu0
        %v1448 = vadd.f32 0.0, %v1447
        %v1449 = vpop.f32.mrb[0].mxu0
        %v1450 = vpop.f32.mrb[0].mxu0
        %v1451 = vadd.f32 0.0, %v1450
        %v1452 = vpop.f32.mrb[0].mxu0
        %1453 = vmatprep.mubr.bf16.mxu0 0
        %1454 = vmatmul.mubr.bf16.gmra.mrb[0].mxu0 %v1397
        %v1455 = vpop.f32.mrb[0].mxu0
        %v1456 = vadd.f32 0.0, %v1455
        %v1457 = vpop.f32.mrb[0].mxu0
        %v1458 = vpop.f32.mrb[0].mxu0
        %v1459 = vadd.f32 0.0, %v1458
        %v1460 = vpop.f32.mrb[0].mxu0
        %1461 = vmatprep.mubr.bf16.mxu0 0
        %1462 = vmatmul.mubr.bf16.gmra.mrb[0].mxu0 %v1400
        %v1463 = vpop.f32.mrb[0].mxu0
        %v1464 = vadd.f32 0.0, %v1463
        %v1465 = vpop.f32.mrb[0].mxu0
        %v1466 = vpop.f32.mrb[0].mxu0
        %v1467 = vadd.f32 0.0, %v1466
        %v1468 = vpop.f32.mrb[0].mxu0
        %1469 = vdwg.mxu0
        %v1470 = vadd.f32 %v1343, %v1440
        %v1471 = vadd.f32 %v1344, %v1443
        %v1472 = vadd.f32 %v1345, %v1448
        %v1473 = vadd.f32 %v1346, %v1451
        %v1474 = vadd.f32 %v1347, %v1456
        %v1475 = vadd.f32 %v1348, %v1459
        %v1476 = vadd.f32 %v1349, %v1464
        %v1477 = vadd.f32 %v1350, %v1467
        %s1478 = scalar_lea.vmem %s361, 80
        %v1479 = vld [vmem:[%s1478] sm:$0xf]
        %v1480 = vld [vmem:[%s1478 + $0x8] sm:$0xf]
        %v1481 = vld [vmem:[%s1478 + $0x10] sm:$0xf]
        %v1482 = vld [vmem:[%s1478 + $0x18] sm:$0xf]
        %v1483 = vld [vmem:[%s1478 + $0x20] sm:$0xf]
        %v1484 = vld [vmem:[%s1478 + $0x28] sm:$0xf]
        %v1485 = vld [vmem:[%s1478 + $0x30] sm:$0xf]
        %v1486 = vld [vmem:[%s1478 + $0x38] sm:$0xf]
        %v1487 = vmax.bf16 %v1479, 0
        %v1488 = vmax.bf16 %v1480, 0
        %v1489 = vmax.bf16 %v1481, 0
        %v1490 = vmax.bf16 %v1482, 0
        %v1491 = vmax.bf16 %v1483, 0
        %v1492 = vmax.bf16 %v1484, 0
        %v1493 = vmax.bf16 %v1485, 0
        %v1494 = vmax.bf16 %v1486, 0
        %s1495 = scalar_lea.vmem %s1, 14
        %v1496 = vld [vmem:[%s1495] sm:$0x3]
        %v1505 = vunpack.c.l.b16 %v1487
        %v1506 = vunpack.c.l.b16 %v1488
        %v1507 = vunpack.c.l.b16 %v1489
        %v1508 = vunpack.c.l.b16 %v1490
        %v1509 = vunpack.c.l.b16 %v1491
        %v1510 = vunpack.c.l.b16 %v1492
        %v1511 = vunpack.c.l.b16 %v1493
        %v1512 = vunpack.c.l.b16 %v1494
        %v1513 = vpack.c.b16 %v1506, %v1505
        %v1514 = vpack.c.b16 %v1508, %v1507
        %v1515 = vpack.c.b16 %v1510, %v1509
        %v1516 = vpack.c.b16 %v1512, %v1511
        %v1518 = vsel %vm420, %v1513, 0
        %v1521 = vsel %vm420, %v1514, 0
        %v1524 = vsel %vm420, %v1515, 0
        %v1527 = vsel %vm420, %v1516, 0
        %v1530 = vsel %vm433, %v1496, 0
        %1532 = vmatprep.subr.bf16.mxu0 0
        %1533 = vmatpush1.bf16.msra.mxu0 %v1530
        %1534 = vmatprep.subr.bf16.mxu0 0
        %1535 = vmatpush1.bf16.msra.mxu0 0
        %1536 = vmatprep.subr.bf16.mxu0 0
        %1537 = vmatpush1.bf16.msra.mxu0 0
        %1538 = vmatprep.subr.bf16.mxu0 0
        %1539 = vmatpush1.bf16.msra.mxu0 0
        %1540 = vmatprep.subr.bf16.mxu0 0
        %1541 = vmatpush1.bf16.msra.mxu0 0
        %1542 = vmatprep.subr.bf16.mxu0 0
        %1543 = vmatpush1.bf16.msra.mxu0 0
        %1544 = vmatprep.subr.bf16.mxu0 0
        %1545 = vmatpush1.bf16.msra.mxu0 0
        %1546 = vmatprep.subr.bf16.mxu0 0
        %1547 = vmatpush1.bf16.msra.mxu0 0
        %1548 = vmatprep.subr.bf16.mxu0 0
        %1549 = vmatpush1.bf16.msra.mxu0 0
        %1550 = vmatprep.subr.bf16.mxu0 0
        %1551 = vmatpush1.bf16.msra.mxu0 0
        %1552 = vmatprep.subr.bf16.mxu0 0
        %1553 = vmatpush1.bf16.msra.mxu0 0
        %1554 = vmatprep.subr.bf16.mxu0 0
        %1555 = vmatpush1.bf16.msra.mxu0 0
        %1556 = vmatprep.subr.bf16.mxu0 0
        %1557 = vmatpush1.bf16.msra.mxu0 0
        %1558 = vmatprep.subr.bf16.mxu0 0
        %1559 = vmatpush1.bf16.msra.mxu0 0
        %1560 = vmatprep.subr.bf16.mxu0 0
        %1561 = vmatpush1.bf16.msra.mxu0 0
        %1562 = vmatprep.subr.bf16.mxu0 0
        %1563 = vmatpush1.bf16.msra.mxu0 0
        %1564 = vmatprep.mubr.bf16.mxu0 0
        %1565 = vmatmul.mubr.bf16.gmra.mrb[0].mxu0 %v1518
        %v1566 = vpop.f32.mrb[0].mxu0
        %v1567 = vadd.f32 0.0, %v1566
        %v1568 = vpop.f32.mrb[0].mxu0
        %v1569 = vpop.f32.mrb[0].mxu0
        %v1570 = vadd.f32 0.0, %v1569
        %v1571 = vpop.f32.mrb[0].mxu0
        %1572 = vmatprep.mubr.bf16.mxu0 0
        %1573 = vmatmul.mubr.bf16.gmra.mrb[0].mxu0 %v1521
        %v1574 = vpop.f32.mrb[0].mxu0
        %v1575 = vadd.f32 0.0, %v1574
        %v1576 = vpop.f32.mrb[0].mxu0
        %v1577 = vpop.f32.mrb[0].mxu0
        %v1578 = vadd.f32 0.0, %v1577
        %v1579 = vpop.f32.mrb[0].mxu0
        %1580 = vmatprep.mubr.bf16.mxu0 0
        %1581 = vmatmul.mubr.bf16.gmra.mrb[0].mxu0 %v1524
        %v1582 = vpop.f32.mrb[0].mxu0
        %v1583 = vadd.f32 0.0, %v1582
        %v1584 = vpop.f32.mrb[0].mxu0
        %v1585 = vpop.f32.mrb[0].mxu0
        %v1586 = vadd.f32 0.0, %v1585
        %v1587 = vpop.f32.mrb[0].mxu0
        %1588 = vmatprep.mubr.bf16.mxu0 0
        %1589 = vmatmul.mubr.bf16.gmra.mrb[0].mxu0 %v1527
        %v1590 = vpop.f32.mrb[0].mxu0
        %v1591 = vadd.f32 0.0, %v1590
        %v1592 = vpop.f32.mrb[0].mxu0
        %v1593 = vpop.f32.mrb[0].mxu0
        %v1594 = vadd.f32 0.0, %v1593
        %v1595 = vpop.f32.mrb[0].mxu0
        %1596 = vdwg.mxu0
        %v1597 = vadd.f32 %v1470, %v1567
        %v1598 = vadd.f32 %v1471, %v1570
        %v1599 = vadd.f32 %v1472, %v1575
        %v1600 = vadd.f32 %v1473, %v1578
        %v1601 = vadd.f32 %v1474, %v1583
        %v1602 = vadd.f32 %v1475, %v1586
        %v1603 = vadd.f32 %v1476, %v1591
        %v1604 = vadd.f32 %v1477, %v1594
        %v1605 = vld [vmem:[%s1351] sm:$0xf]
        %v1606 = vld [vmem:[%s1351 + $0x4] sm:$0x1]
        %v1607 = vld [vmem:[%s1351 + $0x8] sm:$0xf]
        %v1608 = vld [vmem:[%s1351 + $0xc] sm:$0x1]
        %v1609 = vld [vmem:[%s1351 + $0x10] sm:$0xf]
        %v1610 = vld [vmem:[%s1351 + $0x14] sm:$0x1]
        %v1611 = vld [vmem:[%s1351 + $0x18] sm:$0xf]
        %v1612 = vld [vmem:[%s1351 + $0x1c] sm:$0x1]
        %v1613 = vld [vmem:[%s1351 + $0x20] sm:$0xf]
        %v1614 = vld [vmem:[%s1351 + $0x24] sm:$0x1]
        %v1615 = vld [vmem:[%s1351 + $0x28] sm:$0xf]
        %v1616 = vld [vmem:[%s1351 + $0x2c] sm:$0x1]
        %v1617 = vld [vmem:[%s1351 + $0x30] sm:$0xf]
        %v1618 = vld [vmem:[%s1351 + $0x34] sm:$0x1]
        %v1619 = vld [vmem:[%s1351 + $0x38] sm:$0xf]
        %v1620 = vld [vmem:[%s1351 + $0x3c] sm:$0x1]
        %v1621 = vmax.bf16 %v1605, 0
        %v1622 = vmax.bf16 %v1606, 0
        %v1623 = vmax.bf16 %v1607, 0
        %v1624 = vmax.bf16 %v1608, 0
        %v1625 = vmax.bf16 %v1609, 0
        %v1626 = vmax.bf16 %v1610, 0
        %v1627 = vmax.bf16 %v1611, 0
        %v1628 = vmax.bf16 %v1612, 0
        %v1629 = vmax.bf16 %v1613, 0
        %v1630 = vmax.bf16 %v1614, 0
        %v1631 = vmax.bf16 %v1615, 0
        %v1632 = vmax.bf16 %v1616, 0
        %v1633 = vmax.bf16 %v1617, 0
        %v1634 = vmax.bf16 %v1618, 0
        %v1635 = vmax.bf16 %v1619, 0
        %v1636 = vmax.bf16 %v1620, 0
        %v1638 = vshrl.u32 %v1621, 16
        %v1640 = vrot.slane %v1638, 4
        %v1641 = vshll.u32 %v1621, 16
        %v1643 = vrot.slane %v1641, 5
        %v1644 = vor.u32 %v1640, %v1643
        %v1645 = vrot.slane %v1644, 4
        %v1647 = vshll.u32 %v1622, 16
        %v1649 = vrot.slane %v1647, 5
        %v1650 = vsel %vm636, %v1645, %v1649
        %v1652 = vshrl.u32 %v1623, 16
        %v1654 = vrot.slane %v1652, 4
        %v1655 = vshll.u32 %v1623, 16
        %v1657 = vrot.slane %v1655, 5
        %v1658 = vor.u32 %v1654, %v1657
        %v1659 = vrot.slane %v1658, 4
        %v1661 = vshll.u32 %v1624, 16
        %v1663 = vrot.slane %v1661, 5
        %v1664 = vsel %vm636, %v1659, %v1663
        %v1666 = vshrl.u32 %v1625, 16
        %v1668 = vrot.slane %v1666, 4
        %v1669 = vshll.u32 %v1625, 16
        %v1671 = vrot.slane %v1669, 5
        %v1672 = vor.u32 %v1668, %v1671
        %v1673 = vrot.slane %v1672, 4
        %v1675 = vshll.u32 %v1626, 16
        %v1677 = vrot.slane %v1675, 5
        %v1678 = vsel %vm636, %v1673, %v1677
        %v1680 = vshrl.u32 %v1627, 16
        %v1682 = vrot.slane %v1680, 4
        %v1683 = vshll.u32 %v1627, 16
        %v1685 = vrot.slane %v1683, 5
        %v1686 = vor.u32 %v1682, %v1685
        %v1687 = vrot.slane %v1686, 4
        %v1689 = vshll.u32 %v1628, 16
        %v1691 = vrot.slane %v1689, 5
        %v1692 = vsel %vm636, %v1687, %v1691
        %v1694 = vshrl.u32 %v1629, 16
        %v1696 = vrot.slane %v1694, 4
        %v1697 = vshll.u32 %v1629, 16
        %v1699 = vrot.slane %v1697, 5
        %v1700 = vor.u32 %v1696, %v1699
        %v1701 = vrot.slane %v1700, 4
        %v1703 = vshll.u32 %v1630, 16
        %v1705 = vrot.slane %v1703, 5
        %v1706 = vsel %vm636, %v1701, %v1705
        %v1708 = vshrl.u32 %v1631, 16
        %v1710 = vrot.slane %v1708, 4
        %v1711 = vshll.u32 %v1631, 16
        %v1713 = vrot.slane %v1711, 5
        %v1714 = vor.u32 %v1710, %v1713
        %v1715 = vrot.slane %v1714, 4
        %v1717 = vshll.u32 %v1632, 16
        %v1719 = vrot.slane %v1717, 5
        %v1720 = vsel %vm636, %v1715, %v1719
        %v1722 = vshrl.u32 %v1633, 16
        %v1724 = vrot.slane %v1722, 4
        %v1725 = vshll.u32 %v1633, 16
        %v1727 = vrot.slane %v1725, 5
        %v1728 = vor.u32 %v1724, %v1727
        %v1729 = vrot.slane %v1728, 4
        %v1731 = vshll.u32 %v1634, 16
        %v1733 = vrot.slane %v1731, 5
        %v1734 = vsel %vm636, %v1729, %v1733
        %v1736 = vshrl.u32 %v1635, 16
        %v1738 = vrot.slane %v1736, 4
        %v1739 = vshll.u32 %v1635, 16
        %v1741 = vrot.slane %v1739, 5
        %v1742 = vor.u32 %v1738, %v1741
        %v1743 = vrot.slane %v1742, 4
        %v1745 = vshll.u32 %v1636, 16
        %v1747 = vrot.slane %v1745, 5
        %v1748 = vsel %vm636, %v1743, %v1747
        %s1749 = scalar_lea.vmem %s1, 16
        %v1750 = vld [vmem:[%s1749] sm:$0x3]
        %v1751 = vunpack.c.l.b16 %v1650
        %v1752 = vunpack.c.l.b16 %v1664
        %v1753 = vunpack.c.l.b16 %v1678
        %v1754 = vunpack.c.l.b16 %v1692
        %v1755 = vunpack.c.l.b16 %v1706
        %v1756 = vunpack.c.l.b16 %v1720
        %v1757 = vunpack.c.l.b16 %v1734
        %v1758 = vunpack.c.l.b16 %v1748
        %v1759 = vpack.c.b16 %v1752, %v1751
        %v1760 = vpack.c.b16 %v1754, %v1753
        %v1761 = vpack.c.b16 %v1756, %v1755
        %v1762 = vpack.c.b16 %v1758, %v1757
        %v1764 = vsel %vm420, %v1759, 0
        %v1767 = vsel %vm420, %v1760, 0
        %v1770 = vsel %vm420, %v1761, 0
        %v1773 = vsel %vm420, %v1762, 0
        %v1776 = vsel %vm433, %v1750, 0
        %1778 = vmatprep.subr.bf16.mxu0 0
        %1779 = vmatpush1.bf16.msra.mxu0 %v1776
        %1780 = vmatprep.subr.bf16.mxu0 0
        %1781 = vmatpush1.bf16.msra.mxu0 0
        %1782 = vmatprep.subr.bf16.mxu0 0
        %1783 = vmatpush1.bf16.msra.mxu0 0
        %1784 = vmatprep.subr.bf16.mxu0 0
        %1785 = vmatpush1.bf16.msra.mxu0 0
        %1786 = vmatprep.subr.bf16.mxu0 0
        %1787 = vmatpush1.bf16.msra.mxu0 0
        %1788 = vmatprep.subr.bf16.mxu0 0
        %1789 = vmatpush1.bf16.msra.mxu0 0
        %1790 = vmatprep.subr.bf16.mxu0 0
        %1791 = vmatpush1.bf16.msra.mxu0 0
        %1792 = vmatprep.subr.bf16.mxu0 0
        %1793 = vmatpush1.bf16.msra.mxu0 0
        %1794 = vmatprep.subr.bf16.mxu0 0
        %1795 = vmatpush1.bf16.msra.mxu0 0
        %1796 = vmatprep.subr.bf16.mxu0 0
        %1797 = vmatpush1.bf16.msra.mxu0 0
        %1798 = vmatprep.subr.bf16.mxu0 0
        %1799 = vmatpush1.bf16.msra.mxu0 0
        %1800 = vmatprep.subr.bf16.mxu0 0
        %1801 = vmatpush1.bf16.msra.mxu0 0
        %1802 = vmatprep.subr.bf16.mxu0 0
        %1803 = vmatpush1.bf16.msra.mxu0 0
        %1804 = vmatprep.subr.bf16.mxu0 0
        %1805 = vmatpush1.bf16.msra.mxu0 0
        %1806 = vmatprep.subr.bf16.mxu0 0
        %1807 = vmatpush1.bf16.msra.mxu0 0
        %1808 = vmatprep.subr.bf16.mxu0 0
        %1809 = vmatpush1.bf16.msra.mxu0 0
        %1810 = vmatprep.mubr.bf16.mxu0 0
        %1811 = vmatmul.mubr.bf16.gmra.mrb[0].mxu0 %v1764
        %v1812 = vpop.f32.mrb[0].mxu0
        %v1813 = vadd.f32 0.0, %v1812
        %v1814 = vpop.f32.mrb[0].mxu0
        %v1815 = vpop.f32.mrb[0].mxu0
        %v1816 = vadd.f32 0.0, %v1815
        %v1817 = vpop.f32.mrb[0].mxu0
        %1818 = vmatprep.mubr.bf16.mxu0 0
        %1819 = vmatmul.mubr.bf16.gmra.mrb[0].mxu0 %v1767
        %v1820 = vpop.f32.mrb[0].mxu0
        %v1821 = vadd.f32 0.0, %v1820
        %v1822 = vpop.f32.mrb[0].mxu0
        %v1823 = vpop.f32.mrb[0].mxu0
        %v1824 = vadd.f32 0.0, %v1823
        %v1825 = vpop.f32.mrb[0].mxu0
        %1826 = vmatprep.mubr.bf16.mxu0 0
        %1827 = vmatmul.mubr.bf16.gmra.mrb[0].mxu0 %v1770
        %v1828 = vpop.f32.mrb[0].mxu0
        %v1829 = vadd.f32 0.0, %v1828
        %v1830 = vpop.f32.mrb[0].mxu0
        %v1831 = vpop.f32.mrb[0].mxu0
        %v1832 = vadd.f32 0.0, %v1831
        %v1833 = vpop.f32.mrb[0].mxu0
        %1834 = vmatprep.mubr.bf16.mxu0 0
        %1835 = vmatmul.mubr.bf16.gmra.mrb[0].mxu0 %v1773
        %v1836 = vpop.f32.mrb[0].mxu0
        %v1837 = vadd.f32 0.0, %v1836
        %v1838 = vpop.f32.mrb[0].mxu0
        %v1839 = vpop.f32.mrb[0].mxu0
        %v1840 = vadd.f32 0.0, %v1839
        %v1841 = vpop.f32.mrb[0].mxu0
        %1842 = vdwg.mxu0
        %v1843 = vadd.f32 %v1597, %v1813
        %v1844 = vadd.f32 %v1598, %v1816
        %v1845 = vadd.f32 %v1599, %v1821
        %v1846 = vadd.f32 %v1600, %v1824
        %v1847 = vadd.f32 %v1601, %v1829
        %v1848 = vadd.f32 %v1602, %v1832
        %v1849 = vadd.f32 %v1603, %v1837
        %v1850 = vadd.f32 %v1604, %v1840
        %v1851 = vld [vmem:[%s2] sm:$0x1]
        %v1853 = vlaneseq
        %v1854 = vshrl.u32 %v1853, 7
        %v1855 = vsub.s32 0, %v1854
        %v1856 = vrot.slane %v1851, %v1855
        %v1858 = vmul.f32 %v1843, %v1856
        %v1859 = vmul.f32 %v1844, %v1856
        %v1860 = vmul.f32 %v1845, %v1856
        %v1861 = vmul.f32 %v1846, %v1856
        %v1862 = vmul.f32 %v1847, %v1856
        %v1863 = vmul.f32 %v1848, %v1856
        %v1864 = vmul.f32 %v1849, %v1856
        %v1865 = vmul.f32 %v1850, %v1856
        %v1866 = vld [vmem:[%s3] sm:$0x1]
        %v1868 = vlaneseq
        %v1869 = vshrl.u32 %v1868, 7
        %v1870 = vsub.s32 0, %v1869
        %v1871 = vrot.slane %v1866, %v1870
        %v1873 = vadd.f32 %v1858, %v1871
        %v1874 = vadd.f32 %v1859, %v1871
        %v1875 = vadd.f32 %v1860, %v1871
        %v1876 = vadd.f32 %v1861, %v1871
        %v1877 = vadd.f32 %v1862, %v1871
        %v1878 = vadd.f32 %v1863, %v1871
        %v1879 = vadd.f32 %v1864, %v1871
        %v1880 = vadd.f32 %v1865, %v1871
        %v1881 = vmax.f32 %v1873, 0.0
        %v1882 = vmax.f32 %v1874, 0.0
        %v1883 = vmax.f32 %v1875, 0.0
        %v1884 = vmax.f32 %v1876, 0.0
        %v1885 = vmax.f32 %v1877, 0.0
        %v1886 = vmax.f32 %v1878, 0.0
        %v1887 = vmax.f32 %v1879, 0.0
        %v1888 = vmax.f32 %v1880, 0.0
        %1889 = vst [vmem:[#allocation2] sm:$0xf] 0
        %1890 = vst [vmem:[#allocation2 + $0x4] sm:$0x1] 0
        %1891 = vst [vmem:[#allocation2 + $0x8] sm:$0xf] 0
        %1892 = vst [vmem:[#allocation2 + $0xc] sm:$0x1] 0
        %1893 = vst [vmem:[#allocation2 + $0x10] sm:$0xf] 0
        %1894 = vst [vmem:[#allocation2 + $0x14] sm:$0x1] 0
        %1895 = vst [vmem:[#allocation2 + $0x18] sm:$0xf] 0
        %1896 = vst [vmem:[#allocation2 + $0x1c] sm:$0x1] 0
        %1897 = vst [vmem:[#allocation2 + $0x20] sm:$0xf] 0
        %1898 = vst [vmem:[#allocation2 + $0x24] sm:$0x1] 0
        %1899 = vst [vmem:[#allocation2 + $0x28] sm:$0xf] 0
        %1900 = vst [vmem:[#allocation2 + $0x2c] sm:$0x1] 0
        %1901 = vst [vmem:[#allocation2 + $0x30] sm:$0xf] 0
        %1902 = vst [vmem:[#allocation2 + $0x34] sm:$0x1] 0
        %1903 = vst [vmem:[#allocation2 + $0x38] sm:$0xf] 0
        %1904 = vst [vmem:[#allocation2 + $0x3c] sm:$0x1] 0
        %1905 = vst [vmem:[#allocation2 + $0x40] sm:$0xf] 0
        %1906 = vst [vmem:[#allocation2 + $0x44] sm:$0x1] 0
        %1907 = vst [vmem:[#allocation2 + $0x48] sm:$0xf] 0
        %1908 = vst [vmem:[#allocation2 + $0x4c] sm:$0x1] 0
        %v1909 = vpack.c.bf16 %v1881, %v1881
        %v1910 = vpack.c.bf16 %v1882, %v1882
        %v1911 = vpack.c.bf16 %v1883, %v1883
        %v1912 = vpack.c.bf16 %v1884, %v1884
        %v1913 = vpack.c.bf16 %v1885, %v1885
        %v1914 = vpack.c.bf16 %v1886, %v1886
        %v1915 = vpack.c.bf16 %v1887, %v1887
        %v1916 = vpack.c.bf16 %v1888, %v1888
        %v1925 = vunpack.c.l.b16 %v1909
        %v1926 = vunpack.c.l.b16 %v1910
        %v1927 = vunpack.c.l.b16 %v1911
        %v1928 = vunpack.c.l.b16 %v1912
        %v1929 = vunpack.c.l.b16 %v1913
        %v1930 = vunpack.c.l.b16 %v1914
        %v1931 = vunpack.c.l.b16 %v1915
        %v1932 = vunpack.c.l.b16 %v1916
        %v1933 = vpack.c.b16 %v1925, %v1925
        %v1934 = vpack.c.b16 %v1926, %v1926
        %v1935 = vpack.c.b16 %v1927, %v1927
        %v1936 = vpack.c.b16 %v1928, %v1928
        %v1937 = vpack.c.b16 %v1929, %v1929
        %v1938 = vpack.c.b16 %v1930, %v1930
        %v1939 = vpack.c.b16 %v1931, %v1931
        %v1940 = vpack.c.b16 %v1932, %v1932
        %v1942 = vshrl.u32 %v1933, 16
        %v1944 = vrot.slane %v1942, 7
        %v1945 = vshll.u32 %v1933, 16
        %v1947 = vor.u32 %v1944, %v1945
        %v1948 = vrot.slane %v1944, 4
        %v1950 = vshrl.u32 %v1934, 16
        %v1952 = vrot.slane %v1950, 7
        %v1953 = vshll.u32 %v1934, 16
        %v1955 = vor.u32 %v1952, %v1953
        %v1956 = vrot.slane %v1952, 4
        %v1958 = vshrl.u32 %v1935, 16
        %v1960 = vrot.slane %v1958, 7
        %v1961 = vshll.u32 %v1935, 16
        %v1963 = vor.u32 %v1960, %v1961
        %v1964 = vrot.slane %v1960, 4
        %v1966 = vshrl.u32 %v1936, 16
        %v1968 = vrot.slane %v1966, 7
        %v1969 = vshll.u32 %v1936, 16
        %v1971 = vor.u32 %v1968, %v1969
        %v1972 = vrot.slane %v1968, 4
        %v1974 = vshrl.u32 %v1937, 16
        %v1976 = vrot.slane %v1974, 7
        %v1977 = vshll.u32 %v1937, 16
        %v1979 = vor.u32 %v1976, %v1977
        %v1980 = vrot.slane %v1976, 4
        %v1982 = vshrl.u32 %v1938, 16
        %v1984 = vrot.slane %v1982, 7
        %v1985 = vshll.u32 %v1938, 16
        %v1987 = vor.u32 %v1984, %v1985
        %v1988 = vrot.slane %v1984, 4
        %v1990 = vshrl.u32 %v1939, 16
        %v1992 = vrot.slane %v1990, 7
        %v1993 = vshll.u32 %v1939, 16
        %v1995 = vor.u32 %v1992, %v1993
        %v1996 = vrot.slane %v1992, 4
        %v1998 = vshrl.u32 %v1940, 16
        %v2000 = vrot.slane %v1998, 7
        %v2001 = vshll.u32 %v1940, 16
        %v2003 = vor.u32 %v2000, %v2001
        %v2004 = vrot.slane %v2000, 4
        %s2021 = scalar_lea.vmem [#allocation2], 8
        %vm2022 = vcmask 1043456
        %vm2023 = vsmask.f32 7938
        %vm2024 = vmand %vm2022, %vm2023
        %v2025 = vld [vmem:[%s2021] sm:$0xf]
        %v2026 = vsel %vm2024, %v1947, %v2025
        %2027 = vst [vmem:[%s2021] sm:$0xf] %v2026
        %vm2028 = vcmask 1040384
        %vm2029 = vsmask.f32 256
        %vm2030 = vmand %vm2028, %vm2029
        %v2031 = vld [vmem:[%s2021 + $0x4] sm:$0x1]
        %v2032 = vsel %vm2030, %v1948, %v2031
        %2033 = vst [vmem:[%s2021 + $0x4] sm:$0x1] %v2032
        %v2034 = vld [vmem:[%s2021 + $0x8] sm:$0xf]
        %v2035 = vsel %vm2024, %v1955, %v2034
        %2036 = vst [vmem:[%s2021 + $0x8] sm:$0xf] %v2035
        %v2037 = vld [vmem:[%s2021 + $0xc] sm:$0x1]
        %v2038 = vsel %vm2030, %v1956, %v2037
        %2039 = vst [vmem:[%s2021 + $0xc] sm:$0x1] %v2038
        %v2040 = vld [vmem:[%s2021 + $0x10] sm:$0xf]
        %v2041 = vsel %vm2024, %v1963, %v2040
        %2042 = vst [vmem:[%s2021 + $0x10] sm:$0xf] %v2041
        %v2043 = vld [vmem:[%s2021 + $0x14] sm:$0x1]
        %v2044 = vsel %vm2030, %v1964, %v2043
        %2045 = vst [vmem:[%s2021 + $0x14] sm:$0x1] %v2044
        %v2046 = vld [vmem:[%s2021 + $0x18] sm:$0xf]
        %v2047 = vsel %vm2024, %v1971, %v2046
        %2048 = vst [vmem:[%s2021 + $0x18] sm:$0xf] %v2047
        %v2049 = vld [vmem:[%s2021 + $0x1c] sm:$0x1]
        %v2050 = vsel %vm2030, %v1972, %v2049
        %2051 = vst [vmem:[%s2021 + $0x1c] sm:$0x1] %v2050
        %v2052 = vld [vmem:[%s2021 + $0x20] sm:$0xf]
        %v2053 = vsel %vm2024, %v1979, %v2052
        %2054 = vst [vmem:[%s2021 + $0x20] sm:$0xf] %v2053
        %v2055 = vld [vmem:[%s2021 + $0x24] sm:$0x1]
        %v2056 = vsel %vm2030, %v1980, %v2055
        %2057 = vst [vmem:[%s2021 + $0x24] sm:$0x1] %v2056
        %v2058 = vld [vmem:[%s2021 + $0x28] sm:$0xf]
        %v2059 = vsel %vm2024, %v1987, %v2058
        %2060 = vst [vmem:[%s2021 + $0x28] sm:$0xf] %v2059
        %v2061 = vld [vmem:[%s2021 + $0x2c] sm:$0x1]
        %v2062 = vsel %vm2030, %v1988, %v2061
        %2063 = vst [vmem:[%s2021 + $0x2c] sm:$0x1] %v2062
        %v2064 = vld [vmem:[%s2021 + $0x30] sm:$0xf]
        %v2065 = vsel %vm2024, %v1995, %v2064
        %2066 = vst [vmem:[%s2021 + $0x30] sm:$0xf] %v2065
        %v2067 = vld [vmem:[%s2021 + $0x34] sm:$0x1]
        %v2068 = vsel %vm2030, %v1996, %v2067
        %2069 = vst [vmem:[%s2021 + $0x34] sm:$0x1] %v2068
        %v2070 = vld [vmem:[%s2021 + $0x38] sm:$0xf]
        %v2071 = vsel %vm2024, %v2003, %v2070
        %2072 = vst [vmem:[%s2021 + $0x38] sm:$0xf] %v2071
        %v2073 = vld [vmem:[%s2021 + $0x3c] sm:$0x1]
        %v2074 = vsel %vm2030, %v2004, %v2073
        %2075 = vst [vmem:[%s2021 + $0x3c] sm:$0x1] %v2074
        %v2076 = vld [vmem:[#allocation2] sm:$0xf]
        %v2077 = vld [vmem:[#allocation2 + $0x8] sm:$0xf]
        %v2078 = vld [vmem:[#allocation2 + $0x10] sm:$0xf]
        %v2079 = vld [vmem:[#allocation2 + $0x18] sm:$0xf]
        %v2080 = vld [vmem:[#allocation2 + $0x20] sm:$0xf]
        %v2081 = vld [vmem:[#allocation2 + $0x28] sm:$0xf]
        %v2082 = vld [vmem:[#allocation2 + $0x30] sm:$0xf]
        %v2083 = vld [vmem:[#allocation2 + $0x38] sm:$0xf]
        %v2084 = vld [vmem:[%s4] sm:$0xf]
        %v2085 = vld [vmem:[%s4 + $0x4] sm:$0xf]
        %v2086 = vld [vmem:[%s4 + $0x8] sm:$0xf]
        %v2087 = vld [vmem:[%s4 + $0xc] sm:$0xf]
        %v2088 = vld [vmem:[%s4 + $0x10] sm:$0xf]
        %v2089 = vld [vmem:[%s4 + $0x14] sm:$0xf]
        %v2090 = vld [vmem:[%s4 + $0x18] sm:$0xf]
        %v2091 = vld [vmem:[%s4 + $0x1c] sm:$0xf]
        %v2092 = vld [vmem:[%s4 + $0x20] sm:$0xf]
        %v2093 = vld [vmem:[%s4 + $0x24] sm:$0xf]
        %v2094 = vld [vmem:[%s4 + $0x28] sm:$0xf]
        %v2095 = vld [vmem:[%s4 + $0x2c] sm:$0xf]
        %v2096 = vld [vmem:[%s4 + $0x30] sm:$0xf]
        %v2097 = vld [vmem:[%s4 + $0x34] sm:$0xf]
        %v2098 = vld [vmem:[%s4 + $0x38] sm:$0xf]
        %v2099 = vld [vmem:[%s4 + $0x3c] sm:$0xf]
        %v2100 = vld [vmem:[#allocation2 + $0x4] sm:$0x1]
        %v2101 = vld [vmem:[#allocation2 + $0xc] sm:$0x1]
        %v2102 = vld [vmem:[#allocation2 + $0x14] sm:$0x1]
        %v2103 = vld [vmem:[#allocation2 + $0x1c] sm:$0x1]
        %v2104 = vld [vmem:[#allocation2 + $0x24] sm:$0x1]
        %v2105 = vld [vmem:[#allocation2 + $0x2c] sm:$0x1]
        %v2106 = vld [vmem:[#allocation2 + $0x34] sm:$0x1]
        %v2107 = vld [vmem:[#allocation2 + $0x3c] sm:$0x1]
        %v2109 = vshrl.u32 %v2076, 16
        %v2111 = vrot.slane %v2109, 4
        %v2112 = vshll.u32 %v2076, 16
        %v2114 = vrot.slane %v2112, 5
        %v2115 = vor.u32 %v2111, %v2114
        %v2116 = vrot.slane %v2115, 4
        %v2118 = vshll.u32 %v2100, 16
        %v2120 = vrot.slane %v2118, 5
        %v2121 = vsel %vm636, %v2116, %v2120
        %v2123 = vshrl.u32 %v2077, 16
        %v2125 = vrot.slane %v2123, 4
        %v2126 = vshll.u32 %v2077, 16
        %v2128 = vrot.slane %v2126, 5
        %v2129 = vor.u32 %v2125, %v2128
        %v2130 = vrot.slane %v2129, 4
        %v2132 = vshll.u32 %v2101, 16
        %v2134 = vrot.slane %v2132, 5
        %v2135 = vsel %vm636, %v2130, %v2134
        %v2137 = vshrl.u32 %v2078, 16
        %v2139 = vrot.slane %v2137, 4
        %v2140 = vshll.u32 %v2078, 16
        %v2142 = vrot.slane %v2140, 5
        %v2143 = vor.u32 %v2139, %v2142
        %v2144 = vrot.slane %v2143, 4
        %v2146 = vshll.u32 %v2102, 16
        %v2148 = vrot.slane %v2146, 5
        %v2149 = vsel %vm636, %v2144, %v2148
        %v2151 = vshrl.u32 %v2079, 16
        %v2153 = vrot.slane %v2151, 4
        %v2154 = vshll.u32 %v2079, 16
        %v2156 = vrot.slane %v2154, 5
        %v2157 = vor.u32 %v2153, %v2156
        %v2158 = vrot.slane %v2157, 4
        %v2160 = vshll.u32 %v2103, 16
        %v2162 = vrot.slane %v2160, 5
        %v2163 = vsel %vm636, %v2158, %v2162
        %v2165 = vshrl.u32 %v2080, 16
        %v2167 = vrot.slane %v2165, 4
        %v2168 = vshll.u32 %v2080, 16
        %v2170 = vrot.slane %v2168, 5
        %v2171 = vor.u32 %v2167, %v2170
        %v2172 = vrot.slane %v2171, 4
        %v2174 = vshll.u32 %v2104, 16
        %v2176 = vrot.slane %v2174, 5
        %v2177 = vsel %vm636, %v2172, %v2176
        %v2179 = vshrl.u32 %v2081, 16
        %v2181 = vrot.slane %v2179, 4
        %v2182 = vshll.u32 %v2081, 16
        %v2184 = vrot.slane %v2182, 5
        %v2185 = vor.u32 %v2181, %v2184
        %v2186 = vrot.slane %v2185, 4
        %v2188 = vshll.u32 %v2105, 16
        %v2190 = vrot.slane %v2188, 5
        %v2191 = vsel %vm636, %v2186, %v2190
        %v2193 = vshrl.u32 %v2082, 16
        %v2195 = vrot.slane %v2193, 4
        %v2196 = vshll.u32 %v2082, 16
        %v2198 = vrot.slane %v2196, 5
        %v2199 = vor.u32 %v2195, %v2198
        %v2200 = vrot.slane %v2199, 4
        %v2202 = vshll.u32 %v2106, 16
        %v2204 = vrot.slane %v2202, 5
        %v2205 = vsel %vm636, %v2200, %v2204
        %v2207 = vshrl.u32 %v2083, 16
        %v2209 = vrot.slane %v2207, 4
        %v2210 = vshll.u32 %v2083, 16
        %v2212 = vrot.slane %v2210, 5
        %v2213 = vor.u32 %v2209, %v2212
        %v2214 = vrot.slane %v2213, 4
        %v2216 = vshll.u32 %v2107, 16
        %v2218 = vrot.slane %v2216, 5
        %v2219 = vsel %vm636, %v2214, %v2218
        %s2220 = scalar_lea.vmem %s4, 64
        %v2221 = vld [vmem:[%s2220] sm:$0xf]
        %v2222 = vld [vmem:[%s2220 + $0x4] sm:$0xf]
        %v2223 = vld [vmem:[%s2220 + $0x8] sm:$0xf]
        %v2224 = vld [vmem:[%s2220 + $0xc] sm:$0xf]
        %v2225 = vld [vmem:[%s2220 + $0x10] sm:$0xf]
        %v2226 = vld [vmem:[%s2220 + $0x14] sm:$0xf]
        %v2227 = vld [vmem:[%s2220 + $0x18] sm:$0xf]
        %v2228 = vld [vmem:[%s2220 + $0x1c] sm:$0xf]
        %v2229 = vld [vmem:[%s2220 + $0x20] sm:$0xf]
        %v2230 = vld [vmem:[%s2220 + $0x24] sm:$0xf]
        %v2231 = vld [vmem:[%s2220 + $0x28] sm:$0xf]
        %v2232 = vld [vmem:[%s2220 + $0x2c] sm:$0xf]
        %v2233 = vld [vmem:[%s2220 + $0x30] sm:$0xf]
        %v2234 = vld [vmem:[%s2220 + $0x34] sm:$0xf]
        %v2235 = vld [vmem:[%s2220 + $0x38] sm:$0xf]
        %v2236 = vld [vmem:[%s2220 + $0x3c] sm:$0xf]
        %v2237 = vunpack.c.l.b16 %v2121
        %v2238 = vunpack.c.l.b16 %v2135
        %v2239 = vunpack.c.l.b16 %v2149
        %v2240 = vunpack.c.l.b16 %v2163
        %v2241 = vunpack.c.l.b16 %v2177
        %v2242 = vunpack.c.l.b16 %v2191
        %v2243 = vunpack.c.l.b16 %v2205
        %v2244 = vunpack.c.l.b16 %v2219
        %v2245 = vpack.c.b16 %v2238, %v2237
        %v2246 = vpack.c.b16 %v2240, %v2239
        %v2247 = vpack.c.b16 %v2242, %v2241
        %v2248 = vpack.c.b16 %v2244, %v2243
        %v2269 = vunpack.c.l.b16 %v2221
        %v2270 = vunpack.c.l.b16 %v2222
        %v2271 = vunpack.c.l.b16 %v2223
        %v2272 = vunpack.c.l.b16 %v2224
        %v2273 = vunpack.c.l.b16 %v2225
        %v2274 = vunpack.c.l.b16 %v2226
        %v2275 = vunpack.c.l.b16 %v2227
        %v2276 = vunpack.c.l.b16 %v2228
        %v2277 = vunpack.c.l.b16 %v2229
        %v2278 = vunpack.c.l.b16 %v2230
        %v2279 = vunpack.c.l.b16 %v2231
        %v2280 = vunpack.c.l.b16 %v2232
        %v2281 = vunpack.c.l.b16 %v2233
        %v2282 = vunpack.c.l.b16 %v2234
        %v2283 = vunpack.c.l.b16 %v2235
        %v2284 = vunpack.c.l.b16 %v2236
        %v2285 = vpack.c.b16 %v2270, %v2269
        %v2286 = vpack.c.b16 %v2272, %v2271
        %v2287 = vpack.c.b16 %v2274, %v2273
        %v2288 = vpack.c.b16 %v2276, %v2275
        %v2289 = vpack.c.b16 %v2278, %v2277
        %v2290 = vpack.c.b16 %v2280, %v2279
        %v2291 = vpack.c.b16 %v2282, %v2281
        %v2292 = vpack.c.b16 %v2284, %v2283
        %2301 = vmatprep.subr.bf16.mxu0 0
        %2302 = vmatpush1.bf16.msra.mxu0 %v2285
        %2303 = vmatprep.subr.bf16.mxu0 0
        %2304 = vmatpush1.bf16.msra.mxu0 %v2286
        %2305 = vmatprep.subr.bf16.mxu0 0
        %2306 = vmatpush1.bf16.msra.mxu0 %v2287
        %2307 = vmatprep.subr.bf16.mxu0 0
        %2308 = vmatpush1.bf16.msra.mxu0 %v2288
        %2309 = vmatprep.subr.bf16.mxu0 0
        %2310 = vmatpush1.bf16.msra.mxu0 %v2289
        %2311 = vmatprep.subr.bf16.mxu0 0
        %2312 = vmatpush1.bf16.msra.mxu0 %v2290
        %2313 = vmatprep.subr.bf16.mxu0 0
        %2314 = vmatpush1.bf16.msra.mxu0 %v2291
        %2315 = vmatprep.subr.bf16.mxu0 0
        %2316 = vmatpush1.bf16.msra.mxu0 %v2292
        %2317 = vmatprep.subr.bf16.mxu0 0
        %2318 = vmatpush1.bf16.msra.mxu0 0
        %2319 = vmatprep.subr.bf16.mxu0 0
        %2320 = vmatpush1.bf16.msra.mxu0 0
        %2321 = vmatprep.subr.bf16.mxu0 0
        %2322 = vmatpush1.bf16.msra.mxu0 0
        %2323 = vmatprep.subr.bf16.mxu0 0
        %2324 = vmatpush1.bf16.msra.mxu0 0
        %2325 = vmatprep.subr.bf16.mxu0 0
        %2326 = vmatpush1.bf16.msra.mxu0 0
        %2327 = vmatprep.subr.bf16.mxu0 0
        %2328 = vmatpush1.bf16.msra.mxu0 0
        %2329 = vmatprep.subr.bf16.mxu0 0
        %2330 = vmatpush1.bf16.msra.mxu0 0
        %2331 = vmatprep.subr.bf16.mxu0 0
        %2332 = vmatpush1.bf16.msra.mxu0 0
        %2333 = vmatprep.mubr.bf16.mxu0 0
        %2334 = vmatmul.mubr.bf16.gmra.mrb[0].mxu0 %v2245
        %v2335 = vpop.f32.mrb[0].mxu0
        %v2336 = vadd.f32 0.0, %v2335
        %v2337 = vpop.f32.mrb[0].mxu0
        %v2338 = vpop.f32.mrb[0].mxu0
        %v2339 = vadd.f32 0.0, %v2338
        %v2340 = vpop.f32.mrb[0].mxu0
        %2341 = vmatprep.mubr.bf16.mxu0 0
        %2342 = vmatmul.mubr.bf16.gmra.mrb[0].mxu0 %v2246
        %v2343 = vpop.f32.mrb[0].mxu0
        %v2344 = vadd.f32 0.0, %v2343
        %v2345 = vpop.f32.mrb[0].mxu0
        %v2346 = vpop.f32.mrb[0].mxu0
        %v2347 = vadd.f32 0.0, %v2346
        %v2348 = vpop.f32.mrb[0].mxu0
        %2349 = vmatprep.mubr.bf16.mxu0 0
        %2350 = vmatmul.mubr.bf16.gmra.mrb[0].mxu0 %v2247
        %v2351 = vpop.f32.mrb[0].mxu0
        %v2352 = vadd.f32 0.0, %v2351
        %v2353 = vpop.f32.mrb[0].mxu0
        %v2354 = vpop.f32.mrb[0].mxu0
        %v2355 = vadd.f32 0.0, %v2354
        %v2356 = vpop.f32.mrb[0].mxu0
        %2357 = vmatprep.mubr.bf16.mxu0 0
        %2358 = vmatmul.mubr.bf16.gmra.mrb[0].mxu0 %v2248
        %v2359 = vpop.f32.mrb[0].mxu0
        %v2360 = vadd.f32 0.0, %v2359
        %v2361 = vpop.f32.mrb[0].mxu0
        %v2362 = vpop.f32.mrb[0].mxu0
        %v2363 = vadd.f32 0.0, %v2362
        %v2364 = vpop.f32.mrb[0].mxu0
        %2365 = vdwg.mxu0
        %v2374 = vunpack.c.l.b16 %v2076
        %v2375 = vunpack.c.l.b16 %v2077
        %v2376 = vunpack.c.l.b16 %v2078
        %v2377 = vunpack.c.l.b16 %v2079
        %v2378 = vunpack.c.l.b16 %v2080
        %v2379 = vunpack.c.l.b16 %v2081
        %v2380 = vunpack.c.l.b16 %v2082
        %v2381 = vunpack.c.l.b16 %v2083
        %v2382 = vpack.c.b16 %v2375, %v2374
        %v2383 = vpack.c.b16 %v2377, %v2376
        %v2384 = vpack.c.b16 %v2379, %v2378
        %v2385 = vpack.c.b16 %v2381, %v2380
        %v2406 = vunpack.c.l.b16 %v2084
        %v2407 = vunpack.c.l.b16 %v2085
        %v2408 = vunpack.c.l.b16 %v2086
        %v2409 = vunpack.c.l.b16 %v2087
        %v2410 = vunpack.c.l.b16 %v2088
        %v2411 = vunpack.c.l.b16 %v2089
        %v2412 = vunpack.c.l.b16 %v2090
        %v2413 = vunpack.c.l.b16 %v2091
        %v2414 = vunpack.c.l.b16 %v2092
        %v2415 = vunpack.c.l.b16 %v2093
        %v2416 = vunpack.c.l.b16 %v2094
        %v2417 = vunpack.c.l.b16 %v2095
        %v2418 = vunpack.c.l.b16 %v2096
        %v2419 = vunpack.c.l.b16 %v2097
        %v2420 = vunpack.c.l.b16 %v2098
        %v2421 = vunpack.c.l.b16 %v2099
        %v2422 = vpack.c.b16 %v2407, %v2406
        %v2423 = vpack.c.b16 %v2409, %v2408
        %v2424 = vpack.c.b16 %v2411, %v2410
        %v2425 = vpack.c.b16 %v2413, %v2412
        %v2426 = vpack.c.b16 %v2415, %v2414
        %v2427 = vpack.c.b16 %v2417, %v2416
        %v2428 = vpack.c.b16 %v2419, %v2418
        %v2429 = vpack.c.b16 %v2421, %v2420
        %2438 = vmatprep.subr.bf16.mxu0 0
        %2439 = vmatpush1.bf16.msra.mxu0 %v2422
        %2440 = vmatprep.subr.bf16.mxu0 0
        %2441 = vmatpush1.bf16.msra.mxu0 %v2423
        %2442 = vmatprep.subr.bf16.mxu0 0
        %2443 = vmatpush1.bf16.msra.mxu0 %v2424
        %2444 = vmatprep.subr.bf16.mxu0 0
        %2445 = vmatpush1.bf16.msra.mxu0 %v2425
        %2446 = vmatprep.subr.bf16.mxu0 0
        %2447 = vmatpush1.bf16.msra.mxu0 %v2426
        %2448 = vmatprep.subr.bf16.mxu0 0
        %2449 = vmatpush1.bf16.msra.mxu0 %v2427
        %2450 = vmatprep.subr.bf16.mxu0 0
        %2451 = vmatpush1.bf16.msra.mxu0 %v2428
        %2452 = vmatprep.subr.bf16.mxu0 0
        %2453 = vmatpush1.bf16.msra.mxu0 %v2429
        %2454 = vmatprep.subr.bf16.mxu0 0
        %2455 = vmatpush1.bf16.msra.mxu0 0
        %2456 = vmatprep.subr.bf16.mxu0 0
        %2457 = vmatpush1.bf16.msra.mxu0 0
        %2458 = vmatprep.subr.bf16.mxu0 0
        %2459 = vmatpush1.bf16.msra.mxu0 0
        %2460 = vmatprep.subr.bf16.mxu0 0
        %2461 = vmatpush1.bf16.msra.mxu0 0
        %2462 = vmatprep.subr.bf16.mxu0 0
        %2463 = vmatpush1.bf16.msra.mxu0 0
        %2464 = vmatprep.subr.bf16.mxu0 0
        %2465 = vmatpush1.bf16.msra.mxu0 0
        %2466 = vmatprep.subr.bf16.mxu0 0
        %2467 = vmatpush1.bf16.msra.mxu0 0
        %2468 = vmatprep.subr.bf16.mxu0 0
        %2469 = vmatpush1.bf16.msra.mxu0 0
        %2470 = vmatprep.mubr.bf16.mxu0 0
        %2471 = vmatmul.mubr.bf16.gmra.mrb[0].mxu0 %v2382
        %v2472 = vpop.f32.mrb[0].mxu0
        %v2473 = vadd.f32 %v2336, %v2472
        %v2474 = vpop.f32.mrb[0].mxu0
        %v2475 = vpop.f32.mrb[0].mxu0
        %v2476 = vadd.f32 %v2339, %v2475
        %v2477 = vpop.f32.mrb[0].mxu0
        %2478 = vmatprep.mubr.bf16.mxu0 0
        %2479 = vmatmul.mubr.bf16.gmra.mrb[0].mxu0 %v2383
        %v2480 = vpop.f32.mrb[0].mxu0
        %v2481 = vadd.f32 %v2344, %v2480
        %v2482 = vpop.f32.mrb[0].mxu0
        %v2483 = vpop.f32.mrb[0].mxu0
        %v2484 = vadd.f32 %v2347, %v2483
        %v2485 = vpop.f32.mrb[0].mxu0
        %2486 = vmatprep.mubr.bf16.mxu0 0
        %2487 = vmatmul.mubr.bf16.gmra.mrb[0].mxu0 %v2384
        %v2488 = vpop.f32.mrb[0].mxu0
        %v2489 = vadd.f32 %v2352, %v2488
        %v2490 = vpop.f32.mrb[0].mxu0
        %v2491 = vpop.f32.mrb[0].mxu0
        %v2492 = vadd.f32 %v2355, %v2491
        %v2493 = vpop.f32.mrb[0].mxu0
        %2494 = vmatprep.mubr.bf16.mxu0 0
        %2495 = vmatmul.mubr.bf16.gmra.mrb[0].mxu0 %v2385
        %v2496 = vpop.f32.mrb[0].mxu0
        %v2497 = vadd.f32 %v2360, %v2496
        %v2498 = vpop.f32.mrb[0].mxu0
        %v2499 = vpop.f32.mrb[0].mxu0
        %v2500 = vadd.f32 %v2363, %v2499
        %v2501 = vpop.f32.mrb[0].mxu0
        %2502 = vdwg.mxu0
        %v2503 = vld [vmem:[#allocation2] sm:$0xe]
        %v2504 = vld [vmem:[#allocation2 + $0x8] sm:$0xe]
        %v2505 = vld [vmem:[#allocation2 + $0x10] sm:$0xe]
        %v2506 = vld [vmem:[#allocation2 + $0x18] sm:$0xe]
        %v2507 = vld [vmem:[#allocation2 + $0x20] sm:$0xe]
        %v2508 = vld [vmem:[#allocation2 + $0x28] sm:$0xe]
        %v2509 = vld [vmem:[#allocation2 + $0x30] sm:$0xe]
        %v2510 = vld [vmem:[#allocation2 + $0x38] sm:$0xe]
        %vm2527 = vcmask 1042432
        %vm2528 = vcmask 1046532
        %vm2529 = vmor %vm2527, %vm2528
        %v2530 = vrot.slane %v2503, 5
        %v2531 = vrot.slane %v2530, 4
        %v2532 = vrot.slane %v2100, 5
        %v2533 = vsel %vm2529, %v2531, %v2532
        %v2534 = vrot.slane %v2504, 5
        %v2535 = vrot.slane %v2534, 4
        %v2536 = vrot.slane %v2101, 5
        %v2537 = vsel %vm2529, %v2535, %v2536
        %v2538 = vrot.slane %v2505, 5
        %v2539 = vrot.slane %v2538, 4
        %v2540 = vrot.slane %v2102, 5
        %v2541 = vsel %vm2529, %v2539, %v2540
        %v2542 = vrot.slane %v2506, 5
        %v2543 = vrot.slane %v2542, 4
        %v2544 = vrot.slane %v2103, 5
        %v2545 = vsel %vm2529, %v2543, %v2544
        %v2546 = vrot.slane %v2507, 5
        %v2547 = vrot.slane %v2546, 4
        %v2548 = vrot.slane %v2104, 5
        %v2549 = vsel %vm2529, %v2547, %v2548
        %v2550 = vrot.slane %v2508, 5
        %v2551 = vrot.slane %v2550, 4
        %v2552 = vrot.slane %v2105, 5
        %v2553 = vsel %vm2529, %v2551, %v2552
        %v2554 = vrot.slane %v2509, 5
        %v2555 = vrot.slane %v2554, 4
        %v2556 = vrot.slane %v2106, 5
        %v2557 = vsel %vm2529, %v2555, %v2556
        %v2558 = vrot.slane %v2510, 5
        %v2559 = vrot.slane %v2558, 4
        %v2560 = vrot.slane %v2107, 5
        %v2561 = vsel %vm2529, %v2559, %v2560
        %s2562 = scalar_lea.vmem %s4, 128
        %v2563 = vld [vmem:[%s2562] sm:$0xf]
        %v2564 = vld [vmem:[%s2562 + $0x4] sm:$0xf]
        %v2565 = vld [vmem:[%s2562 + $0x8] sm:$0xf]
        %v2566 = vld [vmem:[%s2562 + $0xc] sm:$0xf]
        %v2567 = vld [vmem:[%s2562 + $0x10] sm:$0xf]
        %v2568 = vld [vmem:[%s2562 + $0x14] sm:$0xf]
        %v2569 = vld [vmem:[%s2562 + $0x18] sm:$0xf]
        %v2570 = vld [vmem:[%s2562 + $0x1c] sm:$0xf]
        %v2571 = vld [vmem:[%s2562 + $0x20] sm:$0xf]
        %v2572 = vld [vmem:[%s2562 + $0x24] sm:$0xf]
        %v2573 = vld [vmem:[%s2562 + $0x28] sm:$0xf]
        %v2574 = vld [vmem:[%s2562 + $0x2c] sm:$0xf]
        %v2575 = vld [vmem:[%s2562 + $0x30] sm:$0xf]
        %v2576 = vld [vmem:[%s2562 + $0x34] sm:$0xf]
        %v2577 = vld [vmem:[%s2562 + $0x38] sm:$0xf]
        %v2578 = vld [vmem:[%s2562 + $0x3c] sm:$0xf]
        %v2579 = vunpack.c.l.b16 %v2533
        %v2580 = vunpack.c.l.b16 %v2537
        %v2581 = vunpack.c.l.b16 %v2541
        %v2582 = vunpack.c.l.b16 %v2545
        %v2583 = vunpack.c.l.b16 %v2549
        %v2584 = vunpack.c.l.b16 %v2553
        %v2585 = vunpack.c.l.b16 %v2557
        %v2586 = vunpack.c.l.b16 %v2561
        %v2587 = vpack.c.b16 %v2580, %v2579
        %v2588 = vpack.c.b16 %v2582, %v2581
        %v2589 = vpack.c.b16 %v2584, %v2583
        %v2590 = vpack.c.b16 %v2586, %v2585
        %v2611 = vunpack.c.l.b16 %v2563
        %v2612 = vunpack.c.l.b16 %v2564
        %v2613 = vunpack.c.l.b16 %v2565
        %v2614 = vunpack.c.l.b16 %v2566
        %v2615 = vunpack.c.l.b16 %v2567
        %v2616 = vunpack.c.l.b16 %v2568
        %v2617 = vunpack.c.l.b16 %v2569
        %v2618 = vunpack.c.l.b16 %v2570
        %v2619 = vunpack.c.l.b16 %v2571
        %v2620 = vunpack.c.l.b16 %v2572
        %v2621 = vunpack.c.l.b16 %v2573
        %v2622 = vunpack.c.l.b16 %v2574
        %v2623 = vunpack.c.l.b16 %v2575
        %v2624 = vunpack.c.l.b16 %v2576
        %v2625 = vunpack.c.l.b16 %v2577
        %v2626 = vunpack.c.l.b16 %v2578
        %v2627 = vpack.c.b16 %v2612, %v2611
        %v2628 = vpack.c.b16 %v2614, %v2613
        %v2629 = vpack.c.b16 %v2616, %v2615
        %v2630 = vpack.c.b16 %v2618, %v2617
        %v2631 = vpack.c.b16 %v2620, %v2619
        %v2632 = vpack.c.b16 %v2622, %v2621
        %v2633 = vpack.c.b16 %v2624, %v2623
        %v2634 = vpack.c.b16 %v2626, %v2625
        %2643 = vmatprep.subr.bf16.mxu0 0
        %2644 = vmatpush1.bf16.msra.mxu0 %v2627
        %2645 = vmatprep.subr.bf16.mxu0 0
        %2646 = vmatpush1.bf16.msra.mxu0 %v2628
        %2647 = vmatprep.subr.bf16.mxu0 0
        %2648 = vmatpush1.bf16.msra.mxu0 %v2629
        %2649 = vmatprep.subr.bf16.mxu0 0
        %2650 = vmatpush1.bf16.msra.mxu0 %v2630
        %2651 = vmatprep.subr.bf16.mxu0 0
        %2652 = vmatpush1.bf16.msra.mxu0 %v2631
        %2653 = vmatprep.subr.bf16.mxu0 0
        %2654 = vmatpush1.bf16.msra.mxu0 %v2632
        %2655 = vmatprep.subr.bf16.mxu0 0
        %2656 = vmatpush1.bf16.msra.mxu0 %v2633
        %2657 = vmatprep.subr.bf16.mxu0 0
        %2658 = vmatpush1.bf16.msra.mxu0 %v2634
        %2659 = vmatprep.subr.bf16.mxu0 0
        %2660 = vmatpush1.bf16.msra.mxu0 0
        %2661 = vmatprep.subr.bf16.mxu0 0
        %2662 = vmatpush1.bf16.msra.mxu0 0
        %2663 = vmatprep.subr.bf16.mxu0 0
        %2664 = vmatpush1.bf16.msra.mxu0 0
        %2665 = vmatprep.subr.bf16.mxu0 0
        %2666 = vmatpush1.bf16.msra.mxu0 0
        %2667 = vmatprep.subr.bf16.mxu0 0
        %2668 = vmatpush1.bf16.msra.mxu0 0
        %2669 = vmatprep.subr.bf16.mxu0 0
        %2670 = vmatpush1.bf16.msra.mxu0 0
        %2671 = vmatprep.subr.bf16.mxu0 0
        %2672 = vmatpush1.bf16.msra.mxu0 0
        %2673 = vmatprep.subr.bf16.mxu0 0
        %2674 = vmatpush1.bf16.msra.mxu0 0
        %2675 = vmatprep.mubr.bf16.mxu0 0
        %2676 = vmatmul.mubr.bf16.gmra.mrb[0].mxu0 %v2587
        %v2677 = vpop.f32.mrb[0].mxu0
        %v2678 = vadd.f32 0.0, %v2677
        %v2679 = vpop.f32.mrb[0].mxu0
        %v2680 = vpop.f32.mrb[0].mxu0
        %v2681 = vadd.f32 0.0, %v2680
        %v2682 = vpop.f32.mrb[0].mxu0
        %2683 = vmatprep.mubr.bf16.mxu0 0
        %2684 = vmatmul.mubr.bf16.gmra.mrb[0].mxu0 %v2588
        %v2685 = vpop.f32.mrb[0].mxu0
        %v2686 = vadd.f32 0.0, %v2685
        %v2687 = vpop.f32.mrb[0].mxu0
        %v2688 = vpop.f32.mrb[0].mxu0
        %v2689 = vadd.f32 0.0, %v2688
        %v2690 = vpop.f32.mrb[0].mxu0
        %2691 = vmatprep.mubr.bf16.mxu0 0
        %2692 = vmatmul.mubr.bf16.gmra.mrb[0].mxu0 %v2589
        %v2693 = vpop.f32.mrb[0].mxu0
        %v2694 = vadd.f32 0.0, %v2693
        %v2695 = vpop.f32.mrb[0].mxu0
        %v2696 = vpop.f32.mrb[0].mxu0
        %v2697 = vadd.f32 0.0, %v2696
        %v2698 = vpop.f32.mrb[0].mxu0
        %2699 = vmatprep.mubr.bf16.mxu0 0
        %2700 = vmatmul.mubr.bf16.gmra.mrb[0].mxu0 %v2590
        %v2701 = vpop.f32.mrb[0].mxu0
        %v2702 = vadd.f32 0.0, %v2701
        %v2703 = vpop.f32.mrb[0].mxu0
        %v2704 = vpop.f32.mrb[0].mxu0
        %v2705 = vadd.f32 0.0, %v2704
        %v2706 = vpop.f32.mrb[0].mxu0
        %2707 = vdwg.mxu0
        %v2708 = vadd.f32 %v2473, %v2678
        %v2709 = vadd.f32 %v2476, %v2681
        %v2710 = vadd.f32 %v2481, %v2686
        %v2711 = vadd.f32 %v2484, %v2689
        %v2712 = vadd.f32 %v2489, %v2694
        %v2713 = vadd.f32 %v2492, %v2697
        %v2714 = vadd.f32 %v2497, %v2702
        %v2715 = vadd.f32 %v2500, %v2705
        %v2716 = vld [vmem:[%s2021] sm:$0xf]
        %v2717 = vld [vmem:[%s2021 + $0x8] sm:$0xf]
        %v2718 = vld [vmem:[%s2021 + $0x10] sm:$0xf]
        %v2719 = vld [vmem:[%s2021 + $0x18] sm:$0xf]
        %v2720 = vld [vmem:[%s2021 + $0x20] sm:$0xf]
        %v2721 = vld [vmem:[%s2021 + $0x28] sm:$0xf]
        %v2722 = vld [vmem:[%s2021 + $0x30] sm:$0xf]
        %v2723 = vld [vmem:[%s2021 + $0x38] sm:$0xf]
        %s2724 = scalar_lea.vmem %s4, 192
        %v2725 = vld [vmem:[%s2724] sm:$0xf]
        %v2726 = vld [vmem:[%s2724 + $0x4] sm:$0xf]
        %v2727 = vld [vmem:[%s2724 + $0x8] sm:$0xf]
        %v2728 = vld [vmem:[%s2724 + $0xc] sm:$0xf]
        %v2729 = vld [vmem:[%s2724 + $0x10] sm:$0xf]
        %v2730 = vld [vmem:[%s2724 + $0x14] sm:$0xf]
        %v2731 = vld [vmem:[%s2724 + $0x18] sm:$0xf]
        %v2732 = vld [vmem:[%s2724 + $0x1c] sm:$0xf]
        %v2733 = vld [vmem:[%s2724 + $0x20] sm:$0xf]
        %v2734 = vld [vmem:[%s2724 + $0x24] sm:$0xf]
        %v2735 = vld [vmem:[%s2724 + $0x28] sm:$0xf]
        %v2736 = vld [vmem:[%s2724 + $0x2c] sm:$0xf]
        %v2737 = vld [vmem:[%s2724 + $0x30] sm:$0xf]
        %v2738 = vld [vmem:[%s2724 + $0x34] sm:$0xf]
        %v2739 = vld [vmem:[%s2724 + $0x38] sm:$0xf]
        %v2740 = vld [vmem:[%s2724 + $0x3c] sm:$0xf]
        %v2749 = vunpack.c.l.b16 %v2716
        %v2750 = vunpack.c.l.b16 %v2717
        %v2751 = vunpack.c.l.b16 %v2718
        %v2752 = vunpack.c.l.b16 %v2719
        %v2753 = vunpack.c.l.b16 %v2720
        %v2754 = vunpack.c.l.b16 %v2721
        %v2755 = vunpack.c.l.b16 %v2722
        %v2756 = vunpack.c.l.b16 %v2723
        %v2757 = vpack.c.b16 %v2750, %v2749
        %v2758 = vpack.c.b16 %v2752, %v2751
        %v2759 = vpack.c.b16 %v2754, %v2753
        %v2760 = vpack.c.b16 %v2756, %v2755
        %v2781 = vunpack.c.l.b16 %v2725
        %v2782 = vunpack.c.l.b16 %v2726
        %v2783 = vunpack.c.l.b16 %v2727
        %v2784 = vunpack.c.l.b16 %v2728
        %v2785 = vunpack.c.l.b16 %v2729
        %v2786 = vunpack.c.l.b16 %v2730
        %v2787 = vunpack.c.l.b16 %v2731
        %v2788 = vunpack.c.l.b16 %v2732
        %v2789 = vunpack.c.l.b16 %v2733
        %v2790 = vunpack.c.l.b16 %v2734
        %v2791 = vunpack.c.l.b16 %v2735
        %v2792 = vunpack.c.l.b16 %v2736
        %v2793 = vunpack.c.l.b16 %v2737
        %v2794 = vunpack.c.l.b16 %v2738
        %v2795 = vunpack.c.l.b16 %v2739
        %v2796 = vunpack.c.l.b16 %v2740
        %v2797 = vpack.c.b16 %v2782, %v2781
        %v2798 = vpack.c.b16 %v2784, %v2783
        %v2799 = vpack.c.b16 %v2786, %v2785
        %v2800 = vpack.c.b16 %v2788, %v2787
        %v2801 = vpack.c.b16 %v2790, %v2789
        %v2802 = vpack.c.b16 %v2792, %v2791
        %v2803 = vpack.c.b16 %v2794, %v2793
        %v2804 = vpack.c.b16 %v2796, %v2795
        %2813 = vmatprep.subr.bf16.mxu0 0
        %2814 = vmatpush1.bf16.msra.mxu0 %v2797
        %2815 = vmatprep.subr.bf16.mxu0 0
        %2816 = vmatpush1.bf16.msra.mxu0 %v2798
        %2817 = vmatprep.subr.bf16.mxu0 0
        %2818 = vmatpush1.bf16.msra.mxu0 %v2799
        %2819 = vmatprep.subr.bf16.mxu0 0
        %2820 = vmatpush1.bf16.msra.mxu0 %v2800
        %2821 = vmatprep.subr.bf16.mxu0 0
        %2822 = vmatpush1.bf16.msra.mxu0 %v2801
        %2823 = vmatprep.subr.bf16.mxu0 0
        %2824 = vmatpush1.bf16.msra.mxu0 %v2802
        %2825 = vmatprep.subr.bf16.mxu0 0
        %2826 = vmatpush1.bf16.msra.mxu0 %v2803
        %2827 = vmatprep.subr.bf16.mxu0 0
        %2828 = vmatpush1.bf16.msra.mxu0 %v2804
        %2829 = vmatprep.subr.bf16.mxu0 0
        %2830 = vmatpush1.bf16.msra.mxu0 0
        %2831 = vmatprep.subr.bf16.mxu0 0
        %2832 = vmatpush1.bf16.msra.mxu0 0
        %2833 = vmatprep.subr.bf16.mxu0 0
        %2834 = vmatpush1.bf16.msra.mxu0 0
        %2835 = vmatprep.subr.bf16.mxu0 0
        %2836 = vmatpush1.bf16.msra.mxu0 0
        %2837 = vmatprep.subr.bf16.mxu0 0
        %2838 = vmatpush1.bf16.msra.mxu0 0
        %2839 = vmatprep.subr.bf16.mxu0 0
        %2840 = vmatpush1.bf16.msra.mxu0 0
        %2841 = vmatprep.subr.bf16.mxu0 0
        %2842 = vmatpush1.bf16.msra.mxu0 0
        %2843 = vmatprep.subr.bf16.mxu0 0
        %2844 = vmatpush1.bf16.msra.mxu0 0
        %2845 = vmatprep.mubr.bf16.mxu0 0
        %2846 = vmatmul.mubr.bf16.gmra.mrb[0].mxu0 %v2757
        %v2847 = vpop.f32.mrb[0].mxu0
        %v2848 = vadd.f32 0.0, %v2847
        %v2849 = vpop.f32.mrb[0].mxu0
        %v2850 = vpop.f32.mrb[0].mxu0
        %v2851 = vadd.f32 0.0, %v2850
        %v2852 = vpop.f32.mrb[0].mxu0
        %2853 = vmatprep.mubr.bf16.mxu0 0
        %2854 = vmatmul.mubr.bf16.gmra.mrb[0].mxu0 %v2758
        %v2855 = vpop.f32.mrb[0].mxu0
        %v2856 = vadd.f32 0.0, %v2855
        %v2857 = vpop.f32.mrb[0].mxu0
        %v2858 = vpop.f32.mrb[0].mxu0
        %v2859 = vadd.f32 0.0, %v2858
        %v2860 = vpop.f32.mrb[0].mxu0
        %2861 = vmatprep.mubr.bf16.mxu0 0
        %2862 = vmatmul.mubr.bf16.gmra.mrb[0].mxu0 %v2759
        %v2863 = vpop.f32.mrb[0].mxu0
        %v2864 = vadd.f32 0.0, %v2863
        %v2865 = vpop.f32.mrb[0].mxu0
        %v2866 = vpop.f32.mrb[0].mxu0
        %v2867 = vadd.f32 0.0, %v2866
        %v2868 = vpop.f32.mrb[0].mxu0
        %2869 = vmatprep.mubr.bf16.mxu0 0
        %2870 = vmatmul.mubr.bf16.gmra.mrb[0].mxu0 %v2760
        %v2871 = vpop.f32.mrb[0].mxu0
        %v2872 = vadd.f32 0.0, %v2871
        %v2873 = vpop.f32.mrb[0].mxu0
        %v2874 = vpop.f32.mrb[0].mxu0
        %v2875 = vadd.f32 0.0, %v2874
        %v2876 = vpop.f32.mrb[0].mxu0
        %2877 = vdwg.mxu0
        %v2878 = vadd.f32 %v2708, %v2848
        %v2879 = vadd.f32 %v2709, %v2851
        %v2880 = vadd.f32 %v2710, %v2856
        %v2881 = vadd.f32 %v2711, %v2859
        %v2882 = vadd.f32 %v2712, %v2864
        %v2883 = vadd.f32 %v2713, %v2867
        %v2884 = vadd.f32 %v2714, %v2872
        %v2885 = vadd.f32 %v2715, %v2875
        %v2886 = vld [vmem:[%s2021] sm:$0xf]
        %v2887 = vld [vmem:[%s2021 + $0x4] sm:$0x1]
        %v2888 = vld [vmem:[%s2021 + $0x8] sm:$0xf]
        %v2889 = vld [vmem:[%s2021 + $0xc] sm:$0x1]
        %v2890 = vld [vmem:[%s2021 + $0x10] sm:$0xf]
        %v2891 = vld [vmem:[%s2021 + $0x14] sm:$0x1]
        %v2892 = vld [vmem:[%s2021 + $0x18] sm:$0xf]
        %v2893 = vld [vmem:[%s2021 + $0x1c] sm:$0x1]
        %v2894 = vld [vmem:[%s2021 + $0x20] sm:$0xf]
        %v2895 = vld [vmem:[%s2021 + $0x24] sm:$0x1]
        %v2896 = vld [vmem:[%s2021 + $0x28] sm:$0xf]
        %v2897 = vld [vmem:[%s2021 + $0x2c] sm:$0x1]
        %v2898 = vld [vmem:[%s2021 + $0x30] sm:$0xf]
        %v2899 = vld [vmem:[%s2021 + $0x34] sm:$0x1]
        %v2900 = vld [vmem:[%s2021 + $0x38] sm:$0xf]
        %v2901 = vld [vmem:[%s2021 + $0x3c] sm:$0x1]
        %v2903 = vshrl.u32 %v2886, 16
        %v2905 = vrot.slane %v2903, 4
        %v2906 = vshll.u32 %v2886, 16
        %v2908 = vrot.slane %v2906, 5
        %v2909 = vor.u32 %v2905, %v2908
        %v2910 = vrot.slane %v2909, 4
        %v2912 = vshll.u32 %v2887, 16
        %v2914 = vrot.slane %v2912, 5
        %v2915 = vsel %vm636, %v2910, %v2914
        %v2917 = vshrl.u32 %v2888, 16
        %v2919 = vrot.slane %v2917, 4
        %v2920 = vshll.u32 %v2888, 16
        %v2922 = vrot.slane %v2920, 5
        %v2923 = vor.u32 %v2919, %v2922
        %v2924 = vrot.slane %v2923, 4
        %v2926 = vshll.u32 %v2889, 16
        %v2928 = vrot.slane %v2926, 5
        %v2929 = vsel %vm636, %v2924, %v2928
        %v2931 = vshrl.u32 %v2890, 16
        %v2933 = vrot.slane %v2931, 4
        %v2934 = vshll.u32 %v2890, 16
        %v2936 = vrot.slane %v2934, 5
        %v2937 = vor.u32 %v2933, %v2936
        %v2938 = vrot.slane %v2937, 4
        %v2940 = vshll.u32 %v2891, 16
        %v2942 = vrot.slane %v2940, 5
        %v2943 = vsel %vm636, %v2938, %v2942
        %v2945 = vshrl.u32 %v2892, 16
        %v2947 = vrot.slane %v2945, 4
        %v2948 = vshll.u32 %v2892, 16
        %v2950 = vrot.slane %v2948, 5
        %v2951 = vor.u32 %v2947, %v2950
        %v2952 = vrot.slane %v2951, 4
        %v2954 = vshll.u32 %v2893, 16
        %v2956 = vrot.slane %v2954, 5
        %v2957 = vsel %vm636, %v2952, %v2956
        %v2959 = vshrl.u32 %v2894, 16
        %v2961 = vrot.slane %v2959, 4
        %v2962 = vshll.u32 %v2894, 16
        %v2964 = vrot.slane %v2962, 5
        %v2965 = vor.u32 %v2961, %v2964
        %v2966 = vrot.slane %v2965, 4
        %v2968 = vshll.u32 %v2895, 16
        %v2970 = vrot.slane %v2968, 5
        %v2971 = vsel %vm636, %v2966, %v2970
        %v2973 = vshrl.u32 %v2896, 16
        %v2975 = vrot.slane %v2973, 4
        %v2976 = vshll.u32 %v2896, 16
        %v2978 = vrot.slane %v2976, 5
        %v2979 = vor.u32 %v2975, %v2978
        %v2980 = vrot.slane %v2979, 4
        %v2982 = vshll.u32 %v2897, 16
        %v2984 = vrot.slane %v2982, 5
        %v2985 = vsel %vm636, %v2980, %v2984
        %v2987 = vshrl.u32 %v2898, 16
        %v2989 = vrot.slane %v2987, 4
        %v2990 = vshll.u32 %v2898, 16
        %v2992 = vrot.slane %v2990, 5
        %v2993 = vor.u32 %v2989, %v2992
        %v2994 = vrot.slane %v2993, 4
        %v2996 = vshll.u32 %v2899, 16
        %v2998 = vrot.slane %v2996, 5
        %v2999 = vsel %vm636, %v2994, %v2998
        %v3001 = vshrl.u32 %v2900, 16
        %v3003 = vrot.slane %v3001, 4
        %v3004 = vshll.u32 %v2900, 16
        %v3006 = vrot.slane %v3004, 5
        %v3007 = vor.u32 %v3003, %v3006
        %v3008 = vrot.slane %v3007, 4
        %v3010 = vshll.u32 %v2901, 16
        %v3012 = vrot.slane %v3010, 5
        %v3013 = vsel %vm636, %v3008, %v3012
        %s3014 = scalar_lea.vmem %s4, 256
        %v3015 = vld [vmem:[%s3014] sm:$0xf]
        %v3016 = vld [vmem:[%s3014 + $0x4] sm:$0xf]
        %v3017 = vld [vmem:[%s3014 + $0x8] sm:$0xf]
        %v3018 = vld [vmem:[%s3014 + $0xc] sm:$0xf]
        %v3019 = vld [vmem:[%s3014 + $0x10] sm:$0xf]
        %v3020 = vld [vmem:[%s3014 + $0x14] sm:$0xf]
        %v3021 = vld [vmem:[%s3014 + $0x18] sm:$0xf]
        %v3022 = vld [vmem:[%s3014 + $0x1c] sm:$0xf]
        %v3023 = vld [vmem:[%s3014 + $0x20] sm:$0xf]
        %v3024 = vld [vmem:[%s3014 + $0x24] sm:$0xf]
        %v3025 = vld [vmem:[%s3014 + $0x28] sm:$0xf]
        %v3026 = vld [vmem:[%s3014 + $0x2c] sm:$0xf]
        %v3027 = vld [vmem:[%s3014 + $0x30] sm:$0xf]
        %v3028 = vld [vmem:[%s3014 + $0x34] sm:$0xf]
        %v3029 = vld [vmem:[%s3014 + $0x38] sm:$0xf]
        %v3030 = vld [vmem:[%s3014 + $0x3c] sm:$0xf]
        %v3031 = vunpack.c.l.b16 %v2915
        %v3032 = vunpack.c.l.b16 %v2929
        %v3033 = vunpack.c.l.b16 %v2943
        %v3034 = vunpack.c.l.b16 %v2957
        %v3035 = vunpack.c.l.b16 %v2971
        %v3036 = vunpack.c.l.b16 %v2985
        %v3037 = vunpack.c.l.b16 %v2999
        %v3038 = vunpack.c.l.b16 %v3013
        %v3039 = vpack.c.b16 %v3032, %v3031
        %v3040 = vpack.c.b16 %v3034, %v3033
        %v3041 = vpack.c.b16 %v3036, %v3035
        %v3042 = vpack.c.b16 %v3038, %v3037
        %v3063 = vunpack.c.l.b16 %v3015
        %v3064 = vunpack.c.l.b16 %v3016
        %v3065 = vunpack.c.l.b16 %v3017
        %v3066 = vunpack.c.l.b16 %v3018
        %v3067 = vunpack.c.l.b16 %v3019
        %v3068 = vunpack.c.l.b16 %v3020
        %v3069 = vunpack.c.l.b16 %v3021
        %v3070 = vunpack.c.l.b16 %v3022
        %v3071 = vunpack.c.l.b16 %v3023
        %v3072 = vunpack.c.l.b16 %v3024
        %v3073 = vunpack.c.l.b16 %v3025
        %v3074 = vunpack.c.l.b16 %v3026
        %v3075 = vunpack.c.l.b16 %v3027
        %v3076 = vunpack.c.l.b16 %v3028
        %v3077 = vunpack.c.l.b16 %v3029
        %v3078 = vunpack.c.l.b16 %v3030
        %v3079 = vpack.c.b16 %v3064, %v3063
        %v3080 = vpack.c.b16 %v3066, %v3065
        %v3081 = vpack.c.b16 %v3068, %v3067
        %v3082 = vpack.c.b16 %v3070, %v3069
        %v3083 = vpack.c.b16 %v3072, %v3071
        %v3084 = vpack.c.b16 %v3074, %v3073
        %v3085 = vpack.c.b16 %v3076, %v3075
        %v3086 = vpack.c.b16 %v3078, %v3077
        %3095 = vmatprep.subr.bf16.mxu0 0
        %3096 = vmatpush1.bf16.msra.mxu0 %v3079
        %3097 = vmatprep.subr.bf16.mxu0 0
        %3098 = vmatpush1.bf16.msra.mxu0 %v3080
        %3099 = vmatprep.subr.bf16.mxu0 0
        %3100 = vmatpush1.bf16.msra.mxu0 %v3081
        %3101 = vmatprep.subr.bf16.mxu0 0
        %3102 = vmatpush1.bf16.msra.mxu0 %v3082
        %3103 = vmatprep.subr.bf16.mxu0 0
        %3104 = vmatpush1.bf16.msra.mxu0 %v3083
        %3105 = vmatprep.subr.bf16.mxu0 0
        %3106 = vmatpush1.bf16.msra.mxu0 %v3084
        %3107 = vmatprep.subr.bf16.mxu0 0
        %3108 = vmatpush1.bf16.msra.mxu0 %v3085
        %3109 = vmatprep.subr.bf16.mxu0 0
        %3110 = vmatpush1.bf16.msra.mxu0 %v3086
        %3111 = vmatprep.subr.bf16.mxu0 0
        %3112 = vmatpush1.bf16.msra.mxu0 0
        %3113 = vmatprep.subr.bf16.mxu0 0
        %3114 = vmatpush1.bf16.msra.mxu0 0
        %3115 = vmatprep.subr.bf16.mxu0 0
        %3116 = vmatpush1.bf16.msra.mxu0 0
        %3117 = vmatprep.subr.bf16.mxu0 0
        %3118 = vmatpush1.bf16.msra.mxu0 0
        %3119 = vmatprep.subr.bf16.mxu0 0
        %3120 = vmatpush1.bf16.msra.mxu0 0
        %3121 = vmatprep.subr.bf16.mxu0 0
        %3122 = vmatpush1.bf16.msra.mxu0 0
        %3123 = vmatprep.subr.bf16.mxu0 0
        %3124 = vmatpush1.bf16.msra.mxu0 0
        %3125 = vmatprep.subr.bf16.mxu0 0
        %3126 = vmatpush1.bf16.msra.mxu0 0
        %3127 = vmatprep.mubr.bf16.mxu0 0
        %3128 = vmatmul.mubr.bf16.gmra.mrb[0].mxu0 %v3039
        %v3129 = vpop.f32.mrb[0].mxu0
        %v3130 = vadd.f32 0.0, %v3129
        %v3131 = vpop.f32.mrb[0].mxu0
        %v3132 = vpop.f32.mrb[0].mxu0
        %v3133 = vadd.f32 0.0, %v3132
        %v3134 = vpop.f32.mrb[0].mxu0
        %3135 = vmatprep.mubr.bf16.mxu0 0
        %3136 = vmatmul.mubr.bf16.gmra.mrb[0].mxu0 %v3040
        %v3137 = vpop.f32.mrb[0].mxu0
        %v3138 = vadd.f32 0.0, %v3137
        %v3139 = vpop.f32.mrb[0].mxu0
        %v3140 = vpop.f32.mrb[0].mxu0
        %v3141 = vadd.f32 0.0, %v3140
        %v3142 = vpop.f32.mrb[0].mxu0
        %3143 = vmatprep.mubr.bf16.mxu0 0
        %3144 = vmatmul.mubr.bf16.gmra.mrb[0].mxu0 %v3041
        %v3145 = vpop.f32.mrb[0].mxu0
        %v3146 = vadd.f32 0.0, %v3145
        %v3147 = vpop.f32.mrb[0].mxu0
        %v3148 = vpop.f32.mrb[0].mxu0
        %v3149 = vadd.f32 0.0, %v3148
        %v3150 = vpop.f32.mrb[0].mxu0
        %3151 = vmatprep.mubr.bf16.mxu0 0
        %3152 = vmatmul.mubr.bf16.gmra.mrb[0].mxu0 %v3042
        %v3153 = vpop.f32.mrb[0].mxu0
        %v3154 = vadd.f32 0.0, %v3153
        %v3155 = vpop.f32.mrb[0].mxu0
        %v3156 = vpop.f32.mrb[0].mxu0
        %v3157 = vadd.f32 0.0, %v3156
        %v3158 = vpop.f32.mrb[0].mxu0
        %3159 = vdwg.mxu0
        %v3160 = vadd.f32 %v2878, %v3130
        %v3161 = vadd.f32 %v2879, %v3133
        %v3162 = vadd.f32 %v2880, %v3138
        %v3163 = vadd.f32 %v2881, %v3141
        %v3164 = vadd.f32 %v2882, %v3146
        %v3165 = vadd.f32 %v2883, %v3149
        %v3166 = vadd.f32 %v2884, %v3154
        %v3167 = vadd.f32 %v2885, %v3157
        %v3168 = vld [vmem:[%s2021] sm:$0xe]
        %v3169 = vld [vmem:[%s2021 + $0x8] sm:$0xe]
        %v3170 = vld [vmem:[%s2021 + $0x10] sm:$0xe]
        %v3171 = vld [vmem:[%s2021 + $0x18] sm:$0xe]
        %v3172 = vld [vmem:[%s2021 + $0x20] sm:$0xe]
        %v3173 = vld [vmem:[%s2021 + $0x28] sm:$0xe]
        %v3174 = vld [vmem:[%s2021 + $0x30] sm:$0xe]
        %v3175 = vld [vmem:[%s2021 + $0x38] sm:$0xe]
        %v3192 = vrot.slane %v3168, 5
        %v3193 = vrot.slane %v3192, 4
        %v3194 = vrot.slane %v2887, 5
        %v3195 = vsel %vm2529, %v3193, %v3194
        %v3196 = vrot.slane %v3169, 5
        %v3197 = vrot.slane %v3196, 4
        %v3198 = vrot.slane %v2889, 5
        %v3199 = vsel %vm2529, %v3197, %v3198
        %v3200 = vrot.slane %v3170, 5
        %v3201 = vrot.slane %v3200, 4
        %v3202 = vrot.slane %v2891, 5
        %v3203 = vsel %vm2529, %v3201, %v3202
        %v3204 = vrot.slane %v3171, 5
        %v3205 = vrot.slane %v3204, 4
        %v3206 = vrot.slane %v2893, 5
        %v3207 = vsel %vm2529, %v3205, %v3206
        %v3208 = vrot.slane %v3172, 5
        %v3209 = vrot.slane %v3208, 4
        %v3210 = vrot.slane %v2895, 5
        %v3211 = vsel %vm2529, %v3209, %v3210
        %v3212 = vrot.slane %v3173, 5
        %v3213 = vrot.slane %v3212, 4
        %v3214 = vrot.slane %v2897, 5
        %v3215 = vsel %vm2529, %v3213, %v3214
        %v3216 = vrot.slane %v3174, 5
        %v3217 = vrot.slane %v3216, 4
        %v3218 = vrot.slane %v2899, 5
        %v3219 = vsel %vm2529, %v3217, %v3218
        %v3220 = vrot.slane %v3175, 5
        %v3221 = vrot.slane %v3220, 4
        %v3222 = vrot.slane %v2901, 5
        %v3223 = vsel %vm2529, %v3221, %v3222
        %s3224 = scalar_lea.vmem %s4, 320
        %v3225 = vld [vmem:[%s3224] sm:$0xf]
        %v3226 = vld [vmem:[%s3224 + $0x4] sm:$0xf]
        %v3227 = vld [vmem:[%s3224 + $0x8] sm:$0xf]
        %v3228 = vld [vmem:[%s3224 + $0xc] sm:$0xf]
        %v3229 = vld [vmem:[%s3224 + $0x10] sm:$0xf]
        %v3230 = vld [vmem:[%s3224 + $0x14] sm:$0xf]
        %v3231 = vld [vmem:[%s3224 + $0x18] sm:$0xf]
        %v3232 = vld [vmem:[%s3224 + $0x1c] sm:$0xf]
        %v3233 = vld [vmem:[%s3224 + $0x20] sm:$0xf]
        %v3234 = vld [vmem:[%s3224 + $0x24] sm:$0xf]
        %v3235 = vld [vmem:[%s3224 + $0x28] sm:$0xf]
        %v3236 = vld [vmem:[%s3224 + $0x2c] sm:$0xf]
        %v3237 = vld [vmem:[%s3224 + $0x30] sm:$0xf]
        %v3238 = vld [vmem:[%s3224 + $0x34] sm:$0xf]
        %v3239 = vld [vmem:[%s3224 + $0x38] sm:$0xf]
        %v3240 = vld [vmem:[%s3224 + $0x3c] sm:$0xf]
        %v3241 = vunpack.c.l.b16 %v3195
        %v3242 = vunpack.c.l.b16 %v3199
        %v3243 = vunpack.c.l.b16 %v3203
        %v3244 = vunpack.c.l.b16 %v3207
        %v3245 = vunpack.c.l.b16 %v3211
        %v3246 = vunpack.c.l.b16 %v3215
        %v3247 = vunpack.c.l.b16 %v3219
        %v3248 = vunpack.c.l.b16 %v3223
        %v3249 = vpack.c.b16 %v3242, %v3241
        %v3250 = vpack.c.b16 %v3244, %v3243
        %v3251 = vpack.c.b16 %v3246, %v3245
        %v3252 = vpack.c.b16 %v3248, %v3247
        %v3273 = vunpack.c.l.b16 %v3225
        %v3274 = vunpack.c.l.b16 %v3226
        %v3275 = vunpack.c.l.b16 %v3227
        %v3276 = vunpack.c.l.b16 %v3228
        %v3277 = vunpack.c.l.b16 %v3229
        %v3278 = vunpack.c.l.b16 %v3230
        %v3279 = vunpack.c.l.b16 %v3231
        %v3280 = vunpack.c.l.b16 %v3232
        %v3281 = vunpack.c.l.b16 %v3233
        %v3282 = vunpack.c.l.b16 %v3234
        %v3283 = vunpack.c.l.b16 %v3235
        %v3284 = vunpack.c.l.b16 %v3236
        %v3285 = vunpack.c.l.b16 %v3237
        %v3286 = vunpack.c.l.b16 %v3238
        %v3287 = vunpack.c.l.b16 %v3239
        %v3288 = vunpack.c.l.b16 %v3240
        %v3289 = vpack.c.b16 %v3274, %v3273
        %v3290 = vpack.c.b16 %v3276, %v3275
        %v3291 = vpack.c.b16 %v3278, %v3277
        %v3292 = vpack.c.b16 %v3280, %v3279
        %v3293 = vpack.c.b16 %v3282, %v3281
        %v3294 = vpack.c.b16 %v3284, %v3283
        %v3295 = vpack.c.b16 %v3286, %v3285
        %v3296 = vpack.c.b16 %v3288, %v3287
        %3305 = vmatprep.subr.bf16.mxu0 0
        %3306 = vmatpush1.bf16.msra.mxu0 %v3289
        %3307 = vmatprep.subr.bf16.mxu0 0
        %3308 = vmatpush1.bf16.msra.mxu0 %v3290
        %3309 = vmatprep.subr.bf16.mxu0 0
        %3310 = vmatpush1.bf16.msra.mxu0 %v3291
        %3311 = vmatprep.subr.bf16.mxu0 0
        %3312 = vmatpush1.bf16.msra.mxu0 %v3292
        %3313 = vmatprep.subr.bf16.mxu0 0
        %3314 = vmatpush1.bf16.msra.mxu0 %v3293
        %3315 = vmatprep.subr.bf16.mxu0 0
        %3316 = vmatpush1.bf16.msra.mxu0 %v3294
        %3317 = vmatprep.subr.bf16.mxu0 0
        %3318 = vmatpush1.bf16.msra.mxu0 %v3295
        %3319 = vmatprep.subr.bf16.mxu0 0
        %3320 = vmatpush1.bf16.msra.mxu0 %v3296
        %3321 = vmatprep.subr.bf16.mxu0 0
        %3322 = vmatpush1.bf16.msra.mxu0 0
        %3323 = vmatprep.subr.bf16.mxu0 0
        %3324 = vmatpush1.bf16.msra.mxu0 0
        %3325 = vmatprep.subr.bf16.mxu0 0
        %3326 = vmatpush1.bf16.msra.mxu0 0
        %3327 = vmatprep.subr.bf16.mxu0 0
        %3328 = vmatpush1.bf16.msra.mxu0 0
        %3329 = vmatprep.subr.bf16.mxu0 0
        %3330 = vmatpush1.bf16.msra.mxu0 0
        %3331 = vmatprep.subr.bf16.mxu0 0
        %3332 = vmatpush1.bf16.msra.mxu0 0
        %3333 = vmatprep.subr.bf16.mxu0 0
        %3334 = vmatpush1.bf16.msra.mxu0 0
        %3335 = vmatprep.subr.bf16.mxu0 0
        %3336 = vmatpush1.bf16.msra.mxu0 0
        %3337 = vmatprep.mubr.bf16.mxu0 0
        %3338 = vmatmul.mubr.bf16.gmra.mrb[0].mxu0 %v3249
        %v3339 = vpop.f32.mrb[0].mxu0
        %v3340 = vadd.f32 0.0, %v3339
        %v3341 = vpop.f32.mrb[0].mxu0
        %v3342 = vpop.f32.mrb[0].mxu0
        %v3343 = vadd.f32 0.0, %v3342
        %v3344 = vpop.f32.mrb[0].mxu0
        %3345 = vmatprep.mubr.bf16.mxu0 0
        %3346 = vmatmul.mubr.bf16.gmra.mrb[0].mxu0 %v3250
        %v3347 = vpop.f32.mrb[0].mxu0
        %v3348 = vadd.f32 0.0, %v3347
        %v3349 = vpop.f32.mrb[0].mxu0
        %v3350 = vpop.f32.mrb[0].mxu0
        %v3351 = vadd.f32 0.0, %v3350
        %v3352 = vpop.f32.mrb[0].mxu0
        %3353 = vmatprep.mubr.bf16.mxu0 0
        %3354 = vmatmul.mubr.bf16.gmra.mrb[0].mxu0 %v3251
        %v3355 = vpop.f32.mrb[0].mxu0
        %v3356 = vadd.f32 0.0, %v3355
        %v3357 = vpop.f32.mrb[0].mxu0
        %v3358 = vpop.f32.mrb[0].mxu0
        %v3359 = vadd.f32 0.0, %v3358
        %v3360 = vpop.f32.mrb[0].mxu0
        %3361 = vmatprep.mubr.bf16.mxu0 0
        %3362 = vmatmul.mubr.bf16.gmra.mrb[0].mxu0 %v3252
        %v3363 = vpop.f32.mrb[0].mxu0
        %v3364 = vadd.f32 0.0, %v3363
        %v3365 = vpop.f32.mrb[0].mxu0
        %v3366 = vpop.f32.mrb[0].mxu0
        %v3367 = vadd.f32 0.0, %v3366
        %v3368 = vpop.f32.mrb[0].mxu0
        %3369 = vdwg.mxu0
        %v3370 = vadd.f32 %v3160, %v3340
        %v3371 = vadd.f32 %v3161, %v3343
        %v3372 = vadd.f32 %v3162, %v3348
        %v3373 = vadd.f32 %v3163, %v3351
        %v3374 = vadd.f32 %v3164, %v3356
        %v3375 = vadd.f32 %v3165, %v3359
        %v3376 = vadd.f32 %v3166, %v3364
        %v3377 = vadd.f32 %v3167, %v3367
        %s3378 = scalar_lea.vmem [#allocation2], 16
        %v3379 = vld [vmem:[%s3378] sm:$0xf]
        %v3380 = vld [vmem:[%s3378 + $0x8] sm:$0xf]
        %v3381 = vld [vmem:[%s3378 + $0x10] sm:$0xf]
        %v3382 = vld [vmem:[%s3378 + $0x18] sm:$0xf]
        %v3383 = vld [vmem:[%s3378 + $0x20] sm:$0xf]
        %v3384 = vld [vmem:[%s3378 + $0x28] sm:$0xf]
        %v3385 = vld [vmem:[%s3378 + $0x30] sm:$0xf]
        %v3386 = vld [vmem:[%s3378 + $0x38] sm:$0xf]
        %s3387 = scalar_lea.vmem %s4, 384
        %v3388 = vld [vmem:[%s3387] sm:$0xf]
        %v3389 = vld [vmem:[%s3387 + $0x4] sm:$0xf]
        %v3390 = vld [vmem:[%s3387 + $0x8] sm:$0xf]
        %v3391 = vld [vmem:[%s3387 + $0xc] sm:$0xf]
        %v3392 = vld [vmem:[%s3387 + $0x10] sm:$0xf]
        %v3393 = vld [vmem:[%s3387 + $0x14] sm:$0xf]
        %v3394 = vld [vmem:[%s3387 + $0x18] sm:$0xf]
        %v3395 = vld [vmem:[%s3387 + $0x1c] sm:$0xf]
        %v3396 = vld [vmem:[%s3387 + $0x20] sm:$0xf]
        %v3397 = vld [vmem:[%s3387 + $0x24] sm:$0xf]
        %v3398 = vld [vmem:[%s3387 + $0x28] sm:$0xf]
        %v3399 = vld [vmem:[%s3387 + $0x2c] sm:$0xf]
        %v3400 = vld [vmem:[%s3387 + $0x30] sm:$0xf]
        %v3401 = vld [vmem:[%s3387 + $0x34] sm:$0xf]
        %v3402 = vld [vmem:[%s3387 + $0x38] sm:$0xf]
        %v3403 = vld [vmem:[%s3387 + $0x3c] sm:$0xf]
        %v3412 = vunpack.c.l.b16 %v3379
        %v3413 = vunpack.c.l.b16 %v3380
        %v3414 = vunpack.c.l.b16 %v3381
        %v3415 = vunpack.c.l.b16 %v3382
        %v3416 = vunpack.c.l.b16 %v3383
        %v3417 = vunpack.c.l.b16 %v3384
        %v3418 = vunpack.c.l.b16 %v3385
        %v3419 = vunpack.c.l.b16 %v3386
        %v3420 = vpack.c.b16 %v3413, %v3412
        %v3421 = vpack.c.b16 %v3415, %v3414
        %v3422 = vpack.c.b16 %v3417, %v3416
        %v3423 = vpack.c.b16 %v3419, %v3418
        %v3444 = vunpack.c.l.b16 %v3388
        %v3445 = vunpack.c.l.b16 %v3389
        %v3446 = vunpack.c.l.b16 %v3390
        %v3447 = vunpack.c.l.b16 %v3391
        %v3448 = vunpack.c.l.b16 %v3392
        %v3449 = vunpack.c.l.b16 %v3393
        %v3450 = vunpack.c.l.b16 %v3394
        %v3451 = vunpack.c.l.b16 %v3395
        %v3452 = vunpack.c.l.b16 %v3396
        %v3453 = vunpack.c.l.b16 %v3397
        %v3454 = vunpack.c.l.b16 %v3398
        %v3455 = vunpack.c.l.b16 %v3399
        %v3456 = vunpack.c.l.b16 %v3400
        %v3457 = vunpack.c.l.b16 %v3401
        %v3458 = vunpack.c.l.b16 %v3402
        %v3459 = vunpack.c.l.b16 %v3403
        %v3460 = vpack.c.b16 %v3445, %v3444
        %v3461 = vpack.c.b16 %v3447, %v3446
        %v3462 = vpack.c.b16 %v3449, %v3448
        %v3463 = vpack.c.b16 %v3451, %v3450
        %v3464 = vpack.c.b16 %v3453, %v3452
        %v3465 = vpack.c.b16 %v3455, %v3454
        %v3466 = vpack.c.b16 %v3457, %v3456
        %v3467 = vpack.c.b16 %v3459, %v3458
        %3476 = vmatprep.subr.bf16.mxu0 0
        %3477 = vmatpush1.bf16.msra.mxu0 %v3460
        %3478 = vmatprep.subr.bf16.mxu0 0
        %3479 = vmatpush1.bf16.msra.mxu0 %v3461
        %3480 = vmatprep.subr.bf16.mxu0 0
        %3481 = vmatpush1.bf16.msra.mxu0 %v3462
        %3482 = vmatprep.subr.bf16.mxu0 0
        %3483 = vmatpush1.bf16.msra.mxu0 %v3463
        %3484 = vmatprep.subr.bf16.mxu0 0
        %3485 = vmatpush1.bf16.msra.mxu0 %v3464
        %3486 = vmatprep.subr.bf16.mxu0 0
        %3487 = vmatpush1.bf16.msra.mxu0 %v3465
        %3488 = vmatprep.subr.bf16.mxu0 0
        %3489 = vmatpush1.bf16.msra.mxu0 %v3466
        %3490 = vmatprep.subr.bf16.mxu0 0
        %3491 = vmatpush1.bf16.msra.mxu0 %v3467
        %3492 = vmatprep.subr.bf16.mxu0 0
        %3493 = vmatpush1.bf16.msra.mxu0 0
        %3494 = vmatprep.subr.bf16.mxu0 0
        %3495 = vmatpush1.bf16.msra.mxu0 0
        %3496 = vmatprep.subr.bf16.mxu0 0
        %3497 = vmatpush1.bf16.msra.mxu0 0
        %3498 = vmatprep.subr.bf16.mxu0 0
        %3499 = vmatpush1.bf16.msra.mxu0 0
        %3500 = vmatprep.subr.bf16.mxu0 0
        %3501 = vmatpush1.bf16.msra.mxu0 0
        %3502 = vmatprep.subr.bf16.mxu0 0
        %3503 = vmatpush1.bf16.msra.mxu0 0
        %3504 = vmatprep.subr.bf16.mxu0 0
        %3505 = vmatpush1.bf16.msra.mxu0 0
        %3506 = vmatprep.subr.bf16.mxu0 0
        %3507 = vmatpush1.bf16.msra.mxu0 0
        %3508 = vmatprep.mubr.bf16.mxu0 0
        %3509 = vmatmul.mubr.bf16.gmra.mrb[0].mxu0 %v3420
        %v3510 = vpop.f32.mrb[0].mxu0
        %v3511 = vadd.f32 0.0, %v3510
        %v3512 = vpop.f32.mrb[0].mxu0
        %v3513 = vpop.f32.mrb[0].mxu0
        %v3514 = vadd.f32 0.0, %v3513
        %v3515 = vpop.f32.mrb[0].mxu0
        %3516 = vmatprep.mubr.bf16.mxu0 0
        %3517 = vmatmul.mubr.bf16.gmra.mrb[0].mxu0 %v3421
        %v3518 = vpop.f32.mrb[0].mxu0
        %v3519 = vadd.f32 0.0, %v3518
        %v3520 = vpop.f32.mrb[0].mxu0
        %v3521 = vpop.f32.mrb[0].mxu0
        %v3522 = vadd.f32 0.0, %v3521
        %v3523 = vpop.f32.mrb[0].mxu0
        %3524 = vmatprep.mubr.bf16.mxu0 0
        %3525 = vmatmul.mubr.bf16.gmra.mrb[0].mxu0 %v3422
        %v3526 = vpop.f32.mrb[0].mxu0
        %v3527 = vadd.f32 0.0, %v3526
        %v3528 = vpop.f32.mrb[0].mxu0
        %v3529 = vpop.f32.mrb[0].mxu0
        %v3530 = vadd.f32 0.0, %v3529
        %v3531 = vpop.f32.mrb[0].mxu0
        %3532 = vmatprep.mubr.bf16.mxu0 0
        %3533 = vmatmul.mubr.bf16.gmra.mrb[0].mxu0 %v3423
        %v3534 = vpop.f32.mrb[0].mxu0
        %v3535 = vadd.f32 0.0, %v3534
        %v3536 = vpop.f32.mrb[0].mxu0
        %v3537 = vpop.f32.mrb[0].mxu0
        %v3538 = vadd.f32 0.0, %v3537
        %v3539 = vpop.f32.mrb[0].mxu0
        %3540 = vdwg.mxu0
        %v3541 = vadd.f32 %v3370, %v3511
        %v3542 = vadd.f32 %v3371, %v3514
        %v3543 = vadd.f32 %v3372, %v3519
        %v3544 = vadd.f32 %v3373, %v3522
        %v3545 = vadd.f32 %v3374, %v3527
        %v3546 = vadd.f32 %v3375, %v3530
        %v3547 = vadd.f32 %v3376, %v3535
        %v3548 = vadd.f32 %v3377, %v3538
        %v3549 = vld [vmem:[%s3378] sm:$0xf]
        %v3550 = vld [vmem:[%s3378 + $0x4] sm:$0x1]
        %v3551 = vld [vmem:[%s3378 + $0x8] sm:$0xf]
        %v3552 = vld [vmem:[%s3378 + $0xc] sm:$0x1]
        %v3553 = vld [vmem:[%s3378 + $0x10] sm:$0xf]
        %v3554 = vld [vmem:[%s3378 + $0x14] sm:$0x1]
        %v3555 = vld [vmem:[%s3378 + $0x18] sm:$0xf]
        %v3556 = vld [vmem:[%s3378 + $0x1c] sm:$0x1]
        %v3557 = vld [vmem:[%s3378 + $0x20] sm:$0xf]
        %v3558 = vld [vmem:[%s3378 + $0x24] sm:$0x1]
        %v3559 = vld [vmem:[%s3378 + $0x28] sm:$0xf]
        %v3560 = vld [vmem:[%s3378 + $0x2c] sm:$0x1]
        %v3561 = vld [vmem:[%s3378 + $0x30] sm:$0xf]
        %v3562 = vld [vmem:[%s3378 + $0x34] sm:$0x1]
        %v3563 = vld [vmem:[%s3378 + $0x38] sm:$0xf]
        %v3564 = vld [vmem:[%s3378 + $0x3c] sm:$0x1]
        %v3566 = vshrl.u32 %v3549, 16
        %v3568 = vrot.slane %v3566, 4
        %v3569 = vshll.u32 %v3549, 16
        %v3571 = vrot.slane %v3569, 5
        %v3572 = vor.u32 %v3568, %v3571
        %v3573 = vrot.slane %v3572, 4
        %v3575 = vshll.u32 %v3550, 16
        %v3577 = vrot.slane %v3575, 5
        %v3578 = vsel %vm636, %v3573, %v3577
        %v3580 = vshrl.u32 %v3551, 16
        %v3582 = vrot.slane %v3580, 4
        %v3583 = vshll.u32 %v3551, 16
        %v3585 = vrot.slane %v3583, 5
        %v3586 = vor.u32 %v3582, %v3585
        %v3587 = vrot.slane %v3586, 4
        %v3589 = vshll.u32 %v3552, 16
        %v3591 = vrot.slane %v3589, 5
        %v3592 = vsel %vm636, %v3587, %v3591
        %v3594 = vshrl.u32 %v3553, 16
        %v3596 = vrot.slane %v3594, 4
        %v3597 = vshll.u32 %v3553, 16
        %v3599 = vrot.slane %v3597, 5
        %v3600 = vor.u32 %v3596, %v3599
        %v3601 = vrot.slane %v3600, 4
        %v3603 = vshll.u32 %v3554, 16
        %v3605 = vrot.slane %v3603, 5
        %v3606 = vsel %vm636, %v3601, %v3605
        %v3608 = vshrl.u32 %v3555, 16
        %v3610 = vrot.slane %v3608, 4
        %v3611 = vshll.u32 %v3555, 16
        %v3613 = vrot.slane %v3611, 5
        %v3614 = vor.u32 %v3610, %v3613
        %v3615 = vrot.slane %v3614, 4
        %v3617 = vshll.u32 %v3556, 16
        %v3619 = vrot.slane %v3617, 5
        %v3620 = vsel %vm636, %v3615, %v3619
        %v3622 = vshrl.u32 %v3557, 16
        %v3624 = vrot.slane %v3622, 4
        %v3625 = vshll.u32 %v3557, 16
        %v3627 = vrot.slane %v3625, 5
        %v3628 = vor.u32 %v3624, %v3627
        %v3629 = vrot.slane %v3628, 4
        %v3631 = vshll.u32 %v3558, 16
        %v3633 = vrot.slane %v3631, 5
        %v3634 = vsel %vm636, %v3629, %v3633
        %v3636 = vshrl.u32 %v3559, 16
        %v3638 = vrot.slane %v3636, 4
        %v3639 = vshll.u32 %v3559, 16
        %v3641 = vrot.slane %v3639, 5
        %v3642 = vor.u32 %v3638, %v3641
        %v3643 = vrot.slane %v3642, 4
        %v3645 = vshll.u32 %v3560, 16
        %v3647 = vrot.slane %v3645, 5
        %v3648 = vsel %vm636, %v3643, %v3647
        %v3650 = vshrl.u32 %v3561, 16
        %v3652 = vrot.slane %v3650, 4
        %v3653 = vshll.u32 %v3561, 16
        %v3655 = vrot.slane %v3653, 5
        %v3656 = vor.u32 %v3652, %v3655
        %v3657 = vrot.slane %v3656, 4
        %v3659 = vshll.u32 %v3562, 16
        %v3661 = vrot.slane %v3659, 5
        %v3662 = vsel %vm636, %v3657, %v3661
        %v3664 = vshrl.u32 %v3563, 16
        %v3666 = vrot.slane %v3664, 4
        %v3667 = vshll.u32 %v3563, 16
        %v3669 = vrot.slane %v3667, 5
        %v3670 = vor.u32 %v3666, %v3669
        %v3671 = vrot.slane %v3670, 4
        %v3673 = vshll.u32 %v3564, 16
        %v3675 = vrot.slane %v3673, 5
        %v3676 = vsel %vm636, %v3671, %v3675
        %s3677 = scalar_lea.vmem %s4, 448
        %v3678 = vld [vmem:[%s3677] sm:$0xf]
        %v3679 = vld [vmem:[%s3677 + $0x4] sm:$0xf]
        %v3680 = vld [vmem:[%s3677 + $0x8] sm:$0xf]
        %v3681 = vld [vmem:[%s3677 + $0xc] sm:$0xf]
        %v3682 = vld [vmem:[%s3677 + $0x10] sm:$0xf]
        %v3683 = vld [vmem:[%s3677 + $0x14] sm:$0xf]
        %v3684 = vld [vmem:[%s3677 + $0x18] sm:$0xf]
        %v3685 = vld [vmem:[%s3677 + $0x1c] sm:$0xf]
        %v3686 = vld [vmem:[%s3677 + $0x20] sm:$0xf]
        %v3687 = vld [vmem:[%s3677 + $0x24] sm:$0xf]
        %v3688 = vld [vmem:[%s3677 + $0x28] sm:$0xf]
        %v3689 = vld [vmem:[%s3677 + $0x2c] sm:$0xf]
        %v3690 = vld [vmem:[%s3677 + $0x30] sm:$0xf]
        %v3691 = vld [vmem:[%s3677 + $0x34] sm:$0xf]
        %v3692 = vld [vmem:[%s3677 + $0x38] sm:$0xf]
        %v3693 = vld [vmem:[%s3677 + $0x3c] sm:$0xf]
        %v3694 = vunpack.c.l.b16 %v3578
        %v3695 = vunpack.c.l.b16 %v3592
        %v3696 = vunpack.c.l.b16 %v3606
        %v3697 = vunpack.c.l.b16 %v3620
        %v3698 = vunpack.c.l.b16 %v3634
        %v3699 = vunpack.c.l.b16 %v3648
        %v3700 = vunpack.c.l.b16 %v3662
        %v3701 = vunpack.c.l.b16 %v3676
        %v3702 = vpack.c.b16 %v3695, %v3694
        %v3703 = vpack.c.b16 %v3697, %v3696
        %v3704 = vpack.c.b16 %v3699, %v3698
        %v3705 = vpack.c.b16 %v3701, %v3700
        %v3726 = vunpack.c.l.b16 %v3678
        %v3727 = vunpack.c.l.b16 %v3679
        %v3728 = vunpack.c.l.b16 %v3680
        %v3729 = vunpack.c.l.b16 %v3681
        %v3730 = vunpack.c.l.b16 %v3682
        %v3731 = vunpack.c.l.b16 %v3683
        %v3732 = vunpack.c.l.b16 %v3684
        %v3733 = vunpack.c.l.b16 %v3685
        %v3734 = vunpack.c.l.b16 %v3686
        %v3735 = vunpack.c.l.b16 %v3687
        %v3736 = vunpack.c.l.b16 %v3688
        %v3737 = vunpack.c.l.b16 %v3689
        %v3738 = vunpack.c.l.b16 %v3690
        %v3739 = vunpack.c.l.b16 %v3691
        %v3740 = vunpack.c.l.b16 %v3692
        %v3741 = vunpack.c.l.b16 %v3693
        %v3742 = vpack.c.b16 %v3727, %v3726
        %v3743 = vpack.c.b16 %v3729, %v3728
        %v3744 = vpack.c.b16 %v3731, %v3730
        %v3745 = vpack.c.b16 %v3733, %v3732
        %v3746 = vpack.c.b16 %v3735, %v3734
        %v3747 = vpack.c.b16 %v3737, %v3736
        %v3748 = vpack.c.b16 %v3739, %v3738
        %v3749 = vpack.c.b16 %v3741, %v3740
        %3758 = vmatprep.subr.bf16.mxu0 0
        %3759 = vmatpush1.bf16.msra.mxu0 %v3742
        %3760 = vmatprep.subr.bf16.mxu0 0
        %3761 = vmatpush1.bf16.msra.mxu0 %v3743
        %3762 = vmatprep.subr.bf16.mxu0 0
        %3763 = vmatpush1.bf16.msra.mxu0 %v3744
        %3764 = vmatprep.subr.bf16.mxu0 0
        %3765 = vmatpush1.bf16.msra.mxu0 %v3745
        %3766 = vmatprep.subr.bf16.mxu0 0
        %3767 = vmatpush1.bf16.msra.mxu0 %v3746
        %3768 = vmatprep.subr.bf16.mxu0 0
        %3769 = vmatpush1.bf16.msra.mxu0 %v3747
        %3770 = vmatprep.subr.bf16.mxu0 0
        %3771 = vmatpush1.bf16.msra.mxu0 %v3748
        %3772 = vmatprep.subr.bf16.mxu0 0
        %3773 = vmatpush1.bf16.msra.mxu0 %v3749
        %3774 = vmatprep.subr.bf16.mxu0 0
        %3775 = vmatpush1.bf16.msra.mxu0 0
        %3776 = vmatprep.subr.bf16.mxu0 0
        %3777 = vmatpush1.bf16.msra.mxu0 0
        %3778 = vmatprep.subr.bf16.mxu0 0
        %3779 = vmatpush1.bf16.msra.mxu0 0
        %3780 = vmatprep.subr.bf16.mxu0 0
        %3781 = vmatpush1.bf16.msra.mxu0 0
        %3782 = vmatprep.subr.bf16.mxu0 0
        %3783 = vmatpush1.bf16.msra.mxu0 0
        %3784 = vmatprep.subr.bf16.mxu0 0
        %3785 = vmatpush1.bf16.msra.mxu0 0
        %3786 = vmatprep.subr.bf16.mxu0 0
        %3787 = vmatpush1.bf16.msra.mxu0 0
        %3788 = vmatprep.subr.bf16.mxu0 0
        %3789 = vmatpush1.bf16.msra.mxu0 0
        %3790 = vmatprep.mubr.bf16.mxu0 0
        %3791 = vmatmul.mubr.bf16.gmra.mrb[0].mxu0 %v3702
        %v3792 = vpop.f32.mrb[0].mxu0
        %v3793 = vadd.f32 0.0, %v3792
        %v3794 = vpop.f32.mrb[0].mxu0
        %v3795 = vpop.f32.mrb[0].mxu0
        %v3796 = vadd.f32 0.0, %v3795
        %v3797 = vpop.f32.mrb[0].mxu0
        %3798 = vmatprep.mubr.bf16.mxu0 0
        %3799 = vmatmul.mubr.bf16.gmra.mrb[0].mxu0 %v3703
        %v3800 = vpop.f32.mrb[0].mxu0
        %v3801 = vadd.f32 0.0, %v3800
        %v3802 = vpop.f32.mrb[0].mxu0
        %v3803 = vpop.f32.mrb[0].mxu0
        %v3804 = vadd.f32 0.0, %v3803
        %v3805 = vpop.f32.mrb[0].mxu0
        %3806 = vmatprep.mubr.bf16.mxu0 0
        %3807 = vmatmul.mubr.bf16.gmra.mrb[0].mxu0 %v3704
        %v3808 = vpop.f32.mrb[0].mxu0
        %v3809 = vadd.f32 0.0, %v3808
        %v3810 = vpop.f32.mrb[0].mxu0
        %v3811 = vpop.f32.mrb[0].mxu0
        %v3812 = vadd.f32 0.0, %v3811
        %v3813 = vpop.f32.mrb[0].mxu0
        %3814 = vmatprep.mubr.bf16.mxu0 0
        %3815 = vmatmul.mubr.bf16.gmra.mrb[0].mxu0 %v3705
        %v3816 = vpop.f32.mrb[0].mxu0
        %v3817 = vadd.f32 0.0, %v3816
        %v3818 = vpop.f32.mrb[0].mxu0
        %v3819 = vpop.f32.mrb[0].mxu0
        %v3820 = vadd.f32 0.0, %v3819
        %v3821 = vpop.f32.mrb[0].mxu0
        %3822 = vdwg.mxu0
        %v3823 = vadd.f32 %v3541, %v3793
        %v3824 = vadd.f32 %v3542, %v3796
        %v3825 = vadd.f32 %v3543, %v3801
        %v3826 = vadd.f32 %v3544, %v3804
        %v3827 = vadd.f32 %v3545, %v3809
        %v3828 = vadd.f32 %v3546, %v3812
        %v3829 = vadd.f32 %v3547, %v3817
        %v3830 = vadd.f32 %v3548, %v3820
        %v3831 = vld [vmem:[%s3378] sm:$0xe]
        %v3832 = vld [vmem:[%s3378 + $0x8] sm:$0xe]
        %v3833 = vld [vmem:[%s3378 + $0x10] sm:$0xe]
        %v3834 = vld [vmem:[%s3378 + $0x18] sm:$0xe]
        %v3835 = vld [vmem:[%s3378 + $0x20] sm:$0xe]
        %v3836 = vld [vmem:[%s3378 + $0x28] sm:$0xe]
        %v3837 = vld [vmem:[%s3378 + $0x30] sm:$0xe]
        %v3838 = vld [vmem:[%s3378 + $0x38] sm:$0xe]
        %v3855 = vrot.slane %v3831, 5
        %v3856 = vrot.slane %v3855, 4
        %v3857 = vrot.slane %v3550, 5
        %v3858 = vsel %vm2529, %v3856, %v3857
        %v3859 = vrot.slane %v3832, 5
        %v3860 = vrot.slane %v3859, 4
        %v3861 = vrot.slane %v3552, 5
        %v3862 = vsel %vm2529, %v3860, %v3861
        %v3863 = vrot.slane %v3833, 5
        %v3864 = vrot.slane %v3863, 4
        %v3865 = vrot.slane %v3554, 5
        %v3866 = vsel %vm2529, %v3864, %v3865
        %v3867 = vrot.slane %v3834, 5
        %v3868 = vrot.slane %v3867, 4
        %v3869 = vrot.slane %v3556, 5
        %v3870 = vsel %vm2529, %v3868, %v3869
        %v3871 = vrot.slane %v3835, 5
        %v3872 = vrot.slane %v3871, 4
        %v3873 = vrot.slane %v3558, 5
        %v3874 = vsel %vm2529, %v3872, %v3873
        %v3875 = vrot.slane %v3836, 5
        %v3876 = vrot.slane %v3875, 4
        %v3877 = vrot.slane %v3560, 5
        %v3878 = vsel %vm2529, %v3876, %v3877
        %v3879 = vrot.slane %v3837, 5
        %v3880 = vrot.slane %v3879, 4
        %v3881 = vrot.slane %v3562, 5
        %v3882 = vsel %vm2529, %v3880, %v3881
        %v3883 = vrot.slane %v3838, 5
        %v3884 = vrot.slane %v3883, 4
        %v3885 = vrot.slane %v3564, 5
        %v3886 = vsel %vm2529, %v3884, %v3885
        %s3887 = scalar_lea.vmem %s4, 512
        %v3888 = vld [vmem:[%s3887] sm:$0xf]
        %v3889 = vld [vmem:[%s3887 + $0x4] sm:$0xf]
        %v3890 = vld [vmem:[%s3887 + $0x8] sm:$0xf]
        %v3891 = vld [vmem:[%s3887 + $0xc] sm:$0xf]
        %v3892 = vld [vmem:[%s3887 + $0x10] sm:$0xf]
        %v3893 = vld [vmem:[%s3887 + $0x14] sm:$0xf]
        %v3894 = vld [vmem:[%s3887 + $0x18] sm:$0xf]
        %v3895 = vld [vmem:[%s3887 + $0x1c] sm:$0xf]
        %v3896 = vld [vmem:[%s3887 + $0x20] sm:$0xf]
        %v3897 = vld [vmem:[%s3887 + $0x24] sm:$0xf]
        %v3898 = vld [vmem:[%s3887 + $0x28] sm:$0xf]
        %v3899 = vld [vmem:[%s3887 + $0x2c] sm:$0xf]
        %v3900 = vld [vmem:[%s3887 + $0x30] sm:$0xf]
        %v3901 = vld [vmem:[%s3887 + $0x34] sm:$0xf]
        %v3902 = vld [vmem:[%s3887 + $0x38] sm:$0xf]
        %v3903 = vld [vmem:[%s3887 + $0x3c] sm:$0xf]
        %v3904 = vunpack.c.l.b16 %v3858
        %v3905 = vunpack.c.l.b16 %v3862
        %v3906 = vunpack.c.l.b16 %v3866
        %v3907 = vunpack.c.l.b16 %v3870
        %v3908 = vunpack.c.l.b16 %v3874
        %v3909 = vunpack.c.l.b16 %v3878
        %v3910 = vunpack.c.l.b16 %v3882
        %v3911 = vunpack.c.l.b16 %v3886
        %v3912 = vpack.c.b16 %v3905, %v3904
        %v3913 = vpack.c.b16 %v3907, %v3906
        %v3914 = vpack.c.b16 %v3909, %v3908
        %v3915 = vpack.c.b16 %v3911, %v3910
        %v3936 = vunpack.c.l.b16 %v3888
        %v3937 = vunpack.c.l.b16 %v3889
        %v3938 = vunpack.c.l.b16 %v3890
        %v3939 = vunpack.c.l.b16 %v3891
        %v3940 = vunpack.c.l.b16 %v3892
        %v3941 = vunpack.c.l.b16 %v3893
        %v3942 = vunpack.c.l.b16 %v3894
        %v3943 = vunpack.c.l.b16 %v3895
        %v3944 = vunpack.c.l.b16 %v3896
        %v3945 = vunpack.c.l.b16 %v3897
        %v3946 = vunpack.c.l.b16 %v3898
        %v3947 = vunpack.c.l.b16 %v3899
        %v3948 = vunpack.c.l.b16 %v3900
        %v3949 = vunpack.c.l.b16 %v3901
        %v3950 = vunpack.c.l.b16 %v3902
        %v3951 = vunpack.c.l.b16 %v3903
        %v3952 = vpack.c.b16 %v3937, %v3936
        %v3953 = vpack.c.b16 %v3939, %v3938
        %v3954 = vpack.c.b16 %v3941, %v3940
        %v3955 = vpack.c.b16 %v3943, %v3942
        %v3956 = vpack.c.b16 %v3945, %v3944
        %v3957 = vpack.c.b16 %v3947, %v3946
        %v3958 = vpack.c.b16 %v3949, %v3948
        %v3959 = vpack.c.b16 %v3951, %v3950
        %3968 = vmatprep.subr.bf16.mxu0 0
        %3969 = vmatpush1.bf16.msra.mxu0 %v3952
        %3970 = vmatprep.subr.bf16.mxu0 0
        %3971 = vmatpush1.bf16.msra.mxu0 %v3953
        %3972 = vmatprep.subr.bf16.mxu0 0
        %3973 = vmatpush1.bf16.msra.mxu0 %v3954
        %3974 = vmatprep.subr.bf16.mxu0 0
        %3975 = vmatpush1.bf16.msra.mxu0 %v3955
        %3976 = vmatprep.subr.bf16.mxu0 0
        %3977 = vmatpush1.bf16.msra.mxu0 %v3956
        %3978 = vmatprep.subr.bf16.mxu0 0
        %3979 = vmatpush1.bf16.msra.mxu0 %v3957
        %3980 = vmatprep.subr.bf16.mxu0 0
        %3981 = vmatpush1.bf16.msra.mxu0 %v3958
        %3982 = vmatprep.subr.bf16.mxu0 0
        %3983 = vmatpush1.bf16.msra.mxu0 %v3959
        %3984 = vmatprep.subr.bf16.mxu0 0
        %3985 = vmatpush1.bf16.msra.mxu0 0
        %3986 = vmatprep.subr.bf16.mxu0 0
        %3987 = vmatpush1.bf16.msra.mxu0 0
        %3988 = vmatprep.subr.bf16.mxu0 0
        %3989 = vmatpush1.bf16.msra.mxu0 0
        %3990 = vmatprep.subr.bf16.mxu0 0
        %3991 = vmatpush1.bf16.msra.mxu0 0
        %3992 = vmatprep.subr.bf16.mxu0 0
        %3993 = vmatpush1.bf16.msra.mxu0 0
        %3994 = vmatprep.subr.bf16.mxu0 0
        %3995 = vmatpush1.bf16.msra.mxu0 0
        %3996 = vmatprep.subr.bf16.mxu0 0
        %3997 = vmatpush1.bf16.msra.mxu0 0
        %3998 = vmatprep.subr.bf16.mxu0 0
        %3999 = vmatpush1.bf16.msra.mxu0 0
        %4000 = vmatprep.mubr.bf16.mxu0 0
        %4001 = vmatmul.mubr.bf16.gmra.mrb[0].mxu0 %v3912
        %v4002 = vpop.f32.mrb[0].mxu0
        %v4003 = vadd.f32 0.0, %v4002
        %v4004 = vpop.f32.mrb[0].mxu0
        %v4005 = vpop.f32.mrb[0].mxu0
        %v4006 = vadd.f32 0.0, %v4005
        %v4007 = vpop.f32.mrb[0].mxu0
        %4008 = vmatprep.mubr.bf16.mxu0 0
        %4009 = vmatmul.mubr.bf16.gmra.mrb[0].mxu0 %v3913
        %v4010 = vpop.f32.mrb[0].mxu0
        %v4011 = vadd.f32 0.0, %v4010
        %v4012 = vpop.f32.mrb[0].mxu0
        %v4013 = vpop.f32.mrb[0].mxu0
        %v4014 = vadd.f32 0.0, %v4013
        %v4015 = vpop.f32.mrb[0].mxu0
        %4016 = vmatprep.mubr.bf16.mxu0 0
        %4017 = vmatmul.mubr.bf16.gmra.mrb[0].mxu0 %v3914
        %v4018 = vpop.f32.mrb[0].mxu0
        %v4019 = vadd.f32 0.0, %v4018
        %v4020 = vpop.f32.mrb[0].mxu0
        %v4021 = vpop.f32.mrb[0].mxu0
        %v4022 = vadd.f32 0.0, %v4021
        %v4023 = vpop.f32.mrb[0].mxu0
        %4024 = vmatprep.mubr.bf16.mxu0 0
        %4025 = vmatmul.mubr.bf16.gmra.mrb[0].mxu0 %v3915
        %v4026 = vpop.f32.mrb[0].mxu0
        %v4027 = vadd.f32 0.0, %v4026
        %v4028 = vpop.f32.mrb[0].mxu0
        %v4029 = vpop.f32.mrb[0].mxu0
        %v4030 = vadd.f32 0.0, %v4029
        %v4031 = vpop.f32.mrb[0].mxu0
        %4032 = vdwg.mxu0
        %v4033 = vadd.f32 %v3823, %v4003
        %v4034 = vadd.f32 %v3824, %v4006
        %v4035 = vadd.f32 %v3825, %v4011
        %v4036 = vadd.f32 %v3826, %v4014
        %v4037 = vadd.f32 %v3827, %v4019
        %v4038 = vadd.f32 %v3828, %v4022
        %v4039 = vadd.f32 %v3829, %v4027
        %v4040 = vadd.f32 %v3830, %v4030
        %v4041 = vld [vmem:[%s5] sm:$0x1]
        %v4043 = vlaneseq
        %v4044 = vshrl.u32 %v4043, 7
        %v4045 = vsub.s32 0, %v4044
        %v4046 = vrot.slane %v4041, %v4045
        %v4048 = vmul.f32 %v4033, %v4046
        %v4049 = vmul.f32 %v4034, %v4046
        %v4050 = vmul.f32 %v4035, %v4046
        %v4051 = vmul.f32 %v4036, %v4046
        %v4052 = vmul.f32 %v4037, %v4046
        %v4053 = vmul.f32 %v4038, %v4046
        %v4054 = vmul.f32 %v4039, %v4046
        %v4055 = vmul.f32 %v4040, %v4046
        %v4056 = vld [vmem:[%s6] sm:$0x1]
        %v4058 = vlaneseq
        %v4059 = vshrl.u32 %v4058, 7
        %v4060 = vsub.s32 0, %v4059
        %v4061 = vrot.slane %v4056, %v4060
        %v4063 = vadd.f32 %v4048, %v4061
        %v4064 = vadd.f32 %v4049, %v4061
        %v4065 = vadd.f32 %v4050, %v4061
        %v4066 = vadd.f32 %v4051, %v4061
        %v4067 = vadd.f32 %v4052, %v4061
        %v4068 = vadd.f32 %v4053, %v4061
        %v4069 = vadd.f32 %v4054, %v4061
        %v4070 = vadd.f32 %v4055, %v4061
        %v4071 = vld [vmem:[%s978] sm:$0xf]
        %v4072 = vld [vmem:[%s978 + $0x8] sm:$0xf]
        %v4073 = vld [vmem:[%s978 + $0x10] sm:$0xf]
        %v4074 = vld [vmem:[%s978 + $0x18] sm:$0xf]
        %v4075 = vld [vmem:[%s978 + $0x20] sm:$0xf]
        %v4076 = vld [vmem:[%s978 + $0x28] sm:$0xf]
        %v4077 = vld [vmem:[%s978 + $0x30] sm:$0xf]
        %v4078 = vld [vmem:[%s978 + $0x38] sm:$0xf]
        %v4079 = vmax.bf16 %v4071, 0
        %v4080 = vmax.bf16 %v4072, 0
        %v4081 = vmax.bf16 %v4073, 0
        %v4082 = vmax.bf16 %v4074, 0
        %v4083 = vmax.bf16 %v4075, 0
        %v4084 = vmax.bf16 %v4076, 0
        %v4085 = vmax.bf16 %v4077, 0
        %v4086 = vmax.bf16 %v4078, 0
        %v4087 = vld [vmem:[%s7] sm:$0x3]
        %v4096 = vunpack.c.l.b16 %v4079
        %v4097 = vunpack.c.l.b16 %v4080
        %v4098 = vunpack.c.l.b16 %v4081
        %v4099 = vunpack.c.l.b16 %v4082
        %v4100 = vunpack.c.l.b16 %v4083
        %v4101 = vunpack.c.l.b16 %v4084
        %v4102 = vunpack.c.l.b16 %v4085
        %v4103 = vunpack.c.l.b16 %v4086
        %v4104 = vpack.c.b16 %v4097, %v4096
        %v4105 = vpack.c.b16 %v4099, %v4098
        %v4106 = vpack.c.b16 %v4101, %v4100
        %v4107 = vpack.c.b16 %v4103, %v4102
        %v4109 = vsel %vm420, %v4104, 0
        %v4112 = vsel %vm420, %v4105, 0
        %v4115 = vsel %vm420, %v4106, 0
        %v4118 = vsel %vm420, %v4107, 0
        %v4121 = vsel %vm433, %v4087, 0
        %4123 = vmatprep.subr.bf16.mxu0 0
        %4124 = vmatpush1.bf16.msra.mxu0 %v4121
        %4125 = vmatprep.subr.bf16.mxu0 0
        %4126 = vmatpush1.bf16.msra.mxu0 0
        %4127 = vmatprep.subr.bf16.mxu0 0
        %4128 = vmatpush1.bf16.msra.mxu0 0
        %4129 = vmatprep.subr.bf16.mxu0 0
        %4130 = vmatpush1.bf16.msra.mxu0 0
        %4131 = vmatprep.subr.bf16.mxu0 0
        %4132 = vmatpush1.bf16.msra.mxu0 0
        %4133 = vmatprep.subr.bf16.mxu0 0
        %4134 = vmatpush1.bf16.msra.mxu0 0
        %4135 = vmatprep.subr.bf16.mxu0 0
        %4136 = vmatpush1.bf16.msra.mxu0 0
        %4137 = vmatprep.subr.bf16.mxu0 0
        %4138 = vmatpush1.bf16.msra.mxu0 0
        %4139 = vmatprep.subr.bf16.mxu0 0
        %4140 = vmatpush1.bf16.msra.mxu0 0
        %4141 = vmatprep.subr.bf16.mxu0 0
        %4142 = vmatpush1.bf16.msra.mxu0 0
        %4143 = vmatprep.subr.bf16.mxu0 0
        %4144 = vmatpush1.bf16.msra.mxu0 0
        %4145 = vmatprep.subr.bf16.mxu0 0
        %4146 = vmatpush1.bf16.msra.mxu0 0
        %4147 = vmatprep.subr.bf16.mxu0 0
        %4148 = vmatpush1.bf16.msra.mxu0 0
        %4149 = vmatprep.subr.bf16.mxu0 0
        %4150 = vmatpush1.bf16.msra.mxu0 0
        %4151 = vmatprep.subr.bf16.mxu0 0
        %4152 = vmatpush1.bf16.msra.mxu0 0
        %4153 = vmatprep.subr.bf16.mxu0 0
        %4154 = vmatpush1.bf16.msra.mxu0 0
        %4155 = vmatprep.mubr.bf16.mxu0 0
        %4156 = vmatmul.mubr.bf16.gmra.mrb[0].mxu0 %v4109
        %v4157 = vpop.f32.mrb[0].mxu0
        %v4158 = vadd.f32 0.0, %v4157
        %v4159 = vpop.f32.mrb[0].mxu0
        %v4160 = vpop.f32.mrb[0].mxu0
        %v4161 = vadd.f32 0.0, %v4160
        %v4162 = vpop.f32.mrb[0].mxu0
        %4163 = vmatprep.mubr.bf16.mxu0 0
        %4164 = vmatmul.mubr.bf16.gmra.mrb[0].mxu0 %v4112
        %v4165 = vpop.f32.mrb[0].mxu0
        %v4166 = vadd.f32 0.0, %v4165
        %v4167 = vpop.f32.mrb[0].mxu0
        %v4168 = vpop.f32.mrb[0].mxu0
        %v4169 = vadd.f32 0.0, %v4168
        %v4170 = vpop.f32.mrb[0].mxu0
        %4171 = vmatprep.mubr.bf16.mxu0 0
        %4172 = vmatmul.mubr.bf16.gmra.mrb[0].mxu0 %v4115
        %v4173 = vpop.f32.mrb[0].mxu0
        %v4174 = vadd.f32 0.0, %v4173
        %v4175 = vpop.f32.mrb[0].mxu0
        %v4176 = vpop.f32.mrb[0].mxu0
        %v4177 = vadd.f32 0.0, %v4176
        %v4178 = vpop.f32.mrb[0].mxu0
        %4179 = vmatprep.mubr.bf16.mxu0 0
        %4180 = vmatmul.mubr.bf16.gmra.mrb[0].mxu0 %v4118
        %v4181 = vpop.f32.mrb[0].mxu0
        %v4182 = vadd.f32 0.0, %v4181
        %v4183 = vpop.f32.mrb[0].mxu0
        %v4184 = vpop.f32.mrb[0].mxu0
        %v4185 = vadd.f32 0.0, %v4184
        %v4186 = vpop.f32.mrb[0].mxu0
        %4187 = vdwg.mxu0
        %v4188 = vld [vmem:[%s8] sm:$0x1]
        %v4190 = vlaneseq
        %v4191 = vshrl.u32 %v4190, 7
        %v4192 = vsub.s32 0, %v4191
        %v4193 = vrot.slane %v4188, %v4192
        %v4195 = vmul.f32 %v4158, %v4193
        %v4196 = vmul.f32 %v4161, %v4193
        %v4197 = vmul.f32 %v4166, %v4193
        %v4198 = vmul.f32 %v4169, %v4193
        %v4199 = vmul.f32 %v4174, %v4193
        %v4200 = vmul.f32 %v4177, %v4193
        %v4201 = vmul.f32 %v4182, %v4193
        %v4202 = vmul.f32 %v4185, %v4193
        %v4203 = vld [vmem:[%s9] sm:$0x1]
        %v4205 = vlaneseq
        %v4206 = vshrl.u32 %v4205, 7
        %v4207 = vsub.s32 0, %v4206
        %v4208 = vrot.slane %v4203, %v4207
        %v4210 = vadd.f32 %v4195, %v4208
        %v4211 = vadd.f32 %v4196, %v4208
        %v4212 = vadd.f32 %v4197, %v4208
        %v4213 = vadd.f32 %v4198, %v4208
        %v4214 = vadd.f32 %v4199, %v4208
        %v4215 = vadd.f32 %v4200, %v4208
        %v4216 = vadd.f32 %v4201, %v4208
        %v4217 = vadd.f32 %v4202, %v4208
        %v4218 = vadd.f32 %v4063, %v4210
        %v4219 = vadd.f32 %v4064, %v4211
        %v4220 = vadd.f32 %v4065, %v4212
        %v4221 = vadd.f32 %v4066, %v4213
        %v4222 = vadd.f32 %v4067, %v4214
        %v4223 = vadd.f32 %v4068, %v4215
        %v4224 = vadd.f32 %v4069, %v4216
        %v4225 = vadd.f32 %v4070, %v4217
        %4226 = vst [vmem:[%s355] sm:$0xff] %v4218
        %4227 = vst [vmem:[%s355 + $0x8] sm:$0xff] %v4219
        %4228 = vst [vmem:[%s355 + $0x10] sm:$0xff] %v4220
        %4229 = vst [vmem:[%s355 + $0x18] sm:$0xff] %v4221
        %4230 = vst [vmem:[%s355 + $0x20] sm:$0xff] %v4222
        %4231 = vst [vmem:[%s355 + $0x28] sm:$0xff] %v4223
        %4232 = vst [vmem:[%s355 + $0x30] sm:$0xff] %v4224
        %4233 = vst [vmem:[%s355 + $0x38] sm:$0xff] %v4225
        %s4234 = sand.u32 %s247, 1
        %s4235 = scalar_lea.sflag [#allocation4], %s4234
        %s4236 = sand.u32 %s247, 1
        %s4237 = smul.addr %s4236, 64
        %s4238 = scalar_lea.vmem [#allocation3], %s4237
        // Predicated region
        $region61: #{tpu_custom_call.1} parent=59 // pred_check
          %p4239 = pneg %p257
        $region62: #{tpu_custom_call.1} parent=59 // pred_check_branch
          %4241 = sbr.rel (%p4239) target = $region64
        $region63: #{tpu_custom_call.1} parent=59 // pred_region
          %s4243 = ssub.s32 1024, 1024
          %4244 = vsyncadd %s4235, %s4243
          %s4245 = smul.addr %s24, 8
          %s4246 = smul.addr %s4245, 128
          %s4247 = scalar_lea.hbm %s10, %s4246
          %s4248 = sshll.u32 %s4238, 4
          %s4249 = int_to_ptr.vmem [resolvable:$true] %s4248
          %4254 = dma.vmem_to_hbm [thread:$0]  %s4249, 1024, %s4247, %s4235, 128, 128, 8
        $region64: #{tpu_custom_call.1} parent=59 // pred_fallthru
          _
      $region60: #{tpu_custom_call.1} parent=5 // pred_fallthru
        _
      %p4255 = scmp.le.s32.totalorder 2, %s19
      // Predicated region
      $region65: #{tpu_custom_call.1} parent=5 // pred_check
        %p4256 = pneg %p4255
      $region66: #{tpu_custom_call.1} parent=5 // pred_check_branch
        %4258 = sbr.rel (%p4256) target = $region68
      $region67: #{tpu_custom_call.1} parent=5 // pred_region
        %s4259 = ssub.s32 %s19, 2
        // Predicated region
        $region69: #{tpu_custom_call.1} parent=67 // pred_check
          %p4260 = pneg %p263
        $region70: #{tpu_custom_call.1} parent=67 // pred_check_branch
          %4262 = sbr.rel (%p4260) target = $region72
        $region71: #{tpu_custom_call.1} parent=67 // pred_region
          %s4263 = sand.u32 %s248, 1
          %s4264 = scalar_lea.sflag [#allocation4], %s4263
          %s4265 = sand.u32 %s248, 1
          %s4266 = smul.addr %s4265, 64
          %s4267 = scalar_lea.vmem [#allocation3], %s4266
          %4268 = dma.done %s4264, 1024
        $region72: #{tpu_custom_call.1} parent=67 // pred_fallthru
          _
      $region68: #{tpu_custom_call.1} parent=5 // pred_fallthru
        _
    $region6: #{tpu_custom_call.1} parent=1 // loop_footer
      %s23 = sadd.s32 1, %s19
    $region7: #{tpu_custom_call.1} parent=1 // loop_footer_branch
      %18 = sbr.rel target = $region3
    $region8: #{tpu_custom_call.1} parent=1 // loop_exit
      _
    %4269 = vsyncpa [#allocation4], 1
    %s4270 = scalar_lea.sflag [#allocation4], 1
    %4271 = vsyncpa %s4270, 1

</llo_original>
